<compile_context>
chip_gen: v5e
topology: v5e:2x2
jax: 0.10.0
libtpu: 0.0.40
codegen_flags: <defaults>
</compile_context>

<pallas_src>
import math
import functools

import jax
import jax.numpy as jnp
from jax import lax
from jax.experimental import pallas as pl
from jax.experimental.pallas import tpu as pltpu

NEG_INF = -1e30            # additive mask value (finite: avoids inf-inf NaNs)
LN_EPS = 1e-5              # torch.nn.LayerNorm default eps
MXU_DTYPE = jnp.bfloat16   # matmul operand dtype (accumulation stays f32)
W_DTYPE = jnp.bfloat16     # storage dtype for weight matrices
VMEM_LIMIT = 64 * 1024 * 1024


# ----------------------------------------------------------------------------
# In-kernel math helpers (operate on loaded jnp values; scratch via refs)
# ----------------------------------------------------------------------------

def _mm(a, b):
    """(M, K) @ (K, N) on the MXU, bf16 operands, f32 accumulation."""
    return jnp.dot(a.astype(MXU_DTYPE), b.astype(MXU_DTYPE),
                   preferred_element_type=jnp.float32)


def _add_ln(x, y, g, b):
    """LayerNorm(x + y) over the feature (last) axis. g/b are (1, D) f32."""
    z = x + y
    mean = jnp.mean(z, axis=-1, keepdims=True)
    zc = z - mean
    var = jnp.mean(zc * zc, axis=-1, keepdims=True)
    return zc * lax.rsqrt(var + LN_EPS) * g + b


def _mha(attn_ref, x_q, x_kv, wqkv, bqkv, wo, bo, bias, num_heads, fused_qkv):
    """torch.nn.MultiheadAttention forward (batch_first, eval => no dropout).

    x_q: (Lq, D), x_kv: (Lk, D).
    wqkv: (D, 3D) bf16 pre-transposed [Wq^T*scale | Wk^T | Wv^T] (scale folded).
    bqkv: (1, 3D) f32 (q-part pre-scaled).  wo: (D, D) bf16, bo: (1, D) f32.
    bias: additive f32 mask broadcastable to (Lq, Lk), or None.
    attn_ref: (Lq, D) f32 VMEM scratch for the concatenated head outputs.
    """
    D = wo.shape[0]
    H = num_heads
    Dh = D // H

    if fused_qkv:                       # q and k/v from the same input: one matmul
        qkv = _mm(x_q, wqkv) + bqkv                     # (Lq, 3D) f32
        q = qkv[:, :D]
        k = qkv[:, D:2 * D]
        v = qkv[:, 2 * D:]
    else:                               # cross-attention: split the fused weight
        q = _mm(x_q, wqkv[:, :D]) + bqkv[:, :D]         # (Lq, D)
        kv = _mm(x_kv, wqkv[:, D:]) + bqkv[:, D:]       # (Lk, 2D)
        k = kv[:, :D]
        v = kv[:, D:]

    q_b = q.astype(MXU_DTYPE)
    kt_b = k.T.astype(MXU_DTYPE)        # ONE transpose per attention: (D, Lk)
    v_b = v.astype(MXU_DTYPE)

    for h in range(H):                  # static unrolled loop over heads
        sl = slice(h * Dh, (h + 1) * Dh)
        s = jnp.dot(q_b[:, sl], kt_b[sl, :],
                    preferred_element_type=jnp.float32)  # (Lq, Lk) f32
        if bias is not None:
            s = s + bias
        s = s - jnp.max(s, axis=-1, keepdims=True)
        p = jnp.exp(s)
        p = p * pl.reciprocal(jnp.sum(p, axis=-1, keepdims=True), approx=True)
        attn_ref[:, sl] = jnp.dot(p.astype(MXU_DTYPE), v_b[:, sl],
                                  preferred_element_type=jnp.float32)
    return _mm(attn_ref[...], wo) + bo


# ----------------------------------------------------------------------------
# Fused stack kernels: one pallas_call per encoder stack / decoder stack,
# grid = (batch, layer); activation carried in VMEM scratch across layers.
# ----------------------------------------------------------------------------

def _encoder_stack_kernel(x_ref, kp_ref,
                          wqkv_ref, bqkv_ref, wo_ref, bo_ref,
                          g1_ref, b1_ref, fc2w_ref, fc2b_ref, g2_ref, b2_ref,
                          o_ref, act_ref, attn_ref, *, num_heads):
    l = pl.program_id(1)

    @pl.when(l == 0)
    def _():                                           # new batch element
        act_ref[...] = x_ref[0].astype(jnp.float32)    # (S, D)

    x = act_ref[...]                                   # (S, D) f32
    bias = kp_ref[0]                                   # (1, S) -> bcast (S, S)
    y1 = _mha(attn_ref, x, x, wqkv_ref[0], bqkv_ref[0], wo_ref[0], bo_ref[0],
              bias, num_heads, fused_qkv=True)
    y = _add_ln(x, y1, g1_ref[0], b1_ref[0])
    # PositionWiseFFN per the reference forward == fc2(x) only (fc1/relu dead).
    y1 = _mm(y, fc2w_ref[0]) + fc2b_ref[0]
    y = _add_ln(y, y1, g2_ref[0], b2_ref[0])
    act_ref[...] = y                                   # carry to next layer

    @pl.when(l == pl.num_programs(1) - 1)
    def _():
        o_ref[0] = y.astype(o_ref.dtype)


def _decoder_stack_kernel(x_ref, enc_ref, am_ref, kp_ref,
                          wqkv1_ref, bqkv1_ref, wo1_ref, bo1_ref, g1_ref, b1_ref,
                          wqkv2_ref, bqkv2_ref, wo2_ref, bo2_ref, g2_ref, b2_ref,
                          fc2w_ref, fc2b_ref, g3_ref, b3_ref,
                          o_ref, act_ref, attn_ref, *, num_heads):
    l = pl.program_id(1)

    @pl.when(l == 0)
    def _():
        act_ref[...] = x_ref[0].astype(jnp.float32)    # (L, D)

    x = act_ref[...]                                   # (L, D) f32
    enc = enc_ref[0]                                   # (S, D); cast inside _mm
    # masked self-attention: causal/attn mask (L, L) + key padding (1, L)
    bias1 = am_ref[...] + kp_ref[0]
    y1 = _mha(attn_ref, x, x, wqkv1_ref[0], bqkv1_ref[0], wo1_ref[0], bo1_ref[0],
              bias1, num_heads, fused_qkv=True)
    y = _add_ln(x, y1, g1_ref[0], b1_ref[0])
    # cross-attention (no masks in the reference forward)
    y1 = _mha(attn_ref, y, enc, wqkv2_ref[0], bqkv2_ref[0], wo2_ref[0], bo2_ref[0],
              None, num_heads, fused_qkv=False)
    y = _add_ln(y, y1, g2_ref[0], b2_ref[0])
    y1 = _mm(y, fc2w_ref[0]) + fc2b_ref[0]
    y = _add_ln(y, y1, g3_ref[0], b3_ref[0])
    act_ref[...] = y

    @pl.when(l == pl.num_programs(1) - 1)
    def _():
        o_ref[0] = y.astype(o_ref.dtype)


def _linear_kernel(x_ref, w_ref, b_ref, o_ref):
    o_ref[...] = (_mm(x_ref[...], w_ref[...]) + b_ref[...]).astype(o_ref.dtype)


# ----------------------------------------------------------------------------
# pallas_call wrappers
# ----------------------------------------------------------------------------

def _stacked_spec(arr):
    """(n_layers, a, b) weight stack: one (a, b) slab per layer grid step."""
    _, a, b = arr.shape
    return pl.BlockSpec((1, a, b), lambda bi, li: (li, 0, 0))


_ENC_KEYS = ("wqkv", "bqkv", "wo", "bo", "ln1_g", "ln1_b",
             "fc2_w", "fc2_b", "ln2_g", "ln2_b")
_DEC_KEYS = ("wqkv1", "bqkv1", "wo1", "bo1", "ln1_g", "ln1_b",
             "wqkv2", "bqkv2", "wo2", "bo2", "ln2_g", "ln2_b",
             "fc2_w", "fc2_b", "ln3_g", "ln3_b")


def encoder_stack(x, kp_bias, p, num_heads):
    """x: (B, S, D) f32, kp_bias: (B, 1, S) additive f32 key-padding bias."""
    B, S, D = x.shape
    weights = [p[k] for k in _ENC_KEYS]
    n_layers = weights[0].shape[0]
    kern = functools.partial(_encoder_stack_kernel, num_heads=num_heads)
    return pl.pallas_call(
        kern,
        out_shape=jax.ShapeDtypeStruct((B, S, D), x.dtype),
        grid=(B, n_layers),
        in_specs=[pl.BlockSpec((1, S, D), lambda b, l: (b, 0, 0)),
                  pl.BlockSpec((1, 1, S), lambda b, l: (b, 0, 0))]
                 + [_stacked_spec(w) for w in weights],
        out_specs=pl.BlockSpec((1, S, D), lambda b, l: (b, 0, 0)),
        scratch_shapes=[pltpu.VMEM((S, D), jnp.float32),   # running activation
                        pltpu.VMEM((S, D), jnp.float32)],  # per-head attn out
        compiler_params=pltpu.CompilerParams(
            dimension_semantics=("parallel", "arbitrary"),
            vmem_limit_bytes=VMEM_LIMIT),
    )(x, kp_bias, *weights)


def decoder_stack(x, enc, am_bias, kp_bias, p, num_heads):
    """x: (B, L, D), enc: (B, S, D), am_bias: (L, L), kp_bias: (B, 1, L)."""
    B, L, D = x.shape
    S = enc.shape[1]
    weights = [p[k] for k in _DEC_KEYS]
    n_layers = weights[0].shape[0]
    kern = functools.partial(_decoder_stack_kernel, num_heads=num_heads)
    return pl.pallas_call(
        kern,
        out_shape=jax.ShapeDtypeStruct((B, L, D), x.dtype),
        grid=(B, n_layers),
        in_specs=[pl.BlockSpec((1, L, D), lambda b, l: (b, 0, 0)),
                  pl.BlockSpec((1, S, D), lambda b, l: (b, 0, 0)),
                  pl.BlockSpec((L, L), lambda b, l: (0, 0)),
                  pl.BlockSpec((1, 1, L), lambda b, l: (b, 0, 0))]
                 + [_stacked_spec(w) for w in weights],
        out_specs=pl.BlockSpec((1, L, D), lambda b, l: (b, 0, 0)),
        scratch_shapes=[pltpu.VMEM((L, D), jnp.float32),
                        pltpu.VMEM((L, D), jnp.float32)],
        compiler_params=pltpu.CompilerParams(
            dimension_semantics=("parallel", "arbitrary"),
            vmem_limit_bytes=VMEM_LIMIT),
    )(x, enc, am_bias, kp_bias, *weights)


def linear(x2d, w, b):
    """x2d: (M, K) @ w: (K, N_pad) + b: (1, N_pad); N_pad is 128-lane dense."""
    M, K = x2d.shape
    N = w.shape[1]
    TM = M
    for t in (512, 256, 128):
        if M % t == 0:
            TM = t
            break
    return pl.pallas_call(
        _linear_kernel,
        out_shape=jax.ShapeDtypeStruct((M, N), jnp.float32),
        grid=(M // TM,),
        in_specs=[pl.BlockSpec((TM, K), lambda i: (i, 0)),
                  pl.BlockSpec((K, N), lambda i: (0, 0)),
                  pl.BlockSpec((1, N), lambda i: (0, 0))],
        out_specs=pl.BlockSpec((TM, N), lambda i: (i, 0)),
        compiler_params=pltpu.CompilerParams(
            dimension_semantics=("parallel",),
            vmem_limit_bytes=VMEM_LIMIT),
    )(x2d, w, b)


# ----------------------------------------------------------------------------
# Full forward pass (plain-JAX glue: embedding gather, PE add, mask -> bias)
# ----------------------------------------------------------------------------

def transformer_forward(params, x_tokens, input_masks, out_tokens,
                        attention_masks, key_padding_masks, *, num_heads):
    pe = params["pe"]
    d_output = params["out_emb"].shape[0]

    # TODO(synk): embedding lookup is a data-dependent gather; kept in plain JAX.
    y = jnp.take(params["in_emb"], x_tokens, axis=0)                  # (B, S, D)
    y = y + pe[: y.shape[1]][None, :, :]

    # boolean masks -> tiny additive f32 biases (no (B*H, Lq, Lk) broadcast)
    enc_kp = jnp.where(input_masks, NEG_INF, 0.0).astype(jnp.float32)[:, None, :]
    dec_kp = jnp.where(key_padding_masks, NEG_INF, 0.0).astype(jnp.float32)[:, None, :]
    am_bias = jnp.where(attention_masks, NEG_INF, 0.0).astype(jnp.float32)

    enc = encoder_stack(y, enc_kp, params["encoder"], num_heads)

    o = jnp.take(params["out_emb"], out_tokens, axis=0)               # (B, L, D)
    o = o + pe[: o.shape[1]][None, :, :]
    dec = decoder_stack(o, enc, am_bias, dec_kp, params["decoder"], num_heads)

    B, L, D = dec.shape
    logits = linear(dec.reshape(B * L, D), params["out_lin_w"], params["out_lin_b"])
    return logits[:, :d_output].reshape(B, L, d_output)


# ----------------------------------------------------------------------------
# Deterministic parameter init (shapes per the PyTorch __init__); all weight
# matrices pre-transposed to (K, N), stacked over layers, stored in bf16,
# attention scale folded into the Q projection, output projection lane-padded.
# ----------------------------------------------------------------------------

def init_params(key, d_model, d_input, d_output, n_enc, n_dec, num_heads,
                max_len=100):
    keys = iter(jax.random.split(key, 64))
    q_scale = 1.0 / math.sqrt(d_model // num_heads)

    def nrm(shape, scale=0.02):
        return (scale * jax.random.normal(next(keys), shape)).astype(jnp.float32)

    def mha_stack(n, suffix=""):
        wqkv = nrm((n, d_model, 3 * d_model))
        bqkv = nrm((n, 1, 3 * d_model))
        # fold the 1/sqrt(Dh) attention scale into the Q projection (free)
        wqkv = wqkv.at[:, :, :d_model].multiply(q_scale)
        bqkv = bqkv.at[:, :, :d_model].multiply(q_scale)
        return {f"wqkv{suffix}": wqkv.astype(W_DTYPE),
                f"bqkv{suffix}": bqkv,
                f"wo{suffix}": nrm((n, d_model, d_model)).astype(W_DTYPE),
                f"bo{suffix}": nrm((n, 1, d_model))}

    def ln_stack(n, name):
        return {f"{name}_g": jnp.ones((n, 1, d_model), jnp.float32),
                f"{name}_b": jnp.zeros((n, 1, d_model), jnp.float32)}

    enc = {}
    enc.update(mha_stack(n_enc))
    enc.update(ln_stack(n_enc, "ln1"))
    enc["fc2_w"] = nrm((n_enc, d_model, d_model)).astype(W_DTYPE)
    enc["fc2_b"] = nrm((n_enc, 1, d_model))
    enc.update(ln_stack(n_enc, "ln2"))

    dec = {}
    dec.update(mha_stack(n_dec, "1"))
    dec.update(ln_stack(n_dec, "ln1"))
    dec.update(mha_stack(n_dec, "2"))
    dec.update(ln_stack(n_dec, "ln2"))
    dec["fc2_w"] = nrm((n_dec, d_model, d_model)).astype(W_DTYPE)
    dec["fc2_b"] = nrm((n_dec, 1, d_model))
    dec.update(ln_stack(n_dec, "ln3"))

    in_emb = nrm((d_input, d_model), scale=1.0).at[0].set(0.0)    # padding_idx=0
    out_emb = nrm((d_output, d_model), scale=1.0).at[0].set(0.0)  # padding_idx=0

    position = jnp.arange(max_len, dtype=jnp.float32)[:, None]
    div_term = jnp.exp(jnp.arange(0, d_model, 2, dtype=jnp.float32)
                       * (-math.log(10000.0) / d_model))
    pe = jnp.zeros((max_len, d_model), jnp.float32)
    pe = pe.at[:, 0::2].set(jnp.sin(position * div_term))
    pe = pe.at[:, 1::2].set(jnp.cos(position * div_term))

    # final projection: pad N up to a multiple of 128 lanes (full vst stores)
    n_pad = ((d_output + 127) // 128) * 128
    w_out = nrm((d_model, d_output))
    b_out = nrm((1, d_output))
    w_out_pad = jnp.zeros((d_model, n_pad), jnp.float32).at[:, :d_output].set(w_out)
    b_out_pad = jnp.zeros((1, n_pad), jnp.float32).at[:, :d_output].set(b_out)

    return dict(in_emb=in_emb, out_emb=out_emb, pe=pe,
                encoder=enc, decoder=dec,
                out_lin_w=w_out_pad.astype(W_DTYPE),
                out_lin_b=b_out_pad)


# ----------------------------------------------------------------------------
# Pure-JAX reference (same params / same semantics) used as a self-check
# ----------------------------------------------------------------------------

def reference_forward(params, x_tokens, input_masks, out_tokens,
                      attention_masks, key_padding_masks, num_heads):
    f32 = jnp.float32
    pe = params["pe"]

    def mha(xq, xkv, wqkv, bqkv, wo, bo, bias):
        D = wo.shape[0]
        H = num_heads
        Dh = D // H
        B, Lq = xq.shape[0], xq.shape[1]
        Lk = xkv.shape[1]
        wqkv = wqkv.astype(f32)
        q = xq @ wqkv[:, :D] + bqkv[0, :D]
        k = xkv @ wqkv[:, D:2 * D] + bqkv[0, D:2 * D]
        v = xkv @ wqkv[:, 2 * D:] + bqkv[0, 2 * D:]
        q = q.reshape(B, Lq, H, Dh).transpose(0, 2, 1, 3)
        k = k.reshape(B, Lk, H, Dh).transpose(0, 2, 1, 3)
        v = v.reshape(B, Lk, H, Dh).transpose(0, 2, 1, 3)
        s = jnp.einsum("bhqd,bhkd->bhqk", q, k)          # scale folded at init
        if bias is not None:
            s = s + bias
        p = jax.nn.softmax(s, axis=-1)
        o = jnp.einsum("bhqk,bhkd->bhqd", p, v)
        o = o.transpose(0, 2, 1, 3).reshape(B, Lq, D)
        return o @ wo.astype(f32) + bo[0]

    def add_ln(x, y, g, b):
        z = x + y
        m = z.mean(-1, keepdims=True)
        v = ((z - m) ** 2).mean(-1, keepdims=True)
        return (z - m) / jnp.sqrt(v + LN_EPS) * g[0] + b[0]

    y = jnp.take(params["in_emb"], x_tokens, axis=0) + pe[: x_tokens.shape[1]][None]
    enc_bias = jnp.where(input_masks, NEG_INF, 0.0)[:, None, None, :]
    pe_ = params["encoder"]
    for i in range(pe_["wqkv"].shape[0]):
        a = mha(y, y, pe_["wqkv"][i], pe_["bqkv"][i], pe_["wo"][i], pe_["bo"][i],
                enc_bias)
        y = add_ln(y, a, pe_["ln1_g"][i], pe_["ln1_b"][i])
        ff = y @ pe_["fc2_w"][i].astype(f32) + pe_["fc2_b"][i][0]
        y = add_ln(y, ff, pe_["ln2_g"][i], pe_["ln2_b"][i])
    enc_out = y

    y = jnp.take(params["out_emb"], out_tokens, axis=0) + pe[: out_tokens.shape[1]][None]
    dec_bias = (jnp.where(attention_masks, NEG_INF, 0.0)[None, None, :, :]
                + jnp.where(key_padding_masks, NEG_INF, 0.0)[:, None, None, :])
    pd = params["decoder"]
    for i in range(pd["wqkv1"].shape[0]):
        a = mha(y, y, pd["wqkv1"][i], pd["bqkv1"][i], pd["wo1"][i], pd["bo1"][i],
                dec_bias)
        y = add_ln(y, a, pd["ln1_g"][i], pd["ln1_b"][i])
        a = mha(y, enc_out, pd["wqkv2"][i], pd["bqkv2"][i], pd["wo2"][i],
                pd["bo2"][i], None)
        y = add_ln(y, a, pd["ln2_g"][i], pd["ln2_b"][i])
        ff = y @ pd["fc2_w"][i].astype(f32) + pd["fc2_b"][i][0]
        y = add_ln(y, ff, pd["ln3_g"][i], pd["ln3_b"][i])

    d_output = params["out_emb"].shape[0]
    logits = y @ params["out_lin_w"].astype(f32) + params["out_lin_b"][0]
    return logits[:, :, :d_output]


# ----------------------------------------------------------------------------

if __name__ == "__main__":
    d_model, d_input, d_output = 32, 16, 16
    n_enc, n_dec, num_heads = 2, 2, 4
    B, S_src, S_tgt = 2, 8, 8

    root = jax.random.PRNGKey(0)
    k_params, k_x, k_o = jax.random.split(root, 3)
    params = init_params(k_params, d_model, d_input, d_output,
                         n_enc, n_dec, num_heads)

    x_tokens = jax.random.randint(k_x, (B, S_src), 1, d_input, dtype=jnp.int32)
    out_tokens = jax.random.randint(k_o, (B, S_tgt), 1, d_output, dtype=jnp.int32)

    # key padding masks: True = padded/ignored key position
    input_masks = jnp.zeros((B, S_src), dtype=bool).at[:, 6:].set(True)
    key_padding_masks = jnp.zeros((B, S_tgt), dtype=bool).at[:, 7:].set(True)
    # causal attention mask for decoder self-attention: True = disallowed
    attention_masks = jnp.triu(jnp.ones((S_tgt, S_tgt), dtype=bool), k=1)

    fwd = jax.jit(functools.partial(transformer_forward, num_heads=num_heads))
    y = fwd(params, x_tokens, input_masks, out_tokens,
            attention_masks, key_padding_masks)
    y = jax.block_until_ready(y)
    assert y.shape == (B, S_tgt, d_output), y.shape
    assert bool(jnp.all(jnp.isfinite(y)))

    y_ref = reference_forward(params, x_tokens, input_masks, out_tokens,
                              attention_masks, key_padding_masks, num_heads)
    max_diff = float(jnp.max(jnp.abs(y - y_ref)))
    assert bool(jnp.allclose(y, y_ref, atol=5e-2, rtol=5e-2)), max_diff

    print("KERNEL_OK")
</pallas_src>

<mosaic_0001>
module attributes {stable_mosaic.version = 11 : i64} {
  func.func @_decoder_stack_kernel(%arg0: i32, %arg1: i32, %arg2: memref<1x8x32xf32, #tpu.memory_space<vmem>>, %arg3: memref<1x8x32xf32, #tpu.memory_space<vmem>>, %arg4: memref<8x8xf32, #tpu.memory_space<vmem>>, %arg5: memref<1x1x8xf32, #tpu.memory_space<vmem>>, %arg6: memref<1x32x96xbf16, #tpu.memory_space<vmem>>, %arg7: memref<1x1x96xf32, #tpu.memory_space<vmem>>, %arg8: memref<1x32x32xbf16, #tpu.memory_space<vmem>>, %arg9: memref<1x1x32xf32, #tpu.memory_space<vmem>>, %arg10: memref<1x1x32xf32, #tpu.memory_space<vmem>>, %arg11: memref<1x1x32xf32, #tpu.memory_space<vmem>>, %arg12: memref<1x32x96xbf16, #tpu.memory_space<vmem>>, %arg13: memref<1x1x96xf32, #tpu.memory_space<vmem>>, %arg14: memref<1x32x32xbf16, #tpu.memory_space<vmem>>, %arg15: memref<1x1x32xf32, #tpu.memory_space<vmem>>, %arg16: memref<1x1x32xf32, #tpu.memory_space<vmem>>, %arg17: memref<1x1x32xf32, #tpu.memory_space<vmem>>, %arg18: memref<1x32x32xbf16, #tpu.memory_space<vmem>>, %arg19: memref<1x1x32xf32, #tpu.memory_space<vmem>>, %arg20: memref<1x1x32xf32, #tpu.memory_space<vmem>>, %arg21: memref<1x1x32xf32, #tpu.memory_space<vmem>>, %arg22: memref<1x8x32xf32, #tpu.memory_space<vmem>>, %arg23: memref<8x32xf32, #tpu.memory_space<vmem>>, %arg24: memref<8x32xf32, #tpu.memory_space<vmem>>) attributes {dimension_semantics = [#tpu.dimension_semantics<parallel>, #tpu.dimension_semantics<arbitrary>], iteration_bounds = array<i64: 2, 2>, scalar_prefetch = 0 : i64, scratch_operands = 2 : i64, tpu.core_type = #tpu.core_type<tc>, window_params = [{transform_indices = @transform_0, window_bounds = array<i64: 1, 8, 32>}, {transform_indices = @transform_1, window_bounds = array<i64: 1, 8, 32>}, {pipeline_mode = #tpu.pipeline_mode<synchronous>, transform_indices = @transform_2, window_bounds = array<i64: 8, 8>}, {transform_indices = @transform_3, window_bounds = array<i64: 1, 1, 8>}, {transform_indices = @transform_4, window_bounds = array<i64: 1, 32, 96>}, {transform_indices = @transform_5, window_bounds = array<i64: 1, 1, 96>}, {transform_indices = @transform_6, window_bounds = array<i64: 1, 32, 32>}, {transform_indices = @transform_7, window_bounds = array<i64: 1, 1, 32>}, {transform_indices = @transform_8, window_bounds = array<i64: 1, 1, 32>}, {transform_indices = @transform_9, window_bounds = array<i64: 1, 1, 32>}, {transform_indices = @transform_10, window_bounds = array<i64: 1, 32, 96>}, {transform_indices = @transform_11, window_bounds = array<i64: 1, 1, 96>}, {transform_indices = @transform_12, window_bounds = array<i64: 1, 32, 32>}, {transform_indices = @transform_13, window_bounds = array<i64: 1, 1, 32>}, {transform_indices = @transform_14, window_bounds = array<i64: 1, 1, 32>}, {transform_indices = @transform_15, window_bounds = array<i64: 1, 1, 32>}, {transform_indices = @transform_16, window_bounds = array<i64: 1, 32, 32>}, {transform_indices = @transform_17, window_bounds = array<i64: 1, 1, 32>}, {transform_indices = @transform_18, window_bounds = array<i64: 1, 1, 32>}, {transform_indices = @transform_19, window_bounds = array<i64: 1, 1, 32>}, {transform_indices = @transform_20, window_bounds = array<i64: 1, 8, 32>}]} {
    %c0_i32 = arith.constant 0 : i32
    %0 = arith.cmpi eq, %arg1, %c0_i32 : i32
    %1 = arith.extui %0 : i1 to i32
    %c0_i32_0 = arith.constant 0 : i32
    %2 = arith.cmpi ne, %1, %c0_i32_0 : i32
    scf.if %2 {
      %c0_130 = arith.constant 0 : index
      %c0_131 = arith.constant 0 : index
      %c0_132 = arith.constant 0 : index
      %293 = vector.load %arg2[%c0_130, %c0_131, %c0_132] : memref<1x8x32xf32, #tpu.memory_space<vmem>>, vector<1x8x32xf32>
      %294 = vector.shape_cast %293 : vector<1x8x32xf32> to vector<8x32xf32>
      %c0_133 = arith.constant 0 : index
      %c0_134 = arith.constant 0 : index
      %295 = vector.load %arg23[%c0_133, %c0_134] : memref<8x32xf32, #tpu.memory_space<vmem>>, vector<8x32xf32>
      tpu.vector_store %arg23[%c0_133, %c0_134], %294 {strides = array<i32>} : memref<8x32xf32, #tpu.memory_space<vmem>>, vector<8x32xf32>,
    } else {
    }
    %c0 = arith.constant 0 : index
    %c0_1 = arith.constant 0 : index
    %3 = vector.load %arg23[%c0, %c0_1] : memref<8x32xf32, #tpu.memory_space<vmem>>, vector<8x32xf32>
    %c0_2 = arith.constant 0 : index
    %c0_3 = arith.constant 0 : index
    %c0_4 = arith.constant 0 : index
    %4 = vector.load %arg3[%c0_2, %c0_3, %c0_4] : memref<1x8x32xf32, #tpu.memory_space<vmem>>, vector<1x8x32xf32>
    %5 = vector.shape_cast %4 : vector<1x8x32xf32> to vector<8x32xf32>
    %c0_5 = arith.constant 0 : index
    %c0_6 = arith.constant 0 : index
    %6 = vector.load %arg4[%c0_5, %c0_6] : memref<8x8xf32, #tpu.memory_space<vmem>>, vector<8x8xf32>
    %c0_7 = arith.constant 0 : index
    %c0_8 = arith.constant 0 : index
    %c0_9 = arith.constant 0 : index
    %7 = vector.load %arg5[%c0_7, %c0_8, %c0_9] : memref<1x1x8xf32, #tpu.memory_space<vmem>>, vector<1x1x8xf32>
    %8 = vector.shape_cast %7 : vector<1x1x8xf32> to vector<1x8xf32>
    %9 = vector.broadcast %8 : vector<1x8xf32> to vector<8x8xf32>
    %10 = arith.addf %6, %9 : vector<8x8xf32>
    %c0_10 = arith.constant 0 : index
    %c0_11 = arith.constant 0 : index
    %c0_12 = arith.constant 0 : index
    %11 = vector.load %arg6[%c0_10, %c0_11, %c0_12] : memref<1x32x96xbf16, #tpu.memory_space<vmem>>, vector<1x32x96xbf16>
    %12 = vector.shape_cast %11 : vector<1x32x96xbf16> to vector<32x96xbf16>
    %c0_13 = arith.constant 0 : index
    %c0_14 = arith.constant 0 : index
    %c0_15 = arith.constant 0 : index
    %13 = vector.load %arg7[%c0_13, %c0_14, %c0_15] : memref<1x1x96xf32, #tpu.memory_space<vmem>>, vector<1x1x96xf32>
    %14 = vector.shape_cast %13 : vector<1x1x96xf32> to vector<1x96xf32>
    %c0_16 = arith.constant 0 : index
    %c0_17 = arith.constant 0 : index
    %c0_18 = arith.constant 0 : index
    %15 = vector.load %arg8[%c0_16, %c0_17, %c0_18] : memref<1x32x32xbf16, #tpu.memory_space<vmem>>, vector<1x32x32xbf16>
    %16 = vector.shape_cast %15 : vector<1x32x32xbf16> to vector<32x32xbf16>
    %c0_19 = arith.constant 0 : index
    %c0_20 = arith.constant 0 : index
    %c0_21 = arith.constant 0 : index
    %17 = vector.load %arg9[%c0_19, %c0_20, %c0_21] : memref<1x1x32xf32, #tpu.memory_space<vmem>>, vector<1x1x32xf32>
    %18 = vector.shape_cast %17 : vector<1x1x32xf32> to vector<1x32xf32>
    %19 = arith.truncf %3 : vector<8x32xf32> to vector<8x32xbf16>
    %cst = arith.constant dense<0.000000e+00> : vector<8x96xf32>
    %20 = tpu.matmul %19, %12, %cst {dimension_numbers = #tpu.dot_dimension_numbers<[1], [0], [0], [1], [0, 0, 1, 1], [], []>} : vector<8x32xbf16>, vector<32x96xbf16>, vector<8x96xf32> -> vector<8x96xf32>
    %21 = vector.broadcast %14 : vector<1x96xf32> to vector<8x96xf32>
    %22 = arith.addf %20, %21 : vector<8x96xf32>
    %23 = vector.extract_strided_slice %22 {offsets = [0, 0], sizes = [8, 32], strides = [1, 1]} : vector<8x96xf32> to vector<8x32xf32>
    %24 = vector.extract_strided_slice %22 {offsets = [0, 32], sizes = [8, 32], strides = [1, 1]} : vector<8x96xf32> to vector<8x32xf32>
    %25 = vector.extract_strided_slice %22 {offsets = [0, 64], sizes = [8, 32], strides = [1, 1]} : vector<8x96xf32> to vector<8x32xf32>
    %26 = arith.truncf %23 : vector<8x32xf32> to vector<8x32xbf16>
    %27 = tpu.transpose %24, [1, 0] : vector<8x32xf32> -> vector<32x8xf32>
    %28 = arith.truncf %27 : vector<32x8xf32> to vector<32x8xbf16>
    %29 = arith.truncf %25 : vector<8x32xf32> to vector<8x32xbf16>
    %30 = vector.extract_strided_slice %26 {offsets = [0, 0], sizes = [8, 8], strides = [1, 1]} : vector<8x32xbf16> to vector<8x8xbf16>
    %31 = vector.extract_strided_slice %28 {offsets = [0, 0], sizes = [8, 8], strides = [1, 1]} : vector<32x8xbf16> to vector<8x8xbf16>
    %cst_22 = arith.constant dense<0.000000e+00> : vector<8x8xf32>
    %32 = tpu.matmul %30, %31, %cst_22 {dimension_numbers = #tpu.dot_dimension_numbers<[1], [0], [0], [1], [0, 0, 1, 1], [], []>} : vector<8x8xbf16>, vector<8x8xbf16>, vector<8x8xf32> -> vector<8x8xf32>
    %33 = arith.addf %32, %10 : vector<8x8xf32>
    %cst_23 = arith.constant dense<0xFF800000> : vector<8xf32>
    %34 = vector.multi_reduction <maximumf>, %33, %cst_23 [1] : vector<8x8xf32> to vector<8xf32>
    %35 = vector.shape_cast %34 : vector<8xf32> to vector<8x1xf32>
    %36 = vector.broadcast %35 : vector<8x1xf32> to vector<8x8xf32>
    %37 = arith.subf %33, %36 : vector<8x8xf32>
    %38 = math.exp %37 : vector<8x8xf32>
    %cst_24 = arith.constant dense<0.000000e+00> : vector<8xf32>
    %39 = vector.multi_reduction <add>, %38, %cst_24 [1] : vector<8x8xf32> to vector<8xf32>
    %40 = vector.shape_cast %39 : vector<8xf32> to vector<8x1xf32>
    %41 = tpu.reciprocal %40 {approx = true} : vector<8x1xf32> -> vector<8x1xf32>
    %42 = vector.broadcast %41 : vector<8x1xf32> to vector<8x8xf32>
    %43 = arith.mulf %38, %42 : vector<8x8xf32>
    %44 = arith.truncf %43 : vector<8x8xf32> to vector<8x8xbf16>
    %45 = vector.extract_strided_slice %29 {offsets = [0, 0], sizes = [8, 8], strides = [1, 1]} : vector<8x32xbf16> to vector<8x8xbf16>
    %cst_25 = arith.constant dense<0.000000e+00> : vector<8x8xf32>
    %46 = tpu.matmul %44, %45, %cst_25 {dimension_numbers = #tpu.dot_dimension_numbers<[1], [0], [0], [1], [0, 0, 1, 1], [], []>} : vector<8x8xbf16>, vector<8x8xbf16>, vector<8x8xf32> -> vector<8x8xf32>
    %c0_26 = arith.constant 0 : index
    %c0_27 = arith.constant 0 : index
    %47 = vector.load %arg24[%c0_26, %c0_27] : memref<8x32xf32, #tpu.memory_space<vmem>>, vector<8x8xf32>
    tpu.vector_store %arg24[%c0_26, %c0_27], %46 {strides = array<i32>} : memref<8x32xf32, #tpu.memory_space<vmem>>, vector<8x8xf32>,
    %48 = vector.extract_strided_slice %26 {offsets = [0, 8], sizes = [8, 8], strides = [1, 1]} : vector<8x32xbf16> to vector<8x8xbf16>
    %49 = vector.extract_strided_slice %28 {offsets = [8, 0], sizes = [8, 8], strides = [1, 1]} : vector<32x8xbf16> to vector<8x8xbf16>
    %cst_28 = arith.constant dense<0.000000e+00> : vector<8x8xf32>
    %50 = tpu.matmul %48, %49, %cst_28 {dimension_numbers = #tpu.dot_dimension_numbers<[1], [0], [0], [1], [0, 0, 1, 1], [], []>} : vector<8x8xbf16>, vector<8x8xbf16>, vector<8x8xf32> -> vector<8x8xf32>
    %51 = arith.addf %50, %10 : vector<8x8xf32>
    %cst_29 = arith.constant dense<0xFF800000> : vector<8xf32>
    %52 = vector.multi_reduction <maximumf>, %51, %cst_29 [1] : vector<8x8xf32> to vector<8xf32>
    %53 = vector.shape_cast %52 : vector<8xf32> to vector<8x1xf32>
    %54 = vector.broadcast %53 : vector<8x1xf32> to vector<8x8xf32>
    %55 = arith.subf %51, %54 : vector<8x8xf32>
    %56 = math.exp %55 : vector<8x8xf32>
    %cst_30 = arith.constant dense<0.000000e+00> : vector<8xf32>
    %57 = vector.multi_reduction <add>, %56, %cst_30 [1] : vector<8x8xf32> to vector<8xf32>
    %58 = vector.shape_cast %57 : vector<8xf32> to vector<8x1xf32>
    %59 = tpu.reciprocal %58 {approx = true} : vector<8x1xf32> -> vector<8x1xf32>
    %60 = vector.broadcast %59 : vector<8x1xf32> to vector<8x8xf32>
    %61 = arith.mulf %56, %60 : vector<8x8xf32>
    %62 = arith.truncf %61 : vector<8x8xf32> to vector<8x8xbf16>
    %63 = vector.extract_strided_slice %29 {offsets = [0, 8], sizes = [8, 8], strides = [1, 1]} : vector<8x32xbf16> to vector<8x8xbf16>
    %cst_31 = arith.constant dense<0.000000e+00> : vector<8x8xf32>
    %64 = tpu.matmul %62, %63, %cst_31 {dimension_numbers = #tpu.dot_dimension_numbers<[1], [0], [0], [1], [0, 0, 1, 1], [], []>} : vector<8x8xbf16>, vector<8x8xbf16>, vector<8x8xf32> -> vector<8x8xf32>
    %c0_32 = arith.constant 0 : index
    %c8 = arith.constant 8 : index
    %65 = vector.load %arg24[%c0_32, %c8] : memref<8x32xf32, #tpu.memory_space<vmem>>, vector<8x8xf32>
    tpu.vector_store %arg24[%c0_32, %c8], %64 {strides = array<i32>} : memref<8x32xf32, #tpu.memory_space<vmem>>, vector<8x8xf32>,
    %66 = vector.extract_strided_slice %26 {offsets = [0, 16], sizes = [8, 8], strides = [1, 1]} : vector<8x32xbf16> to vector<8x8xbf16>
    %67 = vector.extract_strided_slice %28 {offsets = [16, 0], sizes = [8, 8], strides = [1, 1]} : vector<32x8xbf16> to vector<8x8xbf16>
    %cst_33 = arith.constant dense<0.000000e+00> : vector<8x8xf32>
    %68 = tpu.matmul %66, %67, %cst_33 {dimension_numbers = #tpu.dot_dimension_numbers<[1], [0], [0], [1], [0, 0, 1, 1], [], []>} : vector<8x8xbf16>, vector<8x8xbf16>, vector<8x8xf32> -> vector<8x8xf32>
    %69 = arith.addf %68, %10 : vector<8x8xf32>
    %cst_34 = arith.constant dense<0xFF800000> : vector<8xf32>
    %70 = vector.multi_reduction <maximumf>, %69, %cst_34 [1] : vector<8x8xf32> to vector<8xf32>
    %71 = vector.shape_cast %70 : vector<8xf32> to vector<8x1xf32>
    %72 = vector.broadcast %71 : vector<8x1xf32> to vector<8x8xf32>
    %73 = arith.subf %69, %72 : vector<8x8xf32>
    %74 = math.exp %73 : vector<8x8xf32>
    %cst_35 = arith.constant dense<0.000000e+00> : vector<8xf32>
    %75 = vector.multi_reduction <add>, %74, %cst_35 [1] : vector<8x8xf32> to vector<8xf32>
    %76 = vector.shape_cast %75 : vector<8xf32> to vector<8x1xf32>
    %77 = tpu.reciprocal %76 {approx = true} : vector<8x1xf32> -> vector<8x1xf32>
    %78 = vector.broadcast %77 : vector<8x1xf32> to vector<8x8xf32>
    %79 = arith.mulf %74, %78 : vector<8x8xf32>
    %80 = arith.truncf %79 : vector<8x8xf32> to vector<8x8xbf16>
    %81 = vector.extract_strided_slice %29 {offsets = [0, 16], sizes = [8, 8], strides = [1, 1]} : vector<8x32xbf16> to vector<8x8xbf16>
    %cst_36 = arith.constant dense<0.000000e+00> : vector<8x8xf32>
    %82 = tpu.matmul %80, %81, %cst_36 {dimension_numbers = #tpu.dot_dimension_numbers<[1], [0], [0], [1], [0, 0, 1, 1], [], []>} : vector<8x8xbf16>, vector<8x8xbf16>, vector<8x8xf32> -> vector<8x8xf32>
    %c0_37 = arith.constant 0 : index
    %c16 = arith.constant 16 : index
    %83 = vector.load %arg24[%c0_37, %c16] : memref<8x32xf32, #tpu.memory_space<vmem>>, vector<8x8xf32>
    tpu.vector_store %arg24[%c0_37, %c16], %82 {strides = array<i32>} : memref<8x32xf32, #tpu.memory_space<vmem>>, vector<8x8xf32>,
    %84 = vector.extract_strided_slice %26 {offsets = [0, 24], sizes = [8, 8], strides = [1, 1]} : vector<8x32xbf16> to vector<8x8xbf16>
    %85 = vector.extract_strided_slice %28 {offsets = [24, 0], sizes = [8, 8], strides = [1, 1]} : vector<32x8xbf16> to vector<8x8xbf16>
    %cst_38 = arith.constant dense<0.000000e+00> : vector<8x8xf32>
    %86 = tpu.matmul %84, %85, %cst_38 {dimension_numbers = #tpu.dot_dimension_numbers<[1], [0], [0], [1], [0, 0, 1, 1], [], []>} : vector<8x8xbf16>, vector<8x8xbf16>, vector<8x8xf32> -> vector<8x8xf32>
    %87 = arith.addf %86, %10 : vector<8x8xf32>
    %cst_39 = arith.constant dense<0xFF800000> : vector<8xf32>
    %88 = vector.multi_reduction <maximumf>, %87, %cst_39 [1] : vector<8x8xf32> to vector<8xf32>
    %89 = vector.shape_cast %88 : vector<8xf32> to vector<8x1xf32>
    %90 = vector.broadcast %89 : vector<8x1xf32> to vector<8x8xf32>
    %91 = arith.subf %87, %90 : vector<8x8xf32>
    %92 = math.exp %91 : vector<8x8xf32>
    %cst_40 = arith.constant dense<0.000000e+00> : vector<8xf32>
    %93 = vector.multi_reduction <add>, %92, %cst_40 [1] : vector<8x8xf32> to vector<8xf32>
    %94 = vector.shape_cast %93 : vector<8xf32> to vector<8x1xf32>
    %95 = tpu.reciprocal %94 {approx = true} : vector<8x1xf32> -> vector<8x1xf32>
    %96 = vector.broadcast %95 : vector<8x1xf32> to vector<8x8xf32>
    %97 = arith.mulf %92, %96 : vector<8x8xf32>
    %98 = arith.truncf %97 : vector<8x8xf32> to vector<8x8xbf16>
    %99 = vector.extract_strided_slice %29 {offsets = [0, 24], sizes = [8, 8], strides = [1, 1]} : vector<8x32xbf16> to vector<8x8xbf16>
    %cst_41 = arith.constant dense<0.000000e+00> : vector<8x8xf32>
    %100 = tpu.matmul %98, %99, %cst_41 {dimension_numbers = #tpu.dot_dimension_numbers<[1], [0], [0], [1], [0, 0, 1, 1], [], []>} : vector<8x8xbf16>, vector<8x8xbf16>, vector<8x8xf32> -> vector<8x8xf32>
    %c0_42 = arith.constant 0 : index
    %c24 = arith.constant 24 : index
    %101 = vector.load %arg24[%c0_42, %c24] : memref<8x32xf32, #tpu.memory_space<vmem>>, vector<8x8xf32>
    tpu.vector_store %arg24[%c0_42, %c24], %100 {strides = array<i32>} : memref<8x32xf32, #tpu.memory_space<vmem>>, vector<8x8xf32>,
    %c0_43 = arith.constant 0 : index
    %c0_44 = arith.constant 0 : index
    %102 = vector.load %arg24[%c0_43, %c0_44] : memref<8x32xf32, #tpu.memory_space<vmem>>, vector<8x32xf32>
    %103 = arith.truncf %102 : vector<8x32xf32> to vector<8x32xbf16>
    %cst_45 = arith.constant dense<0.000000e+00> : vector<8x32xf32>
    %104 = tpu.matmul %103, %16, %cst_45 {dimension_numbers = #tpu.dot_dimension_numbers<[1], [0], [0], [1], [0, 0, 1, 1], [], []>} : vector<8x32xbf16>, vector<32x32xbf16>, vector<8x32xf32> -> vector<8x32xf32>
    %105 = vector.broadcast %18 : vector<1x32xf32> to vector<8x32xf32>
    %106 = arith.addf %104, %105 : vector<8x32xf32>
    %c0_46 = arith.constant 0 : index
    %c0_47 = arith.constant 0 : index
    %c0_48 = arith.constant 0 : index
    %107 = vector.load %arg10[%c0_46, %c0_47, %c0_48] : memref<1x1x32xf32, #tpu.memory_space<vmem>>, vector<1x1x32xf32>
    %108 = vector.shape_cast %107 : vector<1x1x32xf32> to vector<1x32xf32>
    %c0_49 = arith.constant 0 : index
    %c0_50 = arith.constant 0 : index
    %c0_51 = arith.constant 0 : index
    %109 = vector.load %arg11[%c0_49, %c0_50, %c0_51] : memref<1x1x32xf32, #tpu.memory_space<vmem>>, vector<1x1x32xf32>
    %110 = vector.shape_cast %109 : vector<1x1x32xf32> to vector<1x32xf32>
    %111 = arith.addf %3, %106 : vector<8x32xf32>
    %cst_52 = arith.constant dense<0.000000e+00> : vector<8xf32>
    %112 = vector.multi_reduction <add>, %111, %cst_52 [1] : vector<8x32xf32> to vector<8xf32>
    %113 = vector.shape_cast %112 : vector<8xf32> to vector<8x1xf32>
    %cst_53 = arith.constant 3.200000e+01 : f32
    %114 = vector.broadcast %cst_53 : f32 to vector<8x1xf32>
    %115 = arith.divf %113, %114 : vector<8x1xf32>
    %116 = vector.broadcast %115 : vector<8x1xf32> to vector<8x32xf32>
    %117 = arith.subf %111, %116 : vector<8x32xf32>
    %118 = arith.mulf %117, %117 : vector<8x32xf32>
    %cst_54 = arith.constant dense<0.000000e+00> : vector<8xf32>
    %119 = vector.multi_reduction <add>, %118, %cst_54 [1] : vector<8x32xf32> to vector<8xf32>
    %120 = vector.shape_cast %119 : vector<8xf32> to vector<8x1xf32>
    %cst_55 = arith.constant 3.200000e+01 : f32
    %121 = vector.broadcast %cst_55 : f32 to vector<8x1xf32>
    %122 = arith.divf %120, %121 : vector<8x1xf32>
    %cst_56 = arith.constant 9.99999974E-6 : f32
    %123 = vector.broadcast %cst_56 : f32 to vector<8x1xf32>
    %124 = arith.addf %122, %123 : vector<8x1xf32>
    %125 = math.rsqrt %124 : vector<8x1xf32>
    %126 = vector.broadcast %125 : vector<8x1xf32> to vector<8x32xf32>
    %127 = arith.mulf %117, %126 : vector<8x32xf32>
    %128 = vector.broadcast %108 : vector<1x32xf32> to vector<8x32xf32>
    %129 = arith.mulf %127, %128 : vector<8x32xf32>
    %130 = vector.broadcast %110 : vector<1x32xf32> to vector<8x32xf32>
    %131 = arith.addf %129, %130 : vector<8x32xf32>
    %c0_57 = arith.constant 0 : index
    %c0_58 = arith.constant 0 : index
    %c0_59 = arith.constant 0 : index
    %132 = vector.load %arg12[%c0_57, %c0_58, %c0_59] : memref<1x32x96xbf16, #tpu.memory_space<vmem>>, vector<1x32x96xbf16>
    %133 = vector.shape_cast %132 : vector<1x32x96xbf16> to vector<32x96xbf16>
    %c0_60 = arith.constant 0 : index
    %c0_61 = arith.constant 0 : index
    %c0_62 = arith.constant 0 : index
    %134 = vector.load %arg13[%c0_60, %c0_61, %c0_62] : memref<1x1x96xf32, #tpu.memory_space<vmem>>, vector<1x1x96xf32>
    %135 = vector.shape_cast %134 : vector<1x1x96xf32> to vector<1x96xf32>
    %c0_63 = arith.constant 0 : index
    %c0_64 = arith.constant 0 : index
    %c0_65 = arith.constant 0 : index
    %136 = vector.load %arg14[%c0_63, %c0_64, %c0_65] : memref<1x32x32xbf16, #tpu.memory_space<vmem>>, vector<1x32x32xbf16>
    %137 = vector.shape_cast %136 : vector<1x32x32xbf16> to vector<32x32xbf16>
    %c0_66 = arith.constant 0 : index
    %c0_67 = arith.constant 0 : index
    %c0_68 = arith.constant 0 : index
    %138 = vector.load %arg15[%c0_66, %c0_67, %c0_68] : memref<1x1x32xf32, #tpu.memory_space<vmem>>, vector<1x1x32xf32>
    %139 = vector.shape_cast %138 : vector<1x1x32xf32> to vector<1x32xf32>
    %140 = vector.extract_strided_slice %133 {offsets = [0, 0], sizes = [32, 32], strides = [1, 1]} : vector<32x96xbf16> to vector<32x32xbf16>
    %141 = arith.truncf %131 : vector<8x32xf32> to vector<8x32xbf16>
    %cst_69 = arith.constant dense<0.000000e+00> : vector<8x32xf32>
    %142 = tpu.matmul %141, %140, %cst_69 {dimension_numbers = #tpu.dot_dimension_numbers<[1], [0], [0], [1], [0, 0, 1, 1], [], []>} : vector<8x32xbf16>, vector<32x32xbf16>, vector<8x32xf32> -> vector<8x32xf32>
    %143 = vector.extract_strided_slice %135 {offsets = [0, 0], sizes = [1, 32], strides = [1, 1]} : vector<1x96xf32> to vector<1x32xf32>
    %144 = vector.broadcast %143 : vector<1x32xf32> to vector<8x32xf32>
    %145 = arith.addf %142, %144 : vector<8x32xf32>
    %146 = vector.extract_strided_slice %133 {offsets = [0, 32], sizes = [32, 64], strides = [1, 1]} : vector<32x96xbf16> to vector<32x64xbf16>
    %147 = arith.truncf %5 : vector<8x32xf32> to vector<8x32xbf16>
    %cst_70 = arith.constant dense<0.000000e+00> : vector<8x64xf32>
    %148 = tpu.matmul %147, %146, %cst_70 {dimension_numbers = #tpu.dot_dimension_numbers<[1], [0], [0], [1], [0, 0, 1, 1], [], []>} : vector<8x32xbf16>, vector<32x64xbf16>, vector<8x64xf32> -> vector<8x64xf32>
    %149 = vector.extract_strided_slice %135 {offsets = [0, 32], sizes = [1, 64], strides = [1, 1]} : vector<1x96xf32> to vector<1x64xf32>
    %150 = vector.broadcast %149 : vector<1x64xf32> to vector<8x64xf32>
    %151 = arith.addf %148, %150 : vector<8x64xf32>
    %152 = vector.extract_strided_slice %151 {offsets = [0, 0], sizes = [8, 32], strides = [1, 1]} : vector<8x64xf32> to vector<8x32xf32>
    %153 = vector.extract_strided_slice %151 {offsets = [0, 32], sizes = [8, 32], strides = [1, 1]} : vector<8x64xf32> to vector<8x32xf32>
    %154 = arith.truncf %145 : vector<8x32xf32> to vector<8x32xbf16>
    %155 = tpu.transpose %152, [1, 0] : vector<8x32xf32> -> vector<32x8xf32>
    %156 = arith.truncf %155 : vector<32x8xf32> to vector<32x8xbf16>
    %157 = arith.truncf %153 : vector<8x32xf32> to vector<8x32xbf16>
    %158 = vector.extract_strided_slice %154 {offsets = [0, 0], sizes = [8, 8], strides = [1, 1]} : vector<8x32xbf16> to vector<8x8xbf16>
    %159 = vector.extract_strided_slice %156 {offsets = [0, 0], sizes = [8, 8], strides = [1, 1]} : vector<32x8xbf16> to vector<8x8xbf16>
    %cst_71 = arith.constant dense<0.000000e+00> : vector<8x8xf32>
    %160 = tpu.matmul %158, %159, %cst_71 {dimension_numbers = #tpu.dot_dimension_numbers<[1], [0], [0], [1], [0, 0, 1, 1], [], []>} : vector<8x8xbf16>, vector<8x8xbf16>, vector<8x8xf32> -> vector<8x8xf32>
    %cst_72 = arith.constant dense<0xFF800000> : vector<8xf32>
    %161 = vector.multi_reduction <maximumf>, %160, %cst_72 [1] : vector<8x8xf32> to vector<8xf32>
    %162 = vector.shape_cast %161 : vector<8xf32> to vector<8x1xf32>
    %163 = vector.broadcast %162 : vector<8x1xf32> to vector<8x8xf32>
    %164 = arith.subf %160, %163 : vector<8x8xf32>
    %165 = math.exp %164 : vector<8x8xf32>
    %cst_73 = arith.constant dense<0.000000e+00> : vector<8xf32>
    %166 = vector.multi_reduction <add>, %165, %cst_73 [1] : vector<8x8xf32> to vector<8xf32>
    %167 = vector.shape_cast %166 : vector<8xf32> to vector<8x1xf32>
    %168 = tpu.reciprocal %167 {approx = true} : vector<8x1xf32> -> vector<8x1xf32>
    %169 = vector.broadcast %168 : vector<8x1xf32> to vector<8x8xf32>
    %170 = arith.mulf %165, %169 : vector<8x8xf32>
    %171 = arith.truncf %170 : vector<8x8xf32> to vector<8x8xbf16>
    %172 = vector.extract_strided_slice %157 {offsets = [0, 0], sizes = [8, 8], strides = [1, 1]} : vector<8x32xbf16> to vector<8x8xbf16>
    %cst_74 = arith.constant dense<0.000000e+00> : vector<8x8xf32>
    %173 = tpu.matmul %171, %172, %cst_74 {dimension_numbers = #tpu.dot_dimension_numbers<[1], [0], [0], [1], [0, 0, 1, 1], [], []>} : vector<8x8xbf16>, vector<8x8xbf16>, vector<8x8xf32> -> vector<8x8xf32>
    %c0_75 = arith.constant 0 : index
    %c0_76 = arith.constant 0 : index
    %174 = vector.load %arg24[%c0_75, %c0_76] : memref<8x32xf32, #tpu.memory_space<vmem>>, vector<8x8xf32>
    tpu.vector_store %arg24[%c0_75, %c0_76], %173 {strides = array<i32>} : memref<8x32xf32, #tpu.memory_space<vmem>>, vector<8x8xf32>,
    %175 = vector.extract_strided_slice %154 {offsets = [0, 8], sizes = [8, 8], strides = [1, 1]} : vector<8x32xbf16> to vector<8x8xbf16>
    %176 = vector.extract_strided_slice %156 {offsets = [8, 0], sizes = [8, 8], strides = [1, 1]} : vector<32x8xbf16> to vector<8x8xbf16>
    %cst_77 = arith.constant dense<0.000000e+00> : vector<8x8xf32>
    %177 = tpu.matmul %175, %176, %cst_77 {dimension_numbers = #tpu.dot_dimension_numbers<[1], [0], [0], [1], [0, 0, 1, 1], [], []>} : vector<8x8xbf16>, vector<8x8xbf16>, vector<8x8xf32> -> vector<8x8xf32>
    %cst_78 = arith.constant dense<0xFF800000> : vector<8xf32>
    %178 = vector.multi_reduction <maximumf>, %177, %cst_78 [1] : vector<8x8xf32> to vector<8xf32>
    %179 = vector.shape_cast %178 : vector<8xf32> to vector<8x1xf32>
    %180 = vector.broadcast %179 : vector<8x1xf32> to vector<8x8xf32>
    %181 = arith.subf %177, %180 : vector<8x8xf32>
    %182 = math.exp %181 : vector<8x8xf32>
    %cst_79 = arith.constant dense<0.000000e+00> : vector<8xf32>
    %183 = vector.multi_reduction <add>, %182, %cst_79 [1] : vector<8x8xf32> to vector<8xf32>
    %184 = vector.shape_cast %183 : vector<8xf32> to vector<8x1xf32>
    %185 = tpu.reciprocal %184 {approx = true} : vector<8x1xf32> -> vector<8x1xf32>
    %186 = vector.broadcast %185 : vector<8x1xf32> to vector<8x8xf32>
    %187 = arith.mulf %182, %186 : vector<8x8xf32>
    %188 = arith.truncf %187 : vector<8x8xf32> to vector<8x8xbf16>
    %189 = vector.extract_strided_slice %157 {offsets = [0, 8], sizes = [8, 8], strides = [1, 1]} : vector<8x32xbf16> to vector<8x8xbf16>
    %cst_80 = arith.constant dense<0.000000e+00> : vector<8x8xf32>
    %190 = tpu.matmul %188, %189, %cst_80 {dimension_numbers = #tpu.dot_dimension_numbers<[1], [0], [0], [1], [0, 0, 1, 1], [], []>} : vector<8x8xbf16>, vector<8x8xbf16>, vector<8x8xf32> -> vector<8x8xf32>
    %c0_81 = arith.constant 0 : index
    %c8_82 = arith.constant 8 : index
    %191 = vector.load %arg24[%c0_81, %c8_82] : memref<8x32xf32, #tpu.memory_space<vmem>>, vector<8x8xf32>
    tpu.vector_store %arg24[%c0_81, %c8_82], %190 {strides = array<i32>} : memref<8x32xf32, #tpu.memory_space<vmem>>, vector<8x8xf32>,
    %192 = vector.extract_strided_slice %154 {offsets = [0, 16], sizes = [8, 8], strides = [1, 1]} : vector<8x32xbf16> to vector<8x8xbf16>
    %193 = vector.extract_strided_slice %156 {offsets = [16, 0], sizes = [8, 8], strides = [1, 1]} : vector<32x8xbf16> to vector<8x8xbf16>
    %cst_83 = arith.constant dense<0.000000e+00> : vector<8x8xf32>
    %194 = tpu.matmul %192, %193, %cst_83 {dimension_numbers = #tpu.dot_dimension_numbers<[1], [0], [0], [1], [0, 0, 1, 1], [], []>} : vector<8x8xbf16>, vector<8x8xbf16>, vector<8x8xf32> -> vector<8x8xf32>
    %cst_84 = arith.constant dense<0xFF800000> : vector<8xf32>
    %195 = vector.multi_reduction <maximumf>, %194, %cst_84 [1] : vector<8x8xf32> to vector<8xf32>
    %196 = vector.shape_cast %195 : vector<8xf32> to vector<8x1xf32>
    %197 = vector.broadcast %196 : vector<8x1xf32> to vector<8x8xf32>
    %198 = arith.subf %194, %197 : vector<8x8xf32>
    %199 = math.exp %198 : vector<8x8xf32>
    %cst_85 = arith.constant dense<0.000000e+00> : vector<8xf32>
    %200 = vector.multi_reduction <add>, %199, %cst_85 [1] : vector<8x8xf32> to vector<8xf32>
    %201 = vector.shape_cast %200 : vector<8xf32> to vector<8x1xf32>
    %202 = tpu.reciprocal %201 {approx = true} : vector<8x1xf32> -> vector<8x1xf32>
    %203 = vector.broadcast %202 : vector<8x1xf32> to vector<8x8xf32>
    %204 = arith.mulf %199, %203 : vector<8x8xf32>
    %205 = arith.truncf %204 : vector<8x8xf32> to vector<8x8xbf16>
    %206 = vector.extract_strided_slice %157 {offsets = [0, 16], sizes = [8, 8], strides = [1, 1]} : vector<8x32xbf16> to vector<8x8xbf16>
    %cst_86 = arith.constant dense<0.000000e+00> : vector<8x8xf32>
    %207 = tpu.matmul %205, %206, %cst_86 {dimension_numbers = #tpu.dot_dimension_numbers<[1], [0], [0], [1], [0, 0, 1, 1], [], []>} : vector<8x8xbf16>, vector<8x8xbf16>, vector<8x8xf32> -> vector<8x8xf32>
    %c0_87 = arith.constant 0 : index
    %c16_88 = arith.constant 16 : index
    %208 = vector.load %arg24[%c0_87, %c16_88] : memref<8x32xf32, #tpu.memory_space<vmem>>, vector<8x8xf32>
    tpu.vector_store %arg24[%c0_87, %c16_88], %207 {strides = array<i32>} : memref<8x32xf32, #tpu.memory_space<vmem>>, vector<8x8xf32>,
    %209 = vector.extract_strided_slice %154 {offsets = [0, 24], sizes = [8, 8], strides = [1, 1]} : vector<8x32xbf16> to vector<8x8xbf16>
    %210 = vector.extract_strided_slice %156 {offsets = [24, 0], sizes = [8, 8], strides = [1, 1]} : vector<32x8xbf16> to vector<8x8xbf16>
    %cst_89 = arith.constant dense<0.000000e+00> : vector<8x8xf32>
    %211 = tpu.matmul %209, %210, %cst_89 {dimension_numbers = #tpu.dot_dimension_numbers<[1], [0], [0], [1], [0, 0, 1, 1], [], []>} : vector<8x8xbf16>, vector<8x8xbf16>, vector<8x8xf32> -> vector<8x8xf32>
    %cst_90 = arith.constant dense<0xFF800000> : vector<8xf32>
    %212 = vector.multi_reduction <maximumf>, %211, %cst_90 [1] : vector<8x8xf32> to vector<8xf32>
    %213 = vector.shape_cast %212 : vector<8xf32> to vector<8x1xf32>
    %214 = vector.broadcast %213 : vector<8x1xf32> to vector<8x8xf32>
    %215 = arith.subf %211, %214 : vector<8x8xf32>
    %216 = math.exp %215 : vector<8x8xf32>
    %cst_91 = arith.constant dense<0.000000e+00> : vector<8xf32>
    %217 = vector.multi_reduction <add>, %216, %cst_91 [1] : vector<8x8xf32> to vector<8xf32>
    %218 = vector.shape_cast %217 : vector<8xf32> to vector<8x1xf32>
    %219 = tpu.reciprocal %218 {approx = true} : vector<8x1xf32> -> vector<8x1xf32>
    %220 = vector.broadcast %219 : vector<8x1xf32> to vector<8x8xf32>
    %221 = arith.mulf %216, %220 : vector<8x8xf32>
    %222 = arith.truncf %221 : vector<8x8xf32> to vector<8x8xbf16>
    %223 = vector.extract_strided_slice %157 {offsets = [0, 24], sizes = [8, 8], strides = [1, 1]} : vector<8x32xbf16> to vector<8x8xbf16>
    %cst_92 = arith.constant dense<0.000000e+00> : vector<8x8xf32>
    %224 = tpu.matmul %222, %223, %cst_92 {dimension_numbers = #tpu.dot_dimension_numbers<[1], [0], [0], [1], [0, 0, 1, 1], [], []>} : vector<8x8xbf16>, vector<8x8xbf16>, vector<8x8xf32> -> vector<8x8xf32>
    %c0_93 = arith.constant 0 : index
    %c24_94 = arith.constant 24 : index
    %225 = vector.load %arg24[%c0_93, %c24_94] : memref<8x32xf32, #tpu.memory_space<vmem>>, vector<8x8xf32>
    tpu.vector_store %arg24[%c0_93, %c24_94], %224 {strides = array<i32>} : memref<8x32xf32, #tpu.memory_space<vmem>>, vector<8x8xf32>,
    %c0_95 = arith.constant 0 : index
    %c0_96 = arith.constant 0 : index
    %226 = vector.load %arg24[%c0_95, %c0_96] : memref<8x32xf32, #tpu.memory_space<vmem>>, vector<8x32xf32>
    %227 = arith.truncf %226 : vector<8x32xf32> to vector<8x32xbf16>
    %cst_97 = arith.constant dense<0.000000e+00> : vector<8x32xf32>
    %228 = tpu.matmul %227, %137, %cst_97 {dimension_numbers = #tpu.dot_dimension_numbers<[1], [0], [0], [1], [0, 0, 1, 1], [], []>} : vector<8x32xbf16>, vector<32x32xbf16>, vector<8x32xf32> -> vector<8x32xf32>
    %229 = vector.broadcast %139 : vector<1x32xf32> to vector<8x32xf32>
    %230 = arith.addf %228, %229 : vector<8x32xf32>
    %c0_98 = arith.constant 0 : index
    %c0_99 = arith.constant 0 : index
    %c0_100 = arith.constant 0 : index
    %231 = vector.load %arg16[%c0_98, %c0_99, %c0_100] : memref<1x1x32xf32, #tpu.memory_space<vmem>>, vector<1x1x32xf32>
    %232 = vector.shape_cast %231 : vector<1x1x32xf32> to vector<1x32xf32>
    %c0_101 = arith.constant 0 : index
    %c0_102 = arith.constant 0 : index
    %c0_103 = arith.constant 0 : index
    %233 = vector.load %arg17[%c0_101, %c0_102, %c0_103] : memref<1x1x32xf32, #tpu.memory_space<vmem>>, vector<1x1x32xf32>
    %234 = vector.shape_cast %233 : vector<1x1x32xf32> to vector<1x32xf32>
    %235 = arith.addf %131, %230 : vector<8x32xf32>
    %cst_104 = arith.constant dense<0.000000e+00> : vector<8xf32>
    %236 = vector.multi_reduction <add>, %235, %cst_104 [1] : vector<8x32xf32> to vector<8xf32>
    %237 = vector.shape_cast %236 : vector<8xf32> to vector<8x1xf32>
    %cst_105 = arith.constant 3.200000e+01 : f32
    %238 = vector.broadcast %cst_105 : f32 to vector<8x1xf32>
    %239 = arith.divf %237, %238 : vector<8x1xf32>
    %240 = vector.broadcast %239 : vector<8x1xf32> to vector<8x32xf32>
    %241 = arith.subf %235, %240 : vector<8x32xf32>
    %242 = arith.mulf %241, %241 : vector<8x32xf32>
    %cst_106 = arith.constant dense<0.000000e+00> : vector<8xf32>
    %243 = vector.multi_reduction <add>, %242, %cst_106 [1] : vector<8x32xf32> to vector<8xf32>
    %244 = vector.shape_cast %243 : vector<8xf32> to vector<8x1xf32>
    %cst_107 = arith.constant 3.200000e+01 : f32
    %245 = vector.broadcast %cst_107 : f32 to vector<8x1xf32>
    %246 = arith.divf %244, %245 : vector<8x1xf32>
    %cst_108 = arith.constant 9.99999974E-6 : f32
    %247 = vector.broadcast %cst_108 : f32 to vector<8x1xf32>
    %248 = arith.addf %246, %247 : vector<8x1xf32>
    %249 = math.rsqrt %248 : vector<8x1xf32>
    %250 = vector.broadcast %249 : vector<8x1xf32> to vector<8x32xf32>
    %251 = arith.mulf %241, %250 : vector<8x32xf32>
    %252 = vector.broadcast %232 : vector<1x32xf32> to vector<8x32xf32>
    %253 = arith.mulf %251, %252 : vector<8x32xf32>
    %254 = vector.broadcast %234 : vector<1x32xf32> to vector<8x32xf32>
    %255 = arith.addf %253, %254 : vector<8x32xf32>
    %c0_109 = arith.constant 0 : index
    %c0_110 = arith.constant 0 : index
    %c0_111 = arith.constant 0 : index
    %256 = vector.load %arg18[%c0_109, %c0_110, %c0_111] : memref<1x32x32xbf16, #tpu.memory_space<vmem>>, vector<1x32x32xbf16>
    %257 = vector.shape_cast %256 : vector<1x32x32xbf16> to vector<32x32xbf16>
    %258 = arith.truncf %255 : vector<8x32xf32> to vector<8x32xbf16>
    %cst_112 = arith.constant dense<0.000000e+00> : vector<8x32xf32>
    %259 = tpu.matmul %258, %257, %cst_112 {dimension_numbers = #tpu.dot_dimension_numbers<[1], [0], [0], [1], [0, 0, 1, 1], [], []>} : vector<8x32xbf16>, vector<32x32xbf16>, vector<8x32xf32> -> vector<8x32xf32>
    %c0_113 = arith.constant 0 : index
    %c0_114 = arith.constant 0 : index
    %c0_115 = arith.constant 0 : index
    %260 = vector.load %arg19[%c0_113, %c0_114, %c0_115] : memref<1x1x32xf32, #tpu.memory_space<vmem>>, vector<1x1x32xf32>
    %261 = vector.shape_cast %260 : vector<1x1x32xf32> to vector<1x32xf32>
    %262 = vector.broadcast %261 : vector<1x32xf32> to vector<8x32xf32>
    %263 = arith.addf %259, %262 : vector<8x32xf32>
    %c0_116 = arith.constant 0 : index
    %c0_117 = arith.constant 0 : index
    %c0_118 = arith.constant 0 : index
    %264 = vector.load %arg20[%c0_116, %c0_117, %c0_118] : memref<1x1x32xf32, #tpu.memory_space<vmem>>, vector<1x1x32xf32>
    %265 = vector.shape_cast %264 : vector<1x1x32xf32> to vector<1x32xf32>
    %c0_119 = arith.constant 0 : index
    %c0_120 = arith.constant 0 : index
    %c0_121 = arith.constant 0 : index
    %266 = vector.load %arg21[%c0_119, %c0_120, %c0_121] : memref<1x1x32xf32, #tpu.memory_space<vmem>>, vector<1x1x32xf32>
    %267 = vector.shape_cast %266 : vector<1x1x32xf32> to vector<1x32xf32>
    %268 = arith.addf %255, %263 : vector<8x32xf32>
    %cst_122 = arith.constant dense<0.000000e+00> : vector<8xf32>
    %269 = vector.multi_reduction <add>, %268, %cst_122 [1] : vector<8x32xf32> to vector<8xf32>
    %270 = vector.shape_cast %269 : vector<8xf32> to vector<8x1xf32>
    %cst_123 = arith.constant 3.200000e+01 : f32
    %271 = vector.broadcast %cst_123 : f32 to vector<8x1xf32>
    %272 = arith.divf %270, %271 : vector<8x1xf32>
    %273 = vector.broadcast %272 : vector<8x1xf32> to vector<8x32xf32>
    %274 = arith.subf %268, %273 : vector<8x32xf32>
    %275 = arith.mulf %274, %274 : vector<8x32xf32>
    %cst_124 = arith.constant dense<0.000000e+00> : vector<8xf32>
    %276 = vector.multi_reduction <add>, %275, %cst_124 [1] : vector<8x32xf32> to vector<8xf32>
    %277 = vector.shape_cast %276 : vector<8xf32> to vector<8x1xf32>
    %cst_125 = arith.constant 3.200000e+01 : f32
    %278 = vector.broadcast %cst_125 : f32 to vector<8x1xf32>
    %279 = arith.divf %277, %278 : vector<8x1xf32>
    %cst_126 = arith.constant 9.99999974E-6 : f32
    %280 = vector.broadcast %cst_126 : f32 to vector<8x1xf32>
    %281 = arith.addf %279, %280 : vector<8x1xf32>
    %282 = math.rsqrt %281 : vector<8x1xf32>
    %283 = vector.broadcast %282 : vector<8x1xf32> to vector<8x32xf32>
    %284 = arith.mulf %274, %283 : vector<8x32xf32>
    %285 = vector.broadcast %265 : vector<1x32xf32> to vector<8x32xf32>
    %286 = arith.mulf %284, %285 : vector<8x32xf32>
    %287 = vector.broadcast %267 : vector<1x32xf32> to vector<8x32xf32>
    %288 = arith.addf %286, %287 : vector<8x32xf32>
    %c0_127 = arith.constant 0 : index
    %c0_128 = arith.constant 0 : index
    %289 = vector.load %arg23[%c0_127, %c0_128] : memref<8x32xf32, #tpu.memory_space<vmem>>, vector<8x32xf32>
    tpu.vector_store %arg23[%c0_127, %c0_128], %288 {strides = array<i32>} : memref<8x32xf32, #tpu.memory_space<vmem>>, vector<8x32xf32>,
    %c1_i32 = arith.constant 1 : i32
    %290 = arith.cmpi eq, %arg1, %c1_i32 : i32
    %291 = arith.extui %290 : i1 to i32
    %c0_i32_129 = arith.constant 0 : i32
    %292 = arith.cmpi ne, %291, %c0_i32_129 : i32
    scf.if %292 {
      %c0_130 = arith.constant 0 : index
      %c0_131 = arith.constant 0 : index
      %c0_132 = arith.constant 0 : index
      %293 = vector.load %arg22[%c0_130, %c0_131, %c0_132] : memref<1x8x32xf32, #tpu.memory_space<vmem>>, vector<1x8x32xf32>
      %294 = vector.shape_cast %293 : vector<1x8x32xf32> to vector<8x32xf32>
      %295 = vector.shape_cast %288 : vector<8x32xf32> to vector<1x8x32xf32>
      tpu.vector_store %arg22[%c0_130, %c0_131, %c0_132], %295 {strides = array<i32>} : memref<1x8x32xf32, #tpu.memory_space<vmem>>, vector<1x8x32xf32>,
    } else {
    }
    return
  }
  func.func @transform_0(%arg0: i32, %arg1: i32) -> (i32, i32, i32) {
    %c0_i32 = arith.constant 0 : i32
    %c0_i32_0 = arith.constant 0 : i32
    %c0_i32_1 = arith.constant 0 : i32
    return %arg0, %c0_i32, %c0_i32_0 : i32, i32, i32
  }
  func.func @transform_1(%arg0: i32, %arg1: i32) -> (i32, i32, i32) {
    %c0_i32 = arith.constant 0 : i32
    %c0_i32_0 = arith.constant 0 : i32
    %c0_i32_1 = arith.constant 0 : i32
    return %arg0, %c0_i32, %c0_i32_0 : i32, i32, i32
  }
  func.func @transform_2(%arg0: i32, %arg1: i32) -> (i32, i32) {
    %c0_i32 = arith.constant 0 : i32
    %c0_i32_0 = arith.constant 0 : i32
    %c0_i32_1 = arith.constant 0 : i32
    return %c0_i32, %c0_i32_0 : i32, i32
  }
  func.func @transform_3(%arg0: i32, %arg1: i32) -> (i32, i32, i32) {
    %c0_i32 = arith.constant 0 : i32
    %c0_i32_0 = arith.constant 0 : i32
    %c0_i32_1 = arith.constant 0 : i32
    return %arg0, %c0_i32, %c0_i32_0 : i32, i32, i32
  }
  func.func @transform_4(%arg0: i32, %arg1: i32) -> (i32, i32, i32) {
    %c0_i32 = arith.constant 0 : i32
    %c0_i32_0 = arith.constant 0 : i32
    %c0_i32_1 = arith.constant 0 : i32
    return %arg1, %c0_i32, %c0_i32_0 : i32, i32, i32
  }
  func.func @transform_5(%arg0: i32, %arg1: i32) -> (i32, i32, i32) {
    %c0_i32 = arith.constant 0 : i32
    %c0_i32_0 = arith.constant 0 : i32
    %c0_i32_1 = arith.constant 0 : i32
    return %arg1, %c0_i32, %c0_i32_0 : i32, i32, i32
  }
  func.func @transform_6(%arg0: i32, %arg1: i32) -> (i32, i32, i32) {
    %c0_i32 = arith.constant 0 : i32
    %c0_i32_0 = arith.constant 0 : i32
    %c0_i32_1 = arith.constant 0 : i32
    return %arg1, %c0_i32, %c0_i32_0 : i32, i32, i32
  }
  func.func @transform_7(%arg0: i32, %arg1: i32) -> (i32, i32, i32) {
    %c0_i32 = arith.constant 0 : i32
    %c0_i32_0 = arith.constant 0 : i32
    %c0_i32_1 = arith.constant 0 : i32
    return %arg1, %c0_i32, %c0_i32_0 : i32, i32, i32
  }
  func.func @transform_8(%arg0: i32, %arg1: i32) -> (i32, i32, i32) {
    %c0_i32 = arith.constant 0 : i32
    %c0_i32_0 = arith.constant 0 : i32
    %c0_i32_1 = arith.constant 0 : i32
    return %arg1, %c0_i32, %c0_i32_0 : i32, i32, i32
  }
  func.func @transform_9(%arg0: i32, %arg1: i32) -> (i32, i32, i32) {
    %c0_i32 = arith.constant 0 : i32
    %c0_i32_0 = arith.constant 0 : i32
    %c0_i32_1 = arith.constant 0 : i32
    return %arg1, %c0_i32, %c0_i32_0 : i32, i32, i32
  }
  func.func @transform_10(%arg0: i32, %arg1: i32) -> (i32, i32, i32) {
    %c0_i32 = arith.constant 0 : i32
    %c0_i32_0 = arith.constant 0 : i32
    %c0_i32_1 = arith.constant 0 : i32
    return %arg1, %c0_i32, %c0_i32_0 : i32, i32, i32
  }
  func.func @transform_11(%arg0: i32, %arg1: i32) -> (i32, i32, i32) {
    %c0_i32 = arith.constant 0 : i32
    %c0_i32_0 = arith.constant 0 : i32
    %c0_i32_1 = arith.constant 0 : i32
    return %arg1, %c0_i32, %c0_i32_0 : i32, i32, i32
  }
  func.func @transform_12(%arg0: i32, %arg1: i32) -> (i32, i32, i32) {
    %c0_i32 = arith.constant 0 : i32
    %c0_i32_0 = arith.constant 0 : i32
    %c0_i32_1 = arith.constant 0 : i32
    return %arg1, %c0_i32, %c0_i32_0 : i32, i32, i32
  }
  func.func @transform_13(%arg0: i32, %arg1: i32) -> (i32, i32, i32) {
    %c0_i32 = arith.constant 0 : i32
    %c0_i32_0 = arith.constant 0 : i32
    %c0_i32_1 = arith.constant 0 : i32
    return %arg1, %c0_i32, %c0_i32_0 : i32, i32, i32
  }
  func.func @transform_14(%arg0: i32, %arg1: i32) -> (i32, i32, i32) {
    %c0_i32 = arith.constant 0 : i32
    %c0_i32_0 = arith.constant 0 : i32
    %c0_i32_1 = arith.constant 0 : i32
    return %arg1, %c0_i32, %c0_i32_0 : i32, i32, i32
  }
  func.func @transform_15(%arg0: i32, %arg1: i32) -> (i32, i32, i32) {
    %c0_i32 = arith.constant 0 : i32
    %c0_i32_0 = arith.constant 0 : i32
    %c0_i32_1 = arith.constant 0 : i32
    return %arg1, %c0_i32, %c0_i32_0 : i32, i32, i32
  }
  func.func @transform_16(%arg0: i32, %arg1: i32) -> (i32, i32, i32) {
    %c0_i32 = arith.constant 0 : i32
    %c0_i32_0 = arith.constant 0 : i32
    %c0_i32_1 = arith.constant 0 : i32
    return %arg1, %c0_i32, %c0_i32_0 : i32, i32, i32
  }
  func.func @transform_17(%arg0: i32, %arg1: i32) -> (i32, i32, i32) {
    %c0_i32 = arith.constant 0 : i32
    %c0_i32_0 = arith.constant 0 : i32
    %c0_i32_1 = arith.constant 0 : i32
    return %arg1, %c0_i32, %c0_i32_0 : i32, i32, i32
  }
  func.func @transform_18(%arg0: i32, %arg1: i32) -> (i32, i32, i32) {
    %c0_i32 = arith.constant 0 : i32
    %c0_i32_0 = arith.constant 0 : i32
    %c0_i32_1 = arith.constant 0 : i32
    return %arg1, %c0_i32, %c0_i32_0 : i32, i32, i32
  }
  func.func @transform_19(%arg0: i32, %arg1: i32) -> (i32, i32, i32) {
    %c0_i32 = arith.constant 0 : i32
    %c0_i32_0 = arith.constant 0 : i32
    %c0_i32_1 = arith.constant 0 : i32
    return %arg1, %c0_i32, %c0_i32_0 : i32, i32, i32
  }
  func.func @transform_20(%arg0: i32, %arg1: i32) -> (i32, i32, i32) {
    %c0_i32 = arith.constant 0 : i32
    %c0_i32_0 = arith.constant 0 : i32
    %c0_i32_1 = arith.constant 0 : i32
    return %arg0, %c0_i32, %c0_i32_0 : i32, i32, i32
  }
}

module attributes {stable_mosaic.version = 11 : i64} {
  func.func @_linear_kernel(%arg0: i32, %arg1: memref<16x32xf32, #tpu.memory_space<vmem>>, %arg2: memref<32x128xbf16, #tpu.memory_space<vmem>>, %arg3: memref<1x128xf32, #tpu.memory_space<vmem>>, %arg4: memref<16x128xf32, #tpu.memory_space<vmem>>) attributes {dimension_semantics = [#tpu.dimension_semantics<parallel>], iteration_bounds = array<i64: 1>, scalar_prefetch = 0 : i64, scratch_operands = 0 : i64, tpu.core_type = #tpu.core_type<tc>, window_params = [{transform_indices = @transform_0, window_bounds = array<i64: 16, 32>}, {pipeline_mode = #tpu.pipeline_mode<synchronous>, transform_indices = @transform_1, window_bounds = array<i64: 32, 128>}, {pipeline_mode = #tpu.pipeline_mode<synchronous>, transform_indices = @transform_2, window_bounds = array<i64: 1, 128>}, {transform_indices = @transform_3, window_bounds = array<i64: 16, 128>}]} {
    %c0 = arith.constant 0 : index
    %c0_0 = arith.constant 0 : index
    %0 = vector.load %arg1[%c0, %c0_0] : memref<16x32xf32, #tpu.memory_space<vmem>>, vector<16x32xf32>
    %c0_1 = arith.constant 0 : index
    %c0_2 = arith.constant 0 : index
    %1 = vector.load %arg2[%c0_1, %c0_2] : memref<32x128xbf16, #tpu.memory_space<vmem>>, vector<32x128xbf16>
    %2 = arith.truncf %0 : vector<16x32xf32> to vector<16x32xbf16>
    %cst = arith.constant dense<0.000000e+00> : vector<16x128xf32>
    %3 = tpu.matmul %2, %1, %cst {dimension_numbers = #tpu.dot_dimension_numbers<[1], [0], [0], [1], [0, 0, 1, 1], [], []>} : vector<16x32xbf16>, vector<32x128xbf16>, vector<16x128xf32> -> vector<16x128xf32>
    %c0_3 = arith.constant 0 : index
    %c0_4 = arith.constant 0 : index
    %4 = vector.load %arg3[%c0_3, %c0_4] : memref<1x128xf32, #tpu.memory_space<vmem>>, vector<1x128xf32>
    %5 = vector.broadcast %4 : vector<1x128xf32> to vector<16x128xf32>
    %6 = arith.addf %3, %5 : vector<16x128xf32>
    %c0_5 = arith.constant 0 : index
    %c0_6 = arith.constant 0 : index
    %7 = vector.load %arg4[%c0_5, %c0_6] : memref<16x128xf32, #tpu.memory_space<vmem>>, vector<16x128xf32>
    tpu.vector_store %arg4[%c0_5, %c0_6], %6 {strides = array<i32>} : memref<16x128xf32, #tpu.memory_space<vmem>>, vector<16x128xf32>,
    return
  }
  func.func @transform_0(%arg0: i32) -> (i32, i32) {
    %c0_i32 = arith.constant 0 : i32
    %c0_i32_0 = arith.constant 0 : i32
    return %arg0, %c0_i32 : i32, i32
  }
  func.func @transform_1(%arg0: i32) -> (i32, i32) {
    %c0_i32 = arith.constant 0 : i32
    %c0_i32_0 = arith.constant 0 : i32
    %c0_i32_1 = arith.constant 0 : i32
    return %c0_i32, %c0_i32_0 : i32, i32
  }
  func.func @transform_2(%arg0: i32) -> (i32, i32) {
    %c0_i32 = arith.constant 0 : i32
    %c0_i32_0 = arith.constant 0 : i32
    %c0_i32_1 = arith.constant 0 : i32
    return %c0_i32, %c0_i32_0 : i32, i32
  }
  func.func @transform_3(%arg0: i32) -> (i32, i32) {
    %c0_i32 = arith.constant 0 : i32
    %c0_i32_0 = arith.constant 0 : i32
    return %arg0, %c0_i32 : i32, i32
  }
}

module attributes {stable_mosaic.version = 11 : i64} {
  func.func @_encoder_stack_kernel(%arg0: i32, %arg1: i32, %arg2: memref<1x8x32xf32, #tpu.memory_space<vmem>>, %arg3: memref<1x1x8xf32, #tpu.memory_space<vmem>>, %arg4: memref<1x32x96xbf16, #tpu.memory_space<vmem>>, %arg5: memref<1x1x96xf32, #tpu.memory_space<vmem>>, %arg6: memref<1x32x32xbf16, #tpu.memory_space<vmem>>, %arg7: memref<1x1x32xf32, #tpu.memory_space<vmem>>, %arg8: memref<1x1x32xf32, #tpu.memory_space<vmem>>, %arg9: memref<1x1x32xf32, #tpu.memory_space<vmem>>, %arg10: memref<1x32x32xbf16, #tpu.memory_space<vmem>>, %arg11: memref<1x1x32xf32, #tpu.memory_space<vmem>>, %arg12: memref<1x1x32xf32, #tpu.memory_space<vmem>>, %arg13: memref<1x1x32xf32, #tpu.memory_space<vmem>>, %arg14: memref<1x8x32xf32, #tpu.memory_space<vmem>>, %arg15: memref<8x32xf32, #tpu.memory_space<vmem>>, %arg16: memref<8x32xf32, #tpu.memory_space<vmem>>) attributes {dimension_semantics = [#tpu.dimension_semantics<parallel>, #tpu.dimension_semantics<arbitrary>], iteration_bounds = array<i64: 2, 2>, scalar_prefetch = 0 : i64, scratch_operands = 2 : i64, tpu.core_type = #tpu.core_type<tc>, window_params = [{transform_indices = @transform_0, window_bounds = array<i64: 1, 8, 32>}, {transform_indices = @transform_1, window_bounds = array<i64: 1, 1, 8>}, {transform_indices = @transform_2, window_bounds = array<i64: 1, 32, 96>}, {transform_indices = @transform_3, window_bounds = array<i64: 1, 1, 96>}, {transform_indices = @transform_4, window_bounds = array<i64: 1, 32, 32>}, {transform_indices = @transform_5, window_bounds = array<i64: 1, 1, 32>}, {transform_indices = @transform_6, window_bounds = array<i64: 1, 1, 32>}, {transform_indices = @transform_7, window_bounds = array<i64: 1, 1, 32>}, {transform_indices = @transform_8, window_bounds = array<i64: 1, 32, 32>}, {transform_indices = @transform_9, window_bounds = array<i64: 1, 1, 32>}, {transform_indices = @transform_10, window_bounds = array<i64: 1, 1, 32>}, {transform_indices = @transform_11, window_bounds = array<i64: 1, 1, 32>}, {transform_indices = @transform_12, window_bounds = array<i64: 1, 8, 32>}]} {
    %c0_i32 = arith.constant 0 : i32
    %0 = arith.cmpi eq, %arg1, %c0_i32 : i32
    %1 = arith.extui %0 : i1 to i32
    %c0_i32_0 = arith.constant 0 : i32
    %2 = arith.cmpi ne, %1, %c0_i32_0 : i32
    scf.if %2 {
      %c0_73 = arith.constant 0 : index
      %c0_74 = arith.constant 0 : index
      %c0_75 = arith.constant 0 : index
      %168 = vector.load %arg2[%c0_73, %c0_74, %c0_75] : memref<1x8x32xf32, #tpu.memory_space<vmem>>, vector<1x8x32xf32>
      %169 = vector.shape_cast %168 : vector<1x8x32xf32> to vector<8x32xf32>
      %c0_76 = arith.constant 0 : index
      %c0_77 = arith.constant 0 : index
      %170 = vector.load %arg15[%c0_76, %c0_77] : memref<8x32xf32, #tpu.memory_space<vmem>>, vector<8x32xf32>
      tpu.vector_store %arg15[%c0_76, %c0_77], %169 {strides = array<i32>} : memref<8x32xf32, #tpu.memory_space<vmem>>, vector<8x32xf32>,
    } else {
    }
    %c0 = arith.constant 0 : index
    %c0_1 = arith.constant 0 : index
    %3 = vector.load %arg15[%c0, %c0_1] : memref<8x32xf32, #tpu.memory_space<vmem>>, vector<8x32xf32>
    %c0_2 = arith.constant 0 : index
    %c0_3 = arith.constant 0 : index
    %c0_4 = arith.constant 0 : index
    %4 = vector.load %arg3[%c0_2, %c0_3, %c0_4] : memref<1x1x8xf32, #tpu.memory_space<vmem>>, vector<1x1x8xf32>
    %5 = vector.shape_cast %4 : vector<1x1x8xf32> to vector<1x8xf32>
    %c0_5 = arith.constant 0 : index
    %c0_6 = arith.constant 0 : index
    %c0_7 = arith.constant 0 : index
    %6 = vector.load %arg4[%c0_5, %c0_6, %c0_7] : memref<1x32x96xbf16, #tpu.memory_space<vmem>>, vector<1x32x96xbf16>
    %7 = vector.shape_cast %6 : vector<1x32x96xbf16> to vector<32x96xbf16>
    %c0_8 = arith.constant 0 : index
    %c0_9 = arith.constant 0 : index
    %c0_10 = arith.constant 0 : index
    %8 = vector.load %arg5[%c0_8, %c0_9, %c0_10] : memref<1x1x96xf32, #tpu.memory_space<vmem>>, vector<1x1x96xf32>
    %9 = vector.shape_cast %8 : vector<1x1x96xf32> to vector<1x96xf32>
    %c0_11 = arith.constant 0 : index
    %c0_12 = arith.constant 0 : index
    %c0_13 = arith.constant 0 : index
    %10 = vector.load %arg6[%c0_11, %c0_12, %c0_13] : memref<1x32x32xbf16, #tpu.memory_space<vmem>>, vector<1x32x32xbf16>
    %11 = vector.shape_cast %10 : vector<1x32x32xbf16> to vector<32x32xbf16>
    %c0_14 = arith.constant 0 : index
    %c0_15 = arith.constant 0 : index
    %c0_16 = arith.constant 0 : index
    %12 = vector.load %arg7[%c0_14, %c0_15, %c0_16] : memref<1x1x32xf32, #tpu.memory_space<vmem>>, vector<1x1x32xf32>
    %13 = vector.shape_cast %12 : vector<1x1x32xf32> to vector<1x32xf32>
    %14 = arith.truncf %3 : vector<8x32xf32> to vector<8x32xbf16>
    %cst = arith.constant dense<0.000000e+00> : vector<8x96xf32>
    %15 = tpu.matmul %14, %7, %cst {dimension_numbers = #tpu.dot_dimension_numbers<[1], [0], [0], [1], [0, 0, 1, 1], [], []>} : vector<8x32xbf16>, vector<32x96xbf16>, vector<8x96xf32> -> vector<8x96xf32>
    %16 = vector.broadcast %9 : vector<1x96xf32> to vector<8x96xf32>
    %17 = arith.addf %15, %16 : vector<8x96xf32>
    %18 = vector.extract_strided_slice %17 {offsets = [0, 0], sizes = [8, 32], strides = [1, 1]} : vector<8x96xf32> to vector<8x32xf32>
    %19 = vector.extract_strided_slice %17 {offsets = [0, 32], sizes = [8, 32], strides = [1, 1]} : vector<8x96xf32> to vector<8x32xf32>
    %20 = vector.extract_strided_slice %17 {offsets = [0, 64], sizes = [8, 32], strides = [1, 1]} : vector<8x96xf32> to vector<8x32xf32>
    %21 = arith.truncf %18 : vector<8x32xf32> to vector<8x32xbf16>
    %22 = tpu.transpose %19, [1, 0] : vector<8x32xf32> -> vector<32x8xf32>
    %23 = arith.truncf %22 : vector<32x8xf32> to vector<32x8xbf16>
    %24 = arith.truncf %20 : vector<8x32xf32> to vector<8x32xbf16>
    %25 = vector.extract_strided_slice %21 {offsets = [0, 0], sizes = [8, 8], strides = [1, 1]} : vector<8x32xbf16> to vector<8x8xbf16>
    %26 = vector.extract_strided_slice %23 {offsets = [0, 0], sizes = [8, 8], strides = [1, 1]} : vector<32x8xbf16> to vector<8x8xbf16>
    %cst_17 = arith.constant dense<0.000000e+00> : vector<8x8xf32>
    %27 = tpu.matmul %25, %26, %cst_17 {dimension_numbers = #tpu.dot_dimension_numbers<[1], [0], [0], [1], [0, 0, 1, 1], [], []>} : vector<8x8xbf16>, vector<8x8xbf16>, vector<8x8xf32> -> vector<8x8xf32>
    %28 = vector.broadcast %5 : vector<1x8xf32> to vector<8x8xf32>
    %29 = arith.addf %27, %28 : vector<8x8xf32>
    %cst_18 = arith.constant dense<0xFF800000> : vector<8xf32>
    %30 = vector.multi_reduction <maximumf>, %29, %cst_18 [1] : vector<8x8xf32> to vector<8xf32>
    %31 = vector.shape_cast %30 : vector<8xf32> to vector<8x1xf32>
    %32 = vector.broadcast %31 : vector<8x1xf32> to vector<8x8xf32>
    %33 = arith.subf %29, %32 : vector<8x8xf32>
    %34 = math.exp %33 : vector<8x8xf32>
    %cst_19 = arith.constant dense<0.000000e+00> : vector<8xf32>
    %35 = vector.multi_reduction <add>, %34, %cst_19 [1] : vector<8x8xf32> to vector<8xf32>
    %36 = vector.shape_cast %35 : vector<8xf32> to vector<8x1xf32>
    %37 = tpu.reciprocal %36 {approx = true} : vector<8x1xf32> -> vector<8x1xf32>
    %38 = vector.broadcast %37 : vector<8x1xf32> to vector<8x8xf32>
    %39 = arith.mulf %34, %38 : vector<8x8xf32>
    %40 = arith.truncf %39 : vector<8x8xf32> to vector<8x8xbf16>
    %41 = vector.extract_strided_slice %24 {offsets = [0, 0], sizes = [8, 8], strides = [1, 1]} : vector<8x32xbf16> to vector<8x8xbf16>
    %cst_20 = arith.constant dense<0.000000e+00> : vector<8x8xf32>
    %42 = tpu.matmul %40, %41, %cst_20 {dimension_numbers = #tpu.dot_dimension_numbers<[1], [0], [0], [1], [0, 0, 1, 1], [], []>} : vector<8x8xbf16>, vector<8x8xbf16>, vector<8x8xf32> -> vector<8x8xf32>
    %c0_21 = arith.constant 0 : index
    %c0_22 = arith.constant 0 : index
    %43 = vector.load %arg16[%c0_21, %c0_22] : memref<8x32xf32, #tpu.memory_space<vmem>>, vector<8x8xf32>
    tpu.vector_store %arg16[%c0_21, %c0_22], %42 {strides = array<i32>} : memref<8x32xf32, #tpu.memory_space<vmem>>, vector<8x8xf32>,
    %44 = vector.extract_strided_slice %21 {offsets = [0, 8], sizes = [8, 8], strides = [1, 1]} : vector<8x32xbf16> to vector<8x8xbf16>
    %45 = vector.extract_strided_slice %23 {offsets = [8, 0], sizes = [8, 8], strides = [1, 1]} : vector<32x8xbf16> to vector<8x8xbf16>
    %cst_23 = arith.constant dense<0.000000e+00> : vector<8x8xf32>
    %46 = tpu.matmul %44, %45, %cst_23 {dimension_numbers = #tpu.dot_dimension_numbers<[1], [0], [0], [1], [0, 0, 1, 1], [], []>} : vector<8x8xbf16>, vector<8x8xbf16>, vector<8x8xf32> -> vector<8x8xf32>
    %47 = vector.broadcast %5 : vector<1x8xf32> to vector<8x8xf32>
    %48 = arith.addf %46, %47 : vector<8x8xf32>
    %cst_24 = arith.constant dense<0xFF800000> : vector<8xf32>
    %49 = vector.multi_reduction <maximumf>, %48, %cst_24 [1] : vector<8x8xf32> to vector<8xf32>
    %50 = vector.shape_cast %49 : vector<8xf32> to vector<8x1xf32>
    %51 = vector.broadcast %50 : vector<8x1xf32> to vector<8x8xf32>
    %52 = arith.subf %48, %51 : vector<8x8xf32>
    %53 = math.exp %52 : vector<8x8xf32>
    %cst_25 = arith.constant dense<0.000000e+00> : vector<8xf32>
    %54 = vector.multi_reduction <add>, %53, %cst_25 [1] : vector<8x8xf32> to vector<8xf32>
    %55 = vector.shape_cast %54 : vector<8xf32> to vector<8x1xf32>
    %56 = tpu.reciprocal %55 {approx = true} : vector<8x1xf32> -> vector<8x1xf32>
    %57 = vector.broadcast %56 : vector<8x1xf32> to vector<8x8xf32>
    %58 = arith.mulf %53, %57 : vector<8x8xf32>
    %59 = arith.truncf %58 : vector<8x8xf32> to vector<8x8xbf16>
    %60 = vector.extract_strided_slice %24 {offsets = [0, 8], sizes = [8, 8], strides = [1, 1]} : vector<8x32xbf16> to vector<8x8xbf16>
    %cst_26 = arith.constant dense<0.000000e+00> : vector<8x8xf32>
    %61 = tpu.matmul %59, %60, %cst_26 {dimension_numbers = #tpu.dot_dimension_numbers<[1], [0], [0], [1], [0, 0, 1, 1], [], []>} : vector<8x8xbf16>, vector<8x8xbf16>, vector<8x8xf32> -> vector<8x8xf32>
    %c0_27 = arith.constant 0 : index
    %c8 = arith.constant 8 : index
    %62 = vector.load %arg16[%c0_27, %c8] : memref<8x32xf32, #tpu.memory_space<vmem>>, vector<8x8xf32>
    tpu.vector_store %arg16[%c0_27, %c8], %61 {strides = array<i32>} : memref<8x32xf32, #tpu.memory_space<vmem>>, vector<8x8xf32>,
    %63 = vector.extract_strided_slice %21 {offsets = [0, 16], sizes = [8, 8], strides = [1, 1]} : vector<8x32xbf16> to vector<8x8xbf16>
    %64 = vector.extract_strided_slice %23 {offsets = [16, 0], sizes = [8, 8], strides = [1, 1]} : vector<32x8xbf16> to vector<8x8xbf16>
    %cst_28 = arith.constant dense<0.000000e+00> : vector<8x8xf32>
    %65 = tpu.matmul %63, %64, %cst_28 {dimension_numbers = #tpu.dot_dimension_numbers<[1], [0], [0], [1], [0, 0, 1, 1], [], []>} : vector<8x8xbf16>, vector<8x8xbf16>, vector<8x8xf32> -> vector<8x8xf32>
    %66 = vector.broadcast %5 : vector<1x8xf32> to vector<8x8xf32>
    %67 = arith.addf %65, %66 : vector<8x8xf32>
    %cst_29 = arith.constant dense<0xFF800000> : vector<8xf32>
    %68 = vector.multi_reduction <maximumf>, %67, %cst_29 [1] : vector<8x8xf32> to vector<8xf32>
    %69 = vector.shape_cast %68 : vector<8xf32> to vector<8x1xf32>
    %70 = vector.broadcast %69 : vector<8x1xf32> to vector<8x8xf32>
    %71 = arith.subf %67, %70 : vector<8x8xf32>
    %72 = math.exp %71 : vector<8x8xf32>
    %cst_30 = arith.constant dense<0.000000e+00> : vector<8xf32>
    %73 = vector.multi_reduction <add>, %72, %cst_30 [1] : vector<8x8xf32> to vector<8xf32>
    %74 = vector.shape_cast %73 : vector<8xf32> to vector<8x1xf32>
    %75 = tpu.reciprocal %74 {approx = true} : vector<8x1xf32> -> vector<8x1xf32>
    %76 = vector.broadcast %75 : vector<8x1xf32> to vector<8x8xf32>
    %77 = arith.mulf %72, %76 : vector<8x8xf32>
    %78 = arith.truncf %77 : vector<8x8xf32> to vector<8x8xbf16>
    %79 = vector.extract_strided_slice %24 {offsets = [0, 16], sizes = [8, 8], strides = [1, 1]} : vector<8x32xbf16> to vector<8x8xbf16>
    %cst_31 = arith.constant dense<0.000000e+00> : vector<8x8xf32>
    %80 = tpu.matmul %78, %79, %cst_31 {dimension_numbers = #tpu.dot_dimension_numbers<[1], [0], [0], [1], [0, 0, 1, 1], [], []>} : vector<8x8xbf16>, vector<8x8xbf16>, vector<8x8xf32> -> vector<8x8xf32>
    %c0_32 = arith.constant 0 : index
    %c16 = arith.constant 16 : index
    %81 = vector.load %arg16[%c0_32, %c16] : memref<8x32xf32, #tpu.memory_space<vmem>>, vector<8x8xf32>
    tpu.vector_store %arg16[%c0_32, %c16], %80 {strides = array<i32>} : memref<8x32xf32, #tpu.memory_space<vmem>>, vector<8x8xf32>,
    %82 = vector.extract_strided_slice %21 {offsets = [0, 24], sizes = [8, 8], strides = [1, 1]} : vector<8x32xbf16> to vector<8x8xbf16>
    %83 = vector.extract_strided_slice %23 {offsets = [24, 0], sizes = [8, 8], strides = [1, 1]} : vector<32x8xbf16> to vector<8x8xbf16>
    %cst_33 = arith.constant dense<0.000000e+00> : vector<8x8xf32>
    %84 = tpu.matmul %82, %83, %cst_33 {dimension_numbers = #tpu.dot_dimension_numbers<[1], [0], [0], [1], [0, 0, 1, 1], [], []>} : vector<8x8xbf16>, vector<8x8xbf16>, vector<8x8xf32> -> vector<8x8xf32>
    %85 = vector.broadcast %5 : vector<1x8xf32> to vector<8x8xf32>
    %86 = arith.addf %84, %85 : vector<8x8xf32>
    %cst_34 = arith.constant dense<0xFF800000> : vector<8xf32>
    %87 = vector.multi_reduction <maximumf>, %86, %cst_34 [1] : vector<8x8xf32> to vector<8xf32>
    %88 = vector.shape_cast %87 : vector<8xf32> to vector<8x1xf32>
    %89 = vector.broadcast %88 : vector<8x1xf32> to vector<8x8xf32>
    %90 = arith.subf %86, %89 : vector<8x8xf32>
    %91 = math.exp %90 : vector<8x8xf32>
    %cst_35 = arith.constant dense<0.000000e+00> : vector<8xf32>
    %92 = vector.multi_reduction <add>, %91, %cst_35 [1] : vector<8x8xf32> to vector<8xf32>
    %93 = vector.shape_cast %92 : vector<8xf32> to vector<8x1xf32>
    %94 = tpu.reciprocal %93 {approx = true} : vector<8x1xf32> -> vector<8x1xf32>
    %95 = vector.broadcast %94 : vector<8x1xf32> to vector<8x8xf32>
    %96 = arith.mulf %91, %95 : vector<8x8xf32>
    %97 = arith.truncf %96 : vector<8x8xf32> to vector<8x8xbf16>
    %98 = vector.extract_strided_slice %24 {offsets = [0, 24], sizes = [8, 8], strides = [1, 1]} : vector<8x32xbf16> to vector<8x8xbf16>
    %cst_36 = arith.constant dense<0.000000e+00> : vector<8x8xf32>
    %99 = tpu.matmul %97, %98, %cst_36 {dimension_numbers = #tpu.dot_dimension_numbers<[1], [0], [0], [1], [0, 0, 1, 1], [], []>} : vector<8x8xbf16>, vector<8x8xbf16>, vector<8x8xf32> -> vector<8x8xf32>
    %c0_37 = arith.constant 0 : index
    %c24 = arith.constant 24 : index
    %100 = vector.load %arg16[%c0_37, %c24] : memref<8x32xf32, #tpu.memory_space<vmem>>, vector<8x8xf32>
    tpu.vector_store %arg16[%c0_37, %c24], %99 {strides = array<i32>} : memref<8x32xf32, #tpu.memory_space<vmem>>, vector<8x8xf32>,
    %c0_38 = arith.constant 0 : index
    %c0_39 = arith.constant 0 : index
    %101 = vector.load %arg16[%c0_38, %c0_39] : memref<8x32xf32, #tpu.memory_space<vmem>>, vector<8x32xf32>
    %102 = arith.truncf %101 : vector<8x32xf32> to vector<8x32xbf16>
    %cst_40 = arith.constant dense<0.000000e+00> : vector<8x32xf32>
    %103 = tpu.matmul %102, %11, %cst_40 {dimension_numbers = #tpu.dot_dimension_numbers<[1], [0], [0], [1], [0, 0, 1, 1], [], []>} : vector<8x32xbf16>, vector<32x32xbf16>, vector<8x32xf32> -> vector<8x32xf32>
    %104 = vector.broadcast %13 : vector<1x32xf32> to vector<8x32xf32>
    %105 = arith.addf %103, %104 : vector<8x32xf32>
    %c0_41 = arith.constant 0 : index
    %c0_42 = arith.constant 0 : index
    %c0_43 = arith.constant 0 : index
    %106 = vector.load %arg8[%c0_41, %c0_42, %c0_43] : memref<1x1x32xf32, #tpu.memory_space<vmem>>, vector<1x1x32xf32>
    %107 = vector.shape_cast %106 : vector<1x1x32xf32> to vector<1x32xf32>
    %c0_44 = arith.constant 0 : index
    %c0_45 = arith.constant 0 : index
    %c0_46 = arith.constant 0 : index
    %108 = vector.load %arg9[%c0_44, %c0_45, %c0_46] : memref<1x1x32xf32, #tpu.memory_space<vmem>>, vector<1x1x32xf32>
    %109 = vector.shape_cast %108 : vector<1x1x32xf32> to vector<1x32xf32>
    %110 = arith.addf %3, %105 : vector<8x32xf32>
    %cst_47 = arith.constant dense<0.000000e+00> : vector<8xf32>
    %111 = vector.multi_reduction <add>, %110, %cst_47 [1] : vector<8x32xf32> to vector<8xf32>
    %112 = vector.shape_cast %111 : vector<8xf32> to vector<8x1xf32>
    %cst_48 = arith.constant 3.200000e+01 : f32
    %113 = vector.broadcast %cst_48 : f32 to vector<8x1xf32>
    %114 = arith.divf %112, %113 : vector<8x1xf32>
    %115 = vector.broadcast %114 : vector<8x1xf32> to vector<8x32xf32>
    %116 = arith.subf %110, %115 : vector<8x32xf32>
    %117 = arith.mulf %116, %116 : vector<8x32xf32>
    %cst_49 = arith.constant dense<0.000000e+00> : vector<8xf32>
    %118 = vector.multi_reduction <add>, %117, %cst_49 [1] : vector<8x32xf32> to vector<8xf32>
    %119 = vector.shape_cast %118 : vector<8xf32> to vector<8x1xf32>
    %cst_50 = arith.constant 3.200000e+01 : f32
    %120 = vector.broadcast %cst_50 : f32 to vector<8x1xf32>
    %121 = arith.divf %119, %120 : vector<8x1xf32>
    %cst_51 = arith.constant 9.99999974E-6 : f32
    %122 = vector.broadcast %cst_51 : f32 to vector<8x1xf32>
    %123 = arith.addf %121, %122 : vector<8x1xf32>
    %124 = math.rsqrt %123 : vector<8x1xf32>
    %125 = vector.broadcast %124 : vector<8x1xf32> to vector<8x32xf32>
    %126 = arith.mulf %116, %125 : vector<8x32xf32>
    %127 = vector.broadcast %107 : vector<1x32xf32> to vector<8x32xf32>
    %128 = arith.mulf %126, %127 : vector<8x32xf32>
    %129 = vector.broadcast %109 : vector<1x32xf32> to vector<8x32xf32>
    %130 = arith.addf %128, %129 : vector<8x32xf32>
    %c0_52 = arith.constant 0 : index
    %c0_53 = arith.constant 0 : index
    %c0_54 = arith.constant 0 : index
    %131 = vector.load %arg10[%c0_52, %c0_53, %c0_54] : memref<1x32x32xbf16, #tpu.memory_space<vmem>>, vector<1x32x32xbf16>
    %132 = vector.shape_cast %131 : vector<1x32x32xbf16> to vector<32x32xbf16>
    %133 = arith.truncf %130 : vector<8x32xf32> to vector<8x32xbf16>
    %cst_55 = arith.constant dense<0.000000e+00> : vector<8x32xf32>
    %134 = tpu.matmul %133, %132, %cst_55 {dimension_numbers = #tpu.dot_dimension_numbers<[1], [0], [0], [1], [0, 0, 1, 1], [], []>} : vector<8x32xbf16>, vector<32x32xbf16>, vector<8x32xf32> -> vector<8x32xf32>
    %c0_56 = arith.constant 0 : index
    %c0_57 = arith.constant 0 : index
    %c0_58 = arith.constant 0 : index
    %135 = vector.load %arg11[%c0_56, %c0_57, %c0_58] : memref<1x1x32xf32, #tpu.memory_space<vmem>>, vector<1x1x32xf32>
    %136 = vector.shape_cast %135 : vector<1x1x32xf32> to vector<1x32xf32>
    %137 = vector.broadcast %136 : vector<1x32xf32> to vector<8x32xf32>
    %138 = arith.addf %134, %137 : vector<8x32xf32>
    %c0_59 = arith.constant 0 : index
    %c0_60 = arith.constant 0 : index
    %c0_61 = arith.constant 0 : index
    %139 = vector.load %arg12[%c0_59, %c0_60, %c0_61] : memref<1x1x32xf32, #tpu.memory_space<vmem>>, vector<1x1x32xf32>
    %140 = vector.shape_cast %139 : vector<1x1x32xf32> to vector<1x32xf32>
    %c0_62 = arith.constant 0 : index
    %c0_63 = arith.constant 0 : index
    %c0_64 = arith.constant 0 : index
    %141 = vector.load %arg13[%c0_62, %c0_63, %c0_64] : memref<1x1x32xf32, #tpu.memory_space<vmem>>, vector<1x1x32xf32>
    %142 = vector.shape_cast %141 : vector<1x1x32xf32> to vector<1x32xf32>
    %143 = arith.addf %130, %138 : vector<8x32xf32>
    %cst_65 = arith.constant dense<0.000000e+00> : vector<8xf32>
    %144 = vector.multi_reduction <add>, %143, %cst_65 [1] : vector<8x32xf32> to vector<8xf32>
    %145 = vector.shape_cast %144 : vector<8xf32> to vector<8x1xf32>
    %cst_66 = arith.constant 3.200000e+01 : f32
    %146 = vector.broadcast %cst_66 : f32 to vector<8x1xf32>
    %147 = arith.divf %145, %146 : vector<8x1xf32>
    %148 = vector.broadcast %147 : vector<8x1xf32> to vector<8x32xf32>
    %149 = arith.subf %143, %148 : vector<8x32xf32>
    %150 = arith.mulf %149, %149 : vector<8x32xf32>
    %cst_67 = arith.constant dense<0.000000e+00> : vector<8xf32>
    %151 = vector.multi_reduction <add>, %150, %cst_67 [1] : vector<8x32xf32> to vector<8xf32>
    %152 = vector.shape_cast %151 : vector<8xf32> to vector<8x1xf32>
    %cst_68 = arith.constant 3.200000e+01 : f32
    %153 = vector.broadcast %cst_68 : f32 to vector<8x1xf32>
    %154 = arith.divf %152, %153 : vector<8x1xf32>
    %cst_69 = arith.constant 9.99999974E-6 : f32
    %155 = vector.broadcast %cst_69 : f32 to vector<8x1xf32>
    %156 = arith.addf %154, %155 : vector<8x1xf32>
    %157 = math.rsqrt %156 : vector<8x1xf32>
    %158 = vector.broadcast %157 : vector<8x1xf32> to vector<8x32xf32>
    %159 = arith.mulf %149, %158 : vector<8x32xf32>
    %160 = vector.broadcast %140 : vector<1x32xf32> to vector<8x32xf32>
    %161 = arith.mulf %159, %160 : vector<8x32xf32>
    %162 = vector.broadcast %142 : vector<1x32xf32> to vector<8x32xf32>
    %163 = arith.addf %161, %162 : vector<8x32xf32>
    %c0_70 = arith.constant 0 : index
    %c0_71 = arith.constant 0 : index
    %164 = vector.load %arg15[%c0_70, %c0_71] : memref<8x32xf32, #tpu.memory_space<vmem>>, vector<8x32xf32>
    tpu.vector_store %arg15[%c0_70, %c0_71], %163 {strides = array<i32>} : memref<8x32xf32, #tpu.memory_space<vmem>>, vector<8x32xf32>,
    %c1_i32 = arith.constant 1 : i32
    %165 = arith.cmpi eq, %arg1, %c1_i32 : i32
    %166 = arith.extui %165 : i1 to i32
    %c0_i32_72 = arith.constant 0 : i32
    %167 = arith.cmpi ne, %166, %c0_i32_72 : i32
    scf.if %167 {
      %c0_73 = arith.constant 0 : index
      %c0_74 = arith.constant 0 : index
      %c0_75 = arith.constant 0 : index
      %168 = vector.load %arg14[%c0_73, %c0_74, %c0_75] : memref<1x8x32xf32, #tpu.memory_space<vmem>>, vector<1x8x32xf32>
      %169 = vector.shape_cast %168 : vector<1x8x32xf32> to vector<8x32xf32>
      %170 = vector.shape_cast %163 : vector<8x32xf32> to vector<1x8x32xf32>
      tpu.vector_store %arg14[%c0_73, %c0_74, %c0_75], %170 {strides = array<i32>} : memref<1x8x32xf32, #tpu.memory_space<vmem>>, vector<1x8x32xf32>,
    } else {
    }
    return
  }
  func.func @transform_0(%arg0: i32, %arg1: i32) -> (i32, i32, i32) {
    %c0_i32 = arith.constant 0 : i32
    %c0_i32_0 = arith.constant 0 : i32
    %c0_i32_1 = arith.constant 0 : i32
    return %arg0, %c0_i32, %c0_i32_0 : i32, i32, i32
  }
  func.func @transform_1(%arg0: i32, %arg1: i32) -> (i32, i32, i32) {
    %c0_i32 = arith.constant 0 : i32
    %c0_i32_0 = arith.constant 0 : i32
    %c0_i32_1 = arith.constant 0 : i32
    return %arg0, %c0_i32, %c0_i32_0 : i32, i32, i32
  }
  func.func @transform_2(%arg0: i32, %arg1: i32) -> (i32, i32, i32) {
    %c0_i32 = arith.constant 0 : i32
    %c0_i32_0 = arith.constant 0 : i32
    %c0_i32_1 = arith.constant 0 : i32
    return %arg1, %c0_i32, %c0_i32_0 : i32, i32, i32
  }
  func.func @transform_3(%arg0: i32, %arg1: i32) -> (i32, i32, i32) {
    %c0_i32 = arith.constant 0 : i32
    %c0_i32_0 = arith.constant 0 : i32
    %c0_i32_1 = arith.constant 0 : i32
    return %arg1, %c0_i32, %c0_i32_0 : i32, i32, i32
  }
  func.func @transform_4(%arg0: i32, %arg1: i32) -> (i32, i32, i32) {
    %c0_i32 = arith.constant 0 : i32
    %c0_i32_0 = arith.constant 0 : i32
    %c0_i32_1 = arith.constant 0 : i32
    return %arg1, %c0_i32, %c0_i32_0 : i32, i32, i32
  }
  func.func @transform_5(%arg0: i32, %arg1: i32) -> (i32, i32, i32) {
    %c0_i32 = arith.constant 0 : i32
    %c0_i32_0 = arith.constant 0 : i32
    %c0_i32_1 = arith.constant 0 : i32
    return %arg1, %c0_i32, %c0_i32_0 : i32, i32, i32
  }
  func.func @transform_6(%arg0: i32, %arg1: i32) -> (i32, i32, i32) {
    %c0_i32 = arith.constant 0 : i32
    %c0_i32_0 = arith.constant 0 : i32
    %c0_i32_1 = arith.constant 0 : i32
    return %arg1, %c0_i32, %c0_i32_0 : i32, i32, i32
  }
  func.func @transform_7(%arg0: i32, %arg1: i32) -> (i32, i32, i32) {
    %c0_i32 = arith.constant 0 : i32
    %c0_i32_0 = arith.constant 0 : i32
    %c0_i32_1 = arith.constant 0 : i32
    return %arg1, %c0_i32, %c0_i32_0 : i32, i32, i32
  }
  func.func @transform_8(%arg0: i32, %arg1: i32) -> (i32, i32, i32) {
    %c0_i32 = arith.constant 0 : i32
    %c0_i32_0 = arith.constant 0 : i32
    %c0_i32_1 = arith.constant 0 : i32
    return %arg1, %c0_i32, %c0_i32_0 : i32, i32, i32
  }
  func.func @transform_9(%arg0: i32, %arg1: i32) -> (i32, i32, i32) {
    %c0_i32 = arith.constant 0 : i32
    %c0_i32_0 = arith.constant 0 : i32
    %c0_i32_1 = arith.constant 0 : i32
    return %arg1, %c0_i32, %c0_i32_0 : i32, i32, i32
  }
  func.func @transform_10(%arg0: i32, %arg1: i32) -> (i32, i32, i32) {
    %c0_i32 = arith.constant 0 : i32
    %c0_i32_0 = arith.constant 0 : i32
    %c0_i32_1 = arith.constant 0 : i32
    return %arg1, %c0_i32, %c0_i32_0 : i32, i32, i32
  }
  func.func @transform_11(%arg0: i32, %arg1: i32) -> (i32, i32, i32) {
    %c0_i32 = arith.constant 0 : i32
    %c0_i32_0 = arith.constant 0 : i32
    %c0_i32_1 = arith.constant 0 : i32
    return %arg1, %c0_i32, %c0_i32_0 : i32, i32, i32
  }
  func.func @transform_12(%arg0: i32, %arg1: i32) -> (i32, i32, i32) {
    %c0_i32 = arith.constant 0 : i32
    %c0_i32_0 = arith.constant 0 : i32
    %c0_i32_1 = arith.constant 0 : i32
    return %arg0, %c0_i32, %c0_i32_0 : i32, i32, i32
  }
}

</mosaic_0001>

<llo_original>
// kernel: transformer_forward.5
$region0: #{transformer_forward.5}
  #allocation0 [shape = 'u32[]', space=smem, size = 0x4, offset = 0x4, fixed_abs, tag = 'smem constant byte address 0x4 - core index']
  #allocation1 [shape = 'u32[72,128]{1,0:T(1,128)}', space=vmem, size = 0x9000, scoped, tag = 'internal scratch']
  %s0 = inlined_call_operand.vmem [shape: f32[16,32], index: 0, kind: input, shape index: {}]
  %s1 = inlined_call_operand.vmem [shape: bf16[32,128], index: 1, kind: input, shape index: {}]
  %s2 = inlined_call_operand.vmem [shape: f32[1,128], index: 2, kind: input, shape index: {}]
  %s3 = inlined_call_operand.vmem [shape: f32[16,128], index: 3, kind: output, shape index: {}]
  %s4 = sld [smem:[#allocation0]]
  $region22: #{transformer_forward.5} parent=0
    _
  %s6 = ssub.s32 1, %s4
  %s7 = scalar_select 0, %s6, %s4
  // Predicated region
  $region2: #{transformer_forward.5} parent=0 // pred_check
    _
  $region3: #{transformer_forward.5} parent=0 // pred_check_branch
    %9 = sbr.rel (0) target = $region5
  $region4: #{transformer_forward.5} parent=0 // pred_region
    _
  $region5: #{transformer_forward.5} parent=0 // pred_fallthru
    _
  // Predicated region
  $region6: #{transformer_forward.5} parent=0 // pred_check
    _
  $region7: #{transformer_forward.5} parent=0 // pred_check_branch
    %11 = sbr.rel (0) target = $region9
  $region8: #{transformer_forward.5} parent=0 // pred_region
    _
  $region9: #{transformer_forward.5} parent=0 // pred_fallthru
    _
  // Predicated region
  $region10: #{transformer_forward.5} parent=0 // pred_check
    _
  $region11: #{transformer_forward.5} parent=0 // pred_check_branch
    %13 = sbr.rel (0) target = $region13
  $region12: #{transformer_forward.5} parent=0 // pred_region
    _
  $region13: #{transformer_forward.5} parent=0 // pred_fallthru
    _
  %v15 = vld [vmem:[%s0] sm:$0xff]
  %v16 = vld [vmem:[%s0 + $0x8] sm:$0xff]
  %v17 = vld [vmem:[%s1] sm:$0xf]
  %v18 = vld [vmem:[%s1 + $0x4] sm:$0xf]
  %v19 = vld [vmem:[%s1 + $0x8] sm:$0xf]
  %v20 = vld [vmem:[%s1 + $0xc] sm:$0xf]
  %v21 = vpack.c.bf16 %v16, %v15
  %v22 = vld [vmem:[%s2] sm:$0x1]
  %v24 = vperm.slane %v22, 0
  %v30 = vunpack.c.l.b16 %v17
  %v31 = vunpack.c.l.b16 %v18
  %v32 = vunpack.c.l.b16 %v19
  %v33 = vunpack.c.l.b16 %v20
  %v34 = vpack.c.b16 %v31, %v30
  %v35 = vpack.c.b16 %v33, %v32
  %vm38 = vcmask 261120
  %v40 = vsel %vm38, %v21, 0
  %42 = vmatpush.bf16.msra.mxu0 0
  %43 = vmatpush.bf16.msra.mxu0 0
  %44 = vmatpush.bf16.msra.mxu0 0
  %45 = vmatpush.bf16.msra.mxu0 0
  %46 = vmatpush.bf16.msra.mxu0 0
  %47 = vmatpush.bf16.msra.mxu0 0
  %48 = vmatpush.bf16.msra.mxu0 %v35
  %49 = vmatpush.bf16.msra.mxu0 %v34
  %50 = vmatmul.bf16.gmra.mxu0 %v40
  %v51 = vpop.f32.mrf.mxu0
  %v52 = vadd.f32 %v24, %v51
  %v53 = vpop.f32.mrf.mxu0
  %v54 = vadd.f32 %v24, %v53
  %55 = vdwg.mxu0
  %56 = vst [vmem:[%s3] sm:$0xff] %v52
  %57 = vst [vmem:[%s3 + $0x8] sm:$0xff] %v54
  // Predicated region
  $region14: #{transformer_forward.5} parent=0 // pred_check
    _
  $region15: #{transformer_forward.5} parent=0 // pred_check_branch
    %59 = sbr.rel (0) target = $region17
  $region16: #{transformer_forward.5} parent=0 // pred_region
    _
  $region17: #{transformer_forward.5} parent=0 // pred_fallthru
    _
  // Predicated region
  $region18: #{transformer_forward.5} parent=0 // pred_check
    _
  $region19: #{transformer_forward.5} parent=0 // pred_check_branch
    %61 = sbr.rel (0) target = $region21
  $region20: #{transformer_forward.5} parent=0 // pred_region
    _
  $region21: #{transformer_forward.5} parent=0 // pred_fallthru
    _

// kernel: transformer_forward.3
$region0: #{transformer_forward.3}
  #allocation0 [shape = 'u32[]', space=smem, size = 0x4, offset = 0x4, fixed_abs, tag = 'smem constant byte address 0x4 - core index']
  #allocation1 [shape = 'u32[72,128]{1,0:T(1,128)}', space=vmem, size = 0x9000, scoped, tag = 'internal scratch']
  #allocation2 [shape = 'f32[8,32]{1,0:T(8,128)}', space=vmem, size = 0x1000, scoped, tag = 'scratch operand']
  #allocation3 [shape = 'f32[8,32]{1,0:T(8,128)}', space=vmem, size = 0x1000, scoped, tag = 'scratch operand']
  %s0 = inlined_call_operand.vmem [shape: f32[2,8,32], index: 0, kind: input, shape index: {}]
  %s1 = inlined_call_operand.vmem [shape: f32[2,1,8], index: 1, kind: input, shape index: {}]
  %s2 = inlined_call_operand.vmem [shape: bf16[2,32,96], index: 2, kind: input, shape index: {}]
  %s3 = inlined_call_operand.vmem [shape: f32[2,1,96], index: 3, kind: input, shape index: {}]
  %s4 = inlined_call_operand.vmem [shape: bf16[2,32,32], index: 4, kind: input, shape index: {}]
  %s5 = inlined_call_operand.vmem [shape: f32[2,1,32], index: 5, kind: input, shape index: {}]
  %s6 = inlined_call_operand.vmem [shape: f32[2,1,32], index: 6, kind: input, shape index: {}]
  %s7 = inlined_call_operand.vmem [shape: f32[2,1,32], index: 7, kind: input, shape index: {}]
  %s8 = inlined_call_operand.vmem [shape: bf16[2,32,32], index: 8, kind: input, shape index: {}]
  %s9 = inlined_call_operand.vmem [shape: f32[2,1,32], index: 9, kind: input, shape index: {}]
  %s10 = inlined_call_operand.vmem [shape: f32[2,1,32], index: 10, kind: input, shape index: {}]
  %s11 = inlined_call_operand.vmem [shape: f32[2,1,32], index: 11, kind: input, shape index: {}]
  %s12 = inlined_call_operand.vmem [shape: f32[2,8,32], index: 12, kind: output, shape index: {}]
  %s13 = sld [smem:[#allocation0]]
  $region89: #{transformer_forward.3} parent=0
    _
  %s15 = ssub.s32 1, %s13
  %s16 = scalar_select 0, %s15, %s13
  loop: start=0, step=1, limit=6
  $region2: #{transformer_forward.3} parent=0 // loop_pre_header
    _
  $region3: #{transformer_forward.3} parent=0 // loop_header
    %s18 = sphi 0, %s22
    %p19 = scmp.ge.s32.totalorder %s18, 6
    %s25 = sphi 0, %s37
    %s26 = sphi 0, %s33
    %s27 = sphi 0, %s25
    %s28 = sphi 0, %s26
    %s29 = sphi 0, %s27
    %s30 = sphi 0, %s28
    %s40 = sphi 0, %s42
    %s43 = sphi 0, %s40
    %s44 = sphi 0, %s43
    %s60 = sphi 0, %s44
    %s66 = sphi 0, %s68
    %s69 = sphi 0, %s66
    %s70 = sphi 0, %s69
    %s86 = sphi 0, %s70
    %s92 = sphi 0, %s94
    %s95 = sphi 0, %s92
    %s96 = sphi 0, %s95
    %s112 = sphi 0, %s96
    %s118 = sphi 0, %s120
    %s121 = sphi 0, %s118
    %s122 = sphi 0, %s121
    %s138 = sphi 0, %s122
    %s144 = sphi 0, %s146
    %s147 = sphi 0, %s144
    %s148 = sphi 0, %s147
    %s164 = sphi 0, %s148
    %s170 = sphi 0, %s172
    %s173 = sphi 0, %s170
    %s174 = sphi 0, %s173
    %s190 = sphi 0, %s174
    %s196 = sphi 0, %s198
    %s199 = sphi 0, %s196
    %s200 = sphi 0, %s199
    %s216 = sphi 0, %s200
    %s222 = sphi 0, %s224
    %s225 = sphi 0, %s222
    %s226 = sphi 0, %s225
    %s242 = sphi 0, %s226
    %s248 = sphi 0, %s250
    %s251 = sphi 0, %s248
    %s252 = sphi 0, %s251
    %s268 = sphi 0, %s252
    %s274 = sphi 0, %s276
    %s277 = sphi 0, %s274
    %s278 = sphi 0, %s277
    %s294 = sphi 0, %s278
    %s300 = sphi 0, %s302
    %s303 = sphi 0, %s300
    %s304 = sphi 0, %s303
    %s320 = sphi 0, %s304
    %s326 = sphi 0, %s328
    %s329 = sphi 0, %s326
    %s330 = sphi 0, %s329
    %s346 = sphi 0, %s330
    %s352 = sphi 0, %s354
    %s355 = sphi 0, %s352
    %s356 = sphi 0, %s355
    %s372 = sphi 0, %s356
  $region4: #{transformer_forward.3} parent=0 // loop_header_branch
    %21 = sbr.rel (%p19) target = $region8
  $region5: #{transformer_forward.3} parent=0 // loop_body
    %s23 = ssub.s32 %s18, 1
    %s24 = ssub.s32 %s18, 2
    %s31 = sadd.s32 1, %s26
    %p32 = scmp.ge.s32.totalorder %s31, 2
    %s33 = scalar_select %p32, 0, %s31
    %s34 = sadd.s32 1, %s25
    %s35 = scalar_select %p32, %s34, %s25
    %p36 = scmp.ge.s32.totalorder %s35, 2
    %s37 = scalar_select %p36, 0, %s35
    %s38 = ssub.s32 %s25, %s37
    %p39 = scmp.eq.s32.totalorder %s38, 0
    %s41 = sadd.s32 %s40, 1
    %s42 = scalar_select %p39, %s40, %s41
    %p45 = pneg %p39
    %p46 = scmp.eq.s32.totalorder %s18, 3
    %p47 = por %p45, %p46
    %p48 = scmp.ne.s32.totalorder %s40, %s43
    %p49 = scmp.eq.s32.totalorder %s18, 0
    %p50 = por %p48, %p49
    %p51 = scmp.ne.s32.totalorder %s40, %s43
    %p52 = scmp.eq.s32.totalorder %s23, 3
    %p53 = por %p51, %p52
    %p54 = scmp.ne.s32.totalorder %s43, %s44
    %p55 = scmp.eq.s32.totalorder %s23, 0
    %p56 = por %p54, %p55
    %p57 = scmp.ne.s32.totalorder %s43, %s44
    %p58 = scmp.eq.s32.totalorder %s24, 3
    %p59 = por %p57, %p58
    %p61 = scmp.ne.s32.totalorder %s44, %s60
    %p62 = scmp.eq.s32.totalorder %s24, 0
    %p63 = por %p61, %p62
    %s64 = ssub.s32 %s25, %s37
    %p65 = scmp.eq.s32.totalorder %s64, 0
    %s67 = sadd.s32 %s66, 1
    %s68 = scalar_select %p65, %s66, %s67
    %p71 = pneg %p65
    %p72 = scmp.eq.s32.totalorder %s18, 3
    %p73 = por %p71, %p72
    %p74 = scmp.ne.s32.totalorder %s66, %s69
    %p75 = scmp.eq.s32.totalorder %s18, 0
    %p76 = por %p74, %p75
    %p77 = scmp.ne.s32.totalorder %s66, %s69
    %p78 = scmp.eq.s32.totalorder %s23, 3
    %p79 = por %p77, %p78
    %p80 = scmp.ne.s32.totalorder %s69, %s70
    %p81 = scmp.eq.s32.totalorder %s23, 0
    %p82 = por %p80, %p81
    %p83 = scmp.ne.s32.totalorder %s69, %s70
    %p84 = scmp.eq.s32.totalorder %s24, 3
    %p85 = por %p83, %p84
    %p87 = scmp.ne.s32.totalorder %s70, %s86
    %p88 = scmp.eq.s32.totalorder %s24, 0
    %p89 = por %p87, %p88
    %s90 = ssub.s32 %s26, %s33
    %p91 = scmp.eq.s32.totalorder %s90, 0
    %s93 = sadd.s32 %s92, 1
    %s94 = scalar_select %p91, %s92, %s93
    %p97 = pneg %p91
    %p98 = scmp.eq.s32.totalorder %s18, 3
    %p99 = por %p97, %p98
    %p100 = scmp.ne.s32.totalorder %s92, %s95
    %p101 = scmp.eq.s32.totalorder %s18, 0
    %p102 = por %p100, %p101
    %p103 = scmp.ne.s32.totalorder %s92, %s95
    %p104 = scmp.eq.s32.totalorder %s23, 3
    %p105 = por %p103, %p104
    %p106 = scmp.ne.s32.totalorder %s95, %s96
    %p107 = scmp.eq.s32.totalorder %s23, 0
    %p108 = por %p106, %p107
    %p109 = scmp.ne.s32.totalorder %s95, %s96
    %p110 = scmp.eq.s32.totalorder %s24, 3
    %p111 = por %p109, %p110
    %p113 = scmp.ne.s32.totalorder %s96, %s112
    %p114 = scmp.eq.s32.totalorder %s24, 0
    %p115 = por %p113, %p114
    %s116 = ssub.s32 %s26, %s33
    %p117 = scmp.eq.s32.totalorder %s116, 0
    %s119 = sadd.s32 %s118, 1
    %s120 = scalar_select %p117, %s118, %s119
    %p123 = pneg %p117
    %p124 = scmp.eq.s32.totalorder %s18, 3
    %p125 = por %p123, %p124
    %p126 = scmp.ne.s32.totalorder %s118, %s121
    %p127 = scmp.eq.s32.totalorder %s18, 0
    %p128 = por %p126, %p127
    %p129 = scmp.ne.s32.totalorder %s118, %s121
    %p130 = scmp.eq.s32.totalorder %s23, 3
    %p131 = por %p129, %p130
    %p132 = scmp.ne.s32.totalorder %s121, %s122
    %p133 = scmp.eq.s32.totalorder %s23, 0
    %p134 = por %p132, %p133
    %p135 = scmp.ne.s32.totalorder %s121, %s122
    %p136 = scmp.eq.s32.totalorder %s24, 3
    %p137 = por %p135, %p136
    %p139 = scmp.ne.s32.totalorder %s122, %s138
    %p140 = scmp.eq.s32.totalorder %s24, 0
    %p141 = por %p139, %p140
    %s142 = ssub.s32 %s26, %s33
    %p143 = scmp.eq.s32.totalorder %s142, 0
    %s145 = sadd.s32 %s144, 1
    %s146 = scalar_select %p143, %s144, %s145
    %p149 = pneg %p143
    %p150 = scmp.eq.s32.totalorder %s18, 3
    %p151 = por %p149, %p150
    %p152 = scmp.ne.s32.totalorder %s144, %s147
    %p153 = scmp.eq.s32.totalorder %s18, 0
    %p154 = por %p152, %p153
    %p155 = scmp.ne.s32.totalorder %s144, %s147
    %p156 = scmp.eq.s32.totalorder %s23, 3
    %p157 = por %p155, %p156
    %p158 = scmp.ne.s32.totalorder %s147, %s148
    %p159 = scmp.eq.s32.totalorder %s23, 0
    %p160 = por %p158, %p159
    %p161 = scmp.ne.s32.totalorder %s147, %s148
    %p162 = scmp.eq.s32.totalorder %s24, 3
    %p163 = por %p161, %p162
    %p165 = scmp.ne.s32.totalorder %s148, %s164
    %p166 = scmp.eq.s32.totalorder %s24, 0
    %p167 = por %p165, %p166
    %s168 = ssub.s32 %s26, %s33
    %p169 = scmp.eq.s32.totalorder %s168, 0
    %s171 = sadd.s32 %s170, 1
    %s172 = scalar_select %p169, %s170, %s171
    %p175 = pneg %p169
    %p176 = scmp.eq.s32.totalorder %s18, 3
    %p177 = por %p175, %p176
    %p178 = scmp.ne.s32.totalorder %s170, %s173
    %p179 = scmp.eq.s32.totalorder %s18, 0
    %p180 = por %p178, %p179
    %p181 = scmp.ne.s32.totalorder %s170, %s173
    %p182 = scmp.eq.s32.totalorder %s23, 3
    %p183 = por %p181, %p182
    %p184 = scmp.ne.s32.totalorder %s173, %s174
    %p185 = scmp.eq.s32.totalorder %s23, 0
    %p186 = por %p184, %p185
    %p187 = scmp.ne.s32.totalorder %s173, %s174
    %p188 = scmp.eq.s32.totalorder %s24, 3
    %p189 = por %p187, %p188
    %p191 = scmp.ne.s32.totalorder %s174, %s190
    %p192 = scmp.eq.s32.totalorder %s24, 0
    %p193 = por %p191, %p192
    %s194 = ssub.s32 %s26, %s33
    %p195 = scmp.eq.s32.totalorder %s194, 0
    %s197 = sadd.s32 %s196, 1
    %s198 = scalar_select %p195, %s196, %s197
    %p201 = pneg %p195
    %p202 = scmp.eq.s32.totalorder %s18, 3
    %p203 = por %p201, %p202
    %p204 = scmp.ne.s32.totalorder %s196, %s199
    %p205 = scmp.eq.s32.totalorder %s18, 0
    %p206 = por %p204, %p205
    %p207 = scmp.ne.s32.totalorder %s196, %s199
    %p208 = scmp.eq.s32.totalorder %s23, 3
    %p209 = por %p207, %p208
    %p210 = scmp.ne.s32.totalorder %s199, %s200
    %p211 = scmp.eq.s32.totalorder %s23, 0
    %p212 = por %p210, %p211
    %p213 = scmp.ne.s32.totalorder %s199, %s200
    %p214 = scmp.eq.s32.totalorder %s24, 3
    %p215 = por %p213, %p214
    %p217 = scmp.ne.s32.totalorder %s200, %s216
    %p218 = scmp.eq.s32.totalorder %s24, 0
    %p219 = por %p217, %p218
    %s220 = ssub.s32 %s26, %s33
    %p221 = scmp.eq.s32.totalorder %s220, 0
    %s223 = sadd.s32 %s222, 1
    %s224 = scalar_select %p221, %s222, %s223
    %p227 = pneg %p221
    %p228 = scmp.eq.s32.totalorder %s18, 3
    %p229 = por %p227, %p228
    %p230 = scmp.ne.s32.totalorder %s222, %s225
    %p231 = scmp.eq.s32.totalorder %s18, 0
    %p232 = por %p230, %p231
    %p233 = scmp.ne.s32.totalorder %s222, %s225
    %p234 = scmp.eq.s32.totalorder %s23, 3
    %p235 = por %p233, %p234
    %p236 = scmp.ne.s32.totalorder %s225, %s226
    %p237 = scmp.eq.s32.totalorder %s23, 0
    %p238 = por %p236, %p237
    %p239 = scmp.ne.s32.totalorder %s225, %s226
    %p240 = scmp.eq.s32.totalorder %s24, 3
    %p241 = por %p239, %p240
    %p243 = scmp.ne.s32.totalorder %s226, %s242
    %p244 = scmp.eq.s32.totalorder %s24, 0
    %p245 = por %p243, %p244
    %s246 = ssub.s32 %s26, %s33
    %p247 = scmp.eq.s32.totalorder %s246, 0
    %s249 = sadd.s32 %s248, 1
    %s250 = scalar_select %p247, %s248, %s249
    %p253 = pneg %p247
    %p254 = scmp.eq.s32.totalorder %s18, 3
    %p255 = por %p253, %p254
    %p256 = scmp.ne.s32.totalorder %s248, %s251
    %p257 = scmp.eq.s32.totalorder %s18, 0
    %p258 = por %p256, %p257
    %p259 = scmp.ne.s32.totalorder %s248, %s251
    %p260 = scmp.eq.s32.totalorder %s23, 3
    %p261 = por %p259, %p260
    %p262 = scmp.ne.s32.totalorder %s251, %s252
    %p263 = scmp.eq.s32.totalorder %s23, 0
    %p264 = por %p262, %p263
    %p265 = scmp.ne.s32.totalorder %s251, %s252
    %p266 = scmp.eq.s32.totalorder %s24, 3
    %p267 = por %p265, %p266
    %p269 = scmp.ne.s32.totalorder %s252, %s268
    %p270 = scmp.eq.s32.totalorder %s24, 0
    %p271 = por %p269, %p270
    %s272 = ssub.s32 %s26, %s33
    %p273 = scmp.eq.s32.totalorder %s272, 0
    %s275 = sadd.s32 %s274, 1
    %s276 = scalar_select %p273, %s274, %s275
    %p279 = pneg %p273
    %p280 = scmp.eq.s32.totalorder %s18, 3
    %p281 = por %p279, %p280
    %p282 = scmp.ne.s32.totalorder %s274, %s277
    %p283 = scmp.eq.s32.totalorder %s18, 0
    %p284 = por %p282, %p283
    %p285 = scmp.ne.s32.totalorder %s274, %s277
    %p286 = scmp.eq.s32.totalorder %s23, 3
    %p287 = por %p285, %p286
    %p288 = scmp.ne.s32.totalorder %s277, %s278
    %p289 = scmp.eq.s32.totalorder %s23, 0
    %p290 = por %p288, %p289
    %p291 = scmp.ne.s32.totalorder %s277, %s278
    %p292 = scmp.eq.s32.totalorder %s24, 3
    %p293 = por %p291, %p292
    %p295 = scmp.ne.s32.totalorder %s278, %s294
    %p296 = scmp.eq.s32.totalorder %s24, 0
    %p297 = por %p295, %p296
    %s298 = ssub.s32 %s26, %s33
    %p299 = scmp.eq.s32.totalorder %s298, 0
    %s301 = sadd.s32 %s300, 1
    %s302 = scalar_select %p299, %s300, %s301
    %p305 = pneg %p299
    %p306 = scmp.eq.s32.totalorder %s18, 3
    %p307 = por %p305, %p306
    %p308 = scmp.ne.s32.totalorder %s300, %s303
    %p309 = scmp.eq.s32.totalorder %s18, 0
    %p310 = por %p308, %p309
    %p311 = scmp.ne.s32.totalorder %s300, %s303
    %p312 = scmp.eq.s32.totalorder %s23, 3
    %p313 = por %p311, %p312
    %p314 = scmp.ne.s32.totalorder %s303, %s304
    %p315 = scmp.eq.s32.totalorder %s23, 0
    %p316 = por %p314, %p315
    %p317 = scmp.ne.s32.totalorder %s303, %s304
    %p318 = scmp.eq.s32.totalorder %s24, 3
    %p319 = por %p317, %p318
    %p321 = scmp.ne.s32.totalorder %s304, %s320
    %p322 = scmp.eq.s32.totalorder %s24, 0
    %p323 = por %p321, %p322
    %s324 = ssub.s32 %s26, %s33
    %p325 = scmp.eq.s32.totalorder %s324, 0
    %s327 = sadd.s32 %s326, 1
    %s328 = scalar_select %p325, %s326, %s327
    %p331 = pneg %p325
    %p332 = scmp.eq.s32.totalorder %s18, 3
    %p333 = por %p331, %p332
    %p334 = scmp.ne.s32.totalorder %s326, %s329
    %p335 = scmp.eq.s32.totalorder %s18, 0
    %p336 = por %p334, %p335
    %p337 = scmp.ne.s32.totalorder %s326, %s329
    %p338 = scmp.eq.s32.totalorder %s23, 3
    %p339 = por %p337, %p338
    %p340 = scmp.ne.s32.totalorder %s329, %s330
    %p341 = scmp.eq.s32.totalorder %s23, 0
    %p342 = por %p340, %p341
    %p343 = scmp.ne.s32.totalorder %s329, %s330
    %p344 = scmp.eq.s32.totalorder %s24, 3
    %p345 = por %p343, %p344
    %p347 = scmp.ne.s32.totalorder %s330, %s346
    %p348 = scmp.eq.s32.totalorder %s24, 0
    %p349 = por %p347, %p348
    %s350 = ssub.s32 %s25, %s37
    %p351 = scmp.eq.s32.totalorder %s350, 0
    %s353 = sadd.s32 %s352, 1
    %s354 = scalar_select %p351, %s352, %s353
    %p357 = pneg %p351
    %p358 = scmp.eq.s32.totalorder %s18, 3
    %p359 = por %p357, %p358
    %p360 = scmp.ne.s32.totalorder %s352, %s355
    %p361 = scmp.eq.s32.totalorder %s18, 0
    %p362 = por %p360, %p361
    %p363 = scmp.ne.s32.totalorder %s352, %s355
    %p364 = scmp.eq.s32.totalorder %s23, 3
    %p365 = por %p363, %p364
    %p366 = scmp.ne.s32.totalorder %s355, %s356
    %p367 = scmp.eq.s32.totalorder %s23, 0
    %p368 = por %p366, %p367
    %p369 = scmp.ne.s32.totalorder %s355, %s356
    %p370 = scmp.eq.s32.totalorder %s24, 3
    %p371 = por %p369, %p370
    %p373 = scmp.ne.s32.totalorder %s356, %s372
    %p374 = scmp.eq.s32.totalorder %s24, 0
    %p375 = por %p373, %p374
    %p376 = scmp.le.s32.totalorder 1, %s18
    %p377 = scmp.lt.s32.totalorder %s18, 5
    %p378 = pnand %p376, %p377
    %p379 = pneg %p378
    // Predicated region
    $region9: #{transformer_forward.3} parent=5 // pred_check
      _
    $region10: #{transformer_forward.3} parent=5 // pred_check_branch
      %381 = sbr.rel (%p378) target = $region12
    $region11: #{transformer_forward.3} parent=5 // pred_region
      %s382 = ssub.s32 %s18, 1
    $region12: #{transformer_forward.3} parent=5 // pred_fallthru
      _
    %p383 = scmp.lt.s32.totalorder %s18, 4
    // Predicated region
    $region13: #{transformer_forward.3} parent=5 // pred_check
      %p384 = pneg %p383
    $region14: #{transformer_forward.3} parent=5 // pred_check_branch
      %386 = sbr.rel (%p384) target = $region16
    $region15: #{transformer_forward.3} parent=5 // pred_region
      // Predicated region
      $region17: #{transformer_forward.3} parent=15 // pred_check
        %p387 = pneg %p50
      $region18: #{transformer_forward.3} parent=15 // pred_check_branch
        %389 = sbr.rel (%p387) target = $region20
      $region19: #{transformer_forward.3} parent=15 // pred_region
        %p390 = scmp.lt.s32.totalorder %s25, 1
        %s391 = scalar_select %p390, %s25, 1
        %s392 = smul.addr %s391, 8
        %s393 = scalar_lea.vmem %s0, %s392
      $region20: #{transformer_forward.3} parent=15 // pred_fallthru
        _
      // Predicated region
      $region21: #{transformer_forward.3} parent=15 // pred_check
        %p394 = pneg %p76
      $region22: #{transformer_forward.3} parent=15 // pred_check_branch
        %396 = sbr.rel (%p394) target = $region24
      $region23: #{transformer_forward.3} parent=15 // pred_region
        %p397 = scmp.lt.s32.totalorder %s25, 1
        %s398 = scalar_select %p397, %s25, 1
        %s399 = scalar_lea.vmem %s1, %s398
      $region24: #{transformer_forward.3} parent=15 // pred_fallthru
        _
      // Predicated region
      $region25: #{transformer_forward.3} parent=15 // pred_check
        %p400 = pneg %p102
      $region26: #{transformer_forward.3} parent=15 // pred_check_branch
        %402 = sbr.rel (%p400) target = $region28
      $region27: #{transformer_forward.3} parent=15 // pred_region
        %p403 = scmp.lt.s32.totalorder %s26, 1
        %s404 = scalar_select %p403, %s26, 1
        %s405 = smul.addr %s404, 4
        %s406 = smul.addr %s405, 4
        %s407 = scalar_lea.vmem %s2, %s406
      $region28: #{transformer_forward.3} parent=15 // pred_fallthru
        _
      // Predicated region
      $region29: #{transformer_forward.3} parent=15 // pred_check
        %p408 = pneg %p128
      $region30: #{transformer_forward.3} parent=15 // pred_check_branch
        %410 = sbr.rel (%p408) target = $region32
      $region31: #{transformer_forward.3} parent=15 // pred_region
        %p411 = scmp.lt.s32.totalorder %s26, 1
        %s412 = scalar_select %p411, %s26, 1
        %s413 = scalar_lea.vmem %s3, %s412
      $region32: #{transformer_forward.3} parent=15 // pred_fallthru
        _
      // Predicated region
      $region33: #{transformer_forward.3} parent=15 // pred_check
        %p414 = pneg %p154
      $region34: #{transformer_forward.3} parent=15 // pred_check_branch
        %416 = sbr.rel (%p414) target = $region36
      $region35: #{transformer_forward.3} parent=15 // pred_region
        %p417 = scmp.lt.s32.totalorder %s26, 1
        %s418 = scalar_select %p417, %s26, 1
        %s419 = smul.addr %s418, 4
        %s420 = smul.addr %s419, 4
        %s421 = scalar_lea.vmem %s4, %s420
      $region36: #{transformer_forward.3} parent=15 // pred_fallthru
        _
      // Predicated region
      $region37: #{transformer_forward.3} parent=15 // pred_check
        %p422 = pneg %p180
      $region38: #{transformer_forward.3} parent=15 // pred_check_branch
        %424 = sbr.rel (%p422) target = $region40
      $region39: #{transformer_forward.3} parent=15 // pred_region
        %p425 = scmp.lt.s32.totalorder %s26, 1
        %s426 = scalar_select %p425, %s26, 1
        %s427 = scalar_lea.vmem %s5, %s426
      $region40: #{transformer_forward.3} parent=15 // pred_fallthru
        _
      // Predicated region
      $region41: #{transformer_forward.3} parent=15 // pred_check
        %p428 = pneg %p206
      $region42: #{transformer_forward.3} parent=15 // pred_check_branch
        %430 = sbr.rel (%p428) target = $region44
      $region43: #{transformer_forward.3} parent=15 // pred_region
        %p431 = scmp.lt.s32.totalorder %s26, 1
        %s432 = scalar_select %p431, %s26, 1
        %s433 = scalar_lea.vmem %s6, %s432
      $region44: #{transformer_forward.3} parent=15 // pred_fallthru
        _
      // Predicated region
      $region45: #{transformer_forward.3} parent=15 // pred_check
        %p434 = pneg %p232
      $region46: #{transformer_forward.3} parent=15 // pred_check_branch
        %436 = sbr.rel (%p434) target = $region48
      $region47: #{transformer_forward.3} parent=15 // pred_region
        %p437 = scmp.lt.s32.totalorder %s26, 1
        %s438 = scalar_select %p437, %s26, 1
        %s439 = scalar_lea.vmem %s7, %s438
      $region48: #{transformer_forward.3} parent=15 // pred_fallthru
        _
      // Predicated region
      $region49: #{transformer_forward.3} parent=15 // pred_check
        %p440 = pneg %p258
      $region50: #{transformer_forward.3} parent=15 // pred_check_branch
        %442 = sbr.rel (%p440) target = $region52
      $region51: #{transformer_forward.3} parent=15 // pred_region
        %p443 = scmp.lt.s32.totalorder %s26, 1
        %s444 = scalar_select %p443, %s26, 1
        %s445 = smul.addr %s444, 4
        %s446 = smul.addr %s445, 4
        %s447 = scalar_lea.vmem %s8, %s446
      $region52: #{transformer_forward.3} parent=15 // pred_fallthru
        _
      // Predicated region
      $region53: #{transformer_forward.3} parent=15 // pred_check
        %p448 = pneg %p284
      $region54: #{transformer_forward.3} parent=15 // pred_check_branch
        %450 = sbr.rel (%p448) target = $region56
      $region55: #{transformer_forward.3} parent=15 // pred_region
        %p451 = scmp.lt.s32.totalorder %s26, 1
        %s452 = scalar_select %p451, %s26, 1
        %s453 = scalar_lea.vmem %s9, %s452
      $region56: #{transformer_forward.3} parent=15 // pred_fallthru
        _
      // Predicated region
      $region57: #{transformer_forward.3} parent=15 // pred_check
        %p454 = pneg %p310
      $region58: #{transformer_forward.3} parent=15 // pred_check_branch
        %456 = sbr.rel (%p454) target = $region60
      $region59: #{transformer_forward.3} parent=15 // pred_region
        %p457 = scmp.lt.s32.totalorder %s26, 1
        %s458 = scalar_select %p457, %s26, 1
        %s459 = scalar_lea.vmem %s10, %s458
      $region60: #{transformer_forward.3} parent=15 // pred_fallthru
        _
      // Predicated region
      $region61: #{transformer_forward.3} parent=15 // pred_check
        %p460 = pneg %p336
      $region62: #{transformer_forward.3} parent=15 // pred_check_branch
        %462 = sbr.rel (%p460) target = $region64
      $region63: #{transformer_forward.3} parent=15 // pred_region
        %p463 = scmp.lt.s32.totalorder %s26, 1
        %s464 = scalar_select %p463, %s26, 1
        %s465 = scalar_lea.vmem %s11, %s464
      $region64: #{transformer_forward.3} parent=15 // pred_fallthru
        _
    $region16: #{transformer_forward.3} parent=5 // pred_fallthru
      _
    %p466 = scmp.le.s32.totalorder 1, %s18
    %p467 = scmp.lt.s32.totalorder %s18, 5
    %p468 = pnand %p466, %p467
    %p469 = pneg %p468
    // Predicated region
    $region65: #{transformer_forward.3} parent=5 // pred_check
      _
    $region66: #{transformer_forward.3} parent=5 // pred_check_branch
      %471 = sbr.rel (%p468) target = $region68
    $region67: #{transformer_forward.3} parent=5 // pred_region
      %s472 = ssub.s32 %s18, 1
      %p473 = scmp.lt.s32.totalorder %s27, 1
      %s474 = scalar_select %p473, %s27, 1
      %s475 = smul.addr %s474, 8
      %s476 = scalar_lea.vmem %s0, %s475
      %p477 = pneg %p56
      %p478 = pneg %p53
      %p479 = scmp.lt.s32.totalorder %s27, 1
      %s480 = scalar_select %p479, %s27, 1
      %s481 = scalar_lea.vmem %s1, %s480
      %p482 = pneg %p82
      %p483 = pneg %p79
      %p484 = scmp.lt.s32.totalorder %s28, 1
      %s485 = scalar_select %p484, %s28, 1
      %s486 = smul.addr %s485, 4
      %s487 = smul.addr %s486, 4
      %s488 = scalar_lea.vmem %s2, %s487
      %p489 = pneg %p108
      %p490 = pneg %p105
      %p491 = scmp.lt.s32.totalorder %s28, 1
      %s492 = scalar_select %p491, %s28, 1
      %s493 = scalar_lea.vmem %s3, %s492
      %p494 = pneg %p134
      %p495 = pneg %p131
      %p496 = scmp.lt.s32.totalorder %s28, 1
      %s497 = scalar_select %p496, %s28, 1
      %s498 = smul.addr %s497, 4
      %s499 = smul.addr %s498, 4
      %s500 = scalar_lea.vmem %s4, %s499
      %p501 = pneg %p160
      %p502 = pneg %p157
      %p503 = scmp.lt.s32.totalorder %s28, 1
      %s504 = scalar_select %p503, %s28, 1
      %s505 = scalar_lea.vmem %s5, %s504
      %p506 = pneg %p186
      %p507 = pneg %p183
      %p508 = scmp.lt.s32.totalorder %s28, 1
      %s509 = scalar_select %p508, %s28, 1
      %s510 = scalar_lea.vmem %s6, %s509
      %p511 = pneg %p212
      %p512 = pneg %p209
      %p513 = scmp.lt.s32.totalorder %s28, 1
      %s514 = scalar_select %p513, %s28, 1
      %s515 = scalar_lea.vmem %s7, %s514
      %p516 = pneg %p238
      %p517 = pneg %p235
      %p518 = scmp.lt.s32.totalorder %s28, 1
      %s519 = scalar_select %p518, %s28, 1
      %s520 = smul.addr %s519, 4
      %s521 = smul.addr %s520, 4
      %s522 = scalar_lea.vmem %s8, %s521
      %p523 = pneg %p264
      %p524 = pneg %p261
      %p525 = scmp.lt.s32.totalorder %s28, 1
      %s526 = scalar_select %p525, %s28, 1
      %s527 = scalar_lea.vmem %s9, %s526
      %p528 = pneg %p290
      %p529 = pneg %p287
      %p530 = scmp.lt.s32.totalorder %s28, 1
      %s531 = scalar_select %p530, %s28, 1
      %s532 = scalar_lea.vmem %s10, %s531
      %p533 = pneg %p316
      %p534 = pneg %p313
      %p535 = scmp.lt.s32.totalorder %s28, 1
      %s536 = scalar_select %p535, %s28, 1
      %s537 = scalar_lea.vmem %s11, %s536
      %p538 = pneg %p342
      %p539 = pneg %p339
      %p540 = pneg %p368
      %p541 = pneg %p365
      %p542 = scmp.lt.s32.totalorder %s27, 1
      %s543 = scalar_select %p542, %s27, 1
      %s544 = smul.addr %s543, 8
      %s545 = scalar_lea.vmem %s12, %s544
      %p546 = scmp.lt.s32.totalorder %s27, 1
      %s547 = scalar_select %p546, %s27, 1
      %s548 = smul.addr %s547, 8
      %s549 = scalar_lea.vmem %s0, %s548
      %p550 = scmp.lt.s32.totalorder %s27, 1
      %s551 = scalar_select %p550, %s27, 1
      %s552 = scalar_lea.vmem %s1, %s551
      %p553 = scmp.lt.s32.totalorder %s28, 1
      %s554 = scalar_select %p553, %s28, 1
      %s555 = smul.addr %s554, 4
      %s556 = smul.addr %s555, 4
      %s557 = scalar_lea.vmem %s2, %s556
      %p558 = scmp.lt.s32.totalorder %s28, 1
      %s559 = scalar_select %p558, %s28, 1
      %s560 = scalar_lea.vmem %s3, %s559
      %p561 = scmp.lt.s32.totalorder %s28, 1
      %s562 = scalar_select %p561, %s28, 1
      %s563 = smul.addr %s562, 4
      %s564 = smul.addr %s563, 4
      %s565 = scalar_lea.vmem %s4, %s564
      %p566 = scmp.lt.s32.totalorder %s28, 1
      %s567 = scalar_select %p566, %s28, 1
      %s568 = scalar_lea.vmem %s5, %s567
      %p569 = scmp.lt.s32.totalorder %s28, 1
      %s570 = scalar_select %p569, %s28, 1
      %s571 = scalar_lea.vmem %s6, %s570
      %p572 = scmp.lt.s32.totalorder %s28, 1
      %s573 = scalar_select %p572, %s28, 1
      %s574 = scalar_lea.vmem %s7, %s573
      %p575 = scmp.lt.s32.totalorder %s28, 1
      %s576 = scalar_select %p575, %s28, 1
      %s577 = smul.addr %s576, 4
      %s578 = smul.addr %s577, 4
      %s579 = scalar_lea.vmem %s8, %s578
      %p580 = scmp.lt.s32.totalorder %s28, 1
      %s581 = scalar_select %p580, %s28, 1
      %s582 = scalar_lea.vmem %s9, %s581
      %p583 = scmp.lt.s32.totalorder %s28, 1
      %s584 = scalar_select %p583, %s28, 1
      %s585 = scalar_lea.vmem %s10, %s584
      %p586 = scmp.lt.s32.totalorder %s28, 1
      %s587 = scalar_select %p586, %s28, 1
      %s588 = scalar_lea.vmem %s11, %s587
      %p589 = scmp.lt.s32.totalorder %s27, 1
      %s590 = scalar_select %p589, %s27, 1
      %s591 = smul.addr %s590, 8
      %s592 = scalar_lea.vmem %s12, %s591
      %p594 = scmp.eq.s32.totalorder %s28, 0
      // Predicated region
      $region69: #{transformer_forward.3} parent=67 // pred_check
        %p595 = pneg %p594
      $region70: #{transformer_forward.3} parent=67 // pred_check_branch
        %597 = sbr.rel (%p595) target = $region72
      $region71: #{transformer_forward.3} parent=67 // pred_region
        %v598 = vld [vmem:[%s549] sm:$0xff]
        %vm599 = vcmask 261120
        %600 = vst.msk [vmem:[#allocation2] sm:$0xff] %vm599, %v598
      $region72: #{transformer_forward.3} parent=67 // pred_fallthru
        _
      %v601 = vld [vmem:[#allocation2] sm:$0xff]
      %v602 = vld [vmem:[%s552] sm:$0x1]
      %v603 = vld [vmem:[%s557] sm:$0xf]
      %v604 = vld [vmem:[%s557 + $0x4] sm:$0xf]
      %v605 = vld [vmem:[%s557 + $0x8] sm:$0xf]
      %v606 = vld [vmem:[%s557 + $0xc] sm:$0xf]
      %v607 = vld [vmem:[%s560] sm:$0x1]
      %v608 = vld [vmem:[%s565] sm:$0xf]
      %v609 = vld [vmem:[%s565 + $0x4] sm:$0xf]
      %v610 = vld [vmem:[%s565 + $0x8] sm:$0xf]
      %v611 = vld [vmem:[%s565 + $0xc] sm:$0xf]
      %v612 = vld [vmem:[%s568] sm:$0x1]
      %v613 = vpack.c.bf16 %v601, %v601
      %v615 = vperm.slane %v607, 0
      %v621 = vunpack.c.l.b16 %v603
      %v622 = vunpack.c.l.b16 %v604
      %v623 = vunpack.c.l.b16 %v605
      %v624 = vunpack.c.l.b16 %v606
      %v625 = vpack.c.b16 %v622, %v621
      %v626 = vpack.c.b16 %v624, %v623
      %vm629 = vcmask 261120
      %v631 = vsel %vm629, %v613, 0
      %633 = vmatpush.bf16.msra.mxu0 0
      %634 = vmatpush.bf16.msra.mxu0 0
      %635 = vmatpush.bf16.msra.mxu0 0
      %636 = vmatpush.bf16.msra.mxu0 0
      %637 = vmatpush.bf16.msra.mxu0 0
      %638 = vmatpush.bf16.msra.mxu0 0
      %639 = vmatpush.bf16.msra.mxu0 %v626
      %640 = vmatpush.bf16.msra.mxu0 %v625
      %641 = vmatmul.bf16.gmra.mxu0 %v631
      %v642 = vpop.f32.mrf.mxu0
      %v643 = vadd.f32 %v615, %v642
      %v644 = vpop.f32.mrf.mxu0
      %645 = vdwg.mxu0
      %v646 = vpack.c.bf16 %v643, %v643
      %648 = vrot.lane.b32.xlu0 %v643, 96
      %v649 = vpop.permute.xlu0 %648
      %651 = vxpose.xlu0.b32.start [1/16] %v649, 128
      %652 = vxpose.xlu0.b32.cont [2/16] 0.0, 128
      %653 = vxpose.xlu0.b32.cont [3/16] 0.0, 128
      %654 = vxpose.xlu0.b32.cont [4/16] 0.0, 128
      %655 = vxpose.xlu0.b32.cont [5/16] 0.0, 128
      %656 = vxpose.xlu0.b32.cont [6/16] 0.0, 128
      %657 = vxpose.xlu0.b32.cont [7/16] 0.0, 128
      %658 = vxpose.xlu0.b32.cont [8/16] 0.0, 128
      %659 = vxpose.xlu0.b32.cont [9/16] 0.0, 128
      %660 = vxpose.xlu0.b32.cont [10/16] 0.0, 128
      %661 = vxpose.xlu0.b32.cont [11/16] 0.0, 128
      %662 = vxpose.xlu0.b32.cont [12/16] 0.0, 128
      %663 = vxpose.xlu0.b32.cont [13/16] 0.0, 128
      %664 = vxpose.xlu0.b32.cont [14/16] 0.0, 128
      %665 = vxpose.xlu0.b32.cont [15/16] 0.0, 128
      %666 = vxpose.xlu0.b32.end [16/16] 0.0, 128
      %v667 = vpop.trf.xlu0
      %v668 = vpop.trf.xlu0
      %v669 = vpop.trf.xlu0
      %v670 = vpop.trf.xlu0
      %v671 = vpop.trf.xlu0
      %v672 = vpop.trf.xlu0
      %v673 = vpop.trf.xlu0
      %v674 = vpop.trf.xlu0
      %v675 = vpop.trf.xlu0
      %v676 = vpop.trf.xlu0
      %v677 = vpop.trf.xlu0
      %v678 = vpop.trf.xlu0
      %v679 = vpop.trf.xlu0
      %v680 = vpop.trf.xlu0
      %v681 = vpop.trf.xlu0
      %v682 = vpop.trf.xlu0
      %v683 = vpack.c.bf16 %v667, %v667
      %v684 = vpack.c.bf16 %v668, %v668
      %v685 = vpack.c.bf16 %v669, %v669
      %v686 = vpack.c.bf16 %v670, %v670
      %v688 = vperm.slane %v602, 0
      %vm690 = vcmask 64512
      %v692 = vsel %vm690, %v646, 0
      %vm694 = vcmask 1043456
      %v696 = vsel %vm694, %v683, 0
      %698 = vmatpush.bf16.msra.mxu0 0
      %699 = vmatpush.bf16.msra.mxu0 0
      %700 = vmatpush.bf16.msra.mxu0 0
      %701 = vmatpush.bf16.msra.mxu0 0
      %702 = vmatpush.bf16.msra.mxu0 0
      %703 = vmatpush.bf16.msra.mxu0 0
      %704 = vmatpush.bf16.msra.mxu0 0
      %705 = vmatpush.bf16.msra.mxu0 %v696
      %706 = vmatmul.bf16.gmra.mxu0 %v692
      %v707 = vpop.f32.mrf.mxu0
      %v708 = vadd.f32 %v688, %v707
      %v709 = vpop.f32.mrf.mxu0
      %710 = vdwg.mxu0
      %v711 = vsel %vm690, %v708, -inf
      %712 = vmax.xlane.f32.xlu0 %v711
      %v713 = vpop.xlane.xlu0 %712
      %v714 = vsub.f32 %v708, %v713
      %v715 = vmul.f32 %v714, 1.442695
      %v716 = vpow.pop %v715
      %v717 = vsel %vm690, %v716, 0.0
      %718 = vadd.xlane.f32.xlu0 %v717
      %v719 = vpop.xlane.xlu0 %718
      %v720 = vrcp.pop %v719
      %v721 = vmul.f32 %v716, %v720
      %v722 = vpack.c.bf16 %v721, %v721
      %v724 = vunpack.c.l.b16 %v646
      %v725 = vpack.c.b16 %v724, %v724
      %726 = vrot.lane.b32.xlu0 %v725, 64
      %v727 = vpop.permute.xlu0 %726
      %v729 = vsel %vm690, %v722, 0
      %v732 = vsel %vm694, %v727, 0
      %734 = vmatpush.bf16.msra.mxu0 0
      %735 = vmatpush.bf16.msra.mxu0 0
      %736 = vmatpush.bf16.msra.mxu0 0
      %737 = vmatpush.bf16.msra.mxu0 0
      %738 = vmatpush.bf16.msra.mxu0 0
      %739 = vmatpush.bf16.msra.mxu0 0
      %740 = vmatpush.bf16.msra.mxu0 0
      %741 = vmatpush.bf16.msra.mxu0 %v732
      %742 = vmatmul.bf16.gmra.mxu0 %v729
      %v743 = vpop.f32.mrf.mxu0
      %v744 = vadd.f32 0.0, %v743
      %v745 = vpop.f32.mrf.mxu0
      %746 = vdwg.mxu0
      %747 = vst.msk [vmem:[#allocation3] sm:$0xff] %vm690, %v744
      %748 = vrot.lane.b32.xlu0 %v725, 120
      %v749 = vpop.permute.xlu0 %748
      %v751 = vsel %vm690, %v749, 0
      %v754 = vsel %vm694, %v684, 0
      %756 = vmatpush.bf16.msra.mxu0 0
      %757 = vmatpush.bf16.msra.mxu0 0
      %758 = vmatpush.bf16.msra.mxu0 0
      %759 = vmatpush.bf16.msra.mxu0 0
      %760 = vmatpush.bf16.msra.mxu0 0
      %761 = vmatpush.bf16.msra.mxu0 0
      %762 = vmatpush.bf16.msra.mxu0 0
      %763 = vmatpush.bf16.msra.mxu0 %v754
      %764 = vmatmul.bf16.gmra.mxu0 %v751
      %v765 = vpop.f32.mrf.mxu0
      %v766 = vadd.f32 %v688, %v765
      %v767 = vpop.f32.mrf.mxu0
      %768 = vdwg.mxu0
      %v769 = vsel %vm690, %v766, -inf
      %770 = vmax.xlane.f32.xlu0 %v769
      %v771 = vpop.xlane.xlu0 %770
      %v772 = vsub.f32 %v766, %v771
      %v773 = vmul.f32 %v772, 1.442695
      %v774 = vpow.pop %v773
      %v775 = vsel %vm690, %v774, 0.0
      %776 = vadd.xlane.f32.xlu0 %v775
      %v777 = vpop.xlane.xlu0 %776
      %v778 = vrcp.pop %v777
      %v779 = vmul.f32 %v774, %v778
      %v780 = vpack.c.bf16 %v779, %v779
      %781 = vrot.lane.b32.xlu0 %v725, 56
      %v782 = vpop.permute.xlu0 %781
      %v784 = vsel %vm690, %v780, 0
      %v787 = vsel %vm694, %v782, 0
      %789 = vmatpush.bf16.msra.mxu0 0
      %790 = vmatpush.bf16.msra.mxu0 0
      %791 = vmatpush.bf16.msra.mxu0 0
      %792 = vmatpush.bf16.msra.mxu0 0
      %793 = vmatpush.bf16.msra.mxu0 0
      %794 = vmatpush.bf16.msra.mxu0 0
      %795 = vmatpush.bf16.msra.mxu0 0
      %796 = vmatpush.bf16.msra.mxu0 %v787
      %797 = vmatmul.bf16.gmra.mxu0 %v784
      %v798 = vpop.f32.mrf.mxu0
      %v799 = vadd.f32 0.0, %v798
      %v800 = vpop.f32.mrf.mxu0
      %801 = vdwg.mxu0
      %803 = vrot.lane.b32.xlu0 %v799, 8
      %v804 = vpop.permute.xlu0 %803
      %vm806 = vcmask 130112
      %807 = vst.msk [vmem:[#allocation3] sm:$0xff] %vm806, %v804
      %808 = vrot.lane.b32.xlu0 %v725, 112
      %v809 = vpop.permute.xlu0 %808
      %v811 = vsel %vm690, %v809, 0
      %v814 = vsel %vm694, %v685, 0
      %816 = vmatpush.bf16.msra.mxu0 0
      %817 = vmatpush.bf16.msra.mxu0 0
      %818 = vmatpush.bf16.msra.mxu0 0
      %819 = vmatpush.bf16.msra.mxu0 0
      %820 = vmatpush.bf16.msra.mxu0 0
      %821 = vmatpush.bf16.msra.mxu0 0
      %822 = vmatpush.bf16.msra.mxu0 0
      %823 = vmatpush.bf16.msra.mxu0 %v814
      %824 = vmatmul.bf16.gmra.mxu0 %v811
      %v825 = vpop.f32.mrf.mxu0
      %v826 = vadd.f32 %v688, %v825
      %v827 = vpop.f32.mrf.mxu0
      %828 = vdwg.mxu0
      %v829 = vsel %vm690, %v826, -inf
      %830 = vmax.xlane.f32.xlu0 %v829
      %v831 = vpop.xlane.xlu0 %830
      %v832 = vsub.f32 %v826, %v831
      %v833 = vmul.f32 %v832, 1.442695
      %v834 = vpow.pop %v833
      %v835 = vsel %vm690, %v834, 0.0
      %836 = vadd.xlane.f32.xlu0 %v835
      %v837 = vpop.xlane.xlu0 %836
      %v838 = vrcp.pop %v837
      %v839 = vmul.f32 %v834, %v838
      %v840 = vpack.c.bf16 %v839, %v839
      %841 = vrot.lane.b32.xlu0 %v725, 48
      %v842 = vpop.permute.xlu0 %841
      %v844 = vsel %vm690, %v840, 0
      %v847 = vsel %vm694, %v842, 0
      %849 = vmatpush.bf16.msra.mxu0 0
      %850 = vmatpush.bf16.msra.mxu0 0
      %851 = vmatpush.bf16.msra.mxu0 0
      %852 = vmatpush.bf16.msra.mxu0 0
      %853 = vmatpush.bf16.msra.mxu0 0
      %854 = vmatpush.bf16.msra.mxu0 0
      %855 = vmatpush.bf16.msra.mxu0 0
      %856 = vmatpush.bf16.msra.mxu0 %v847
      %857 = vmatmul.bf16.gmra.mxu0 %v844
      %v858 = vpop.f32.mrf.mxu0
      %v859 = vadd.f32 0.0, %v858
      %v860 = vpop.f32.mrf.mxu0
      %861 = vdwg.mxu0
      %863 = vrot.lane.b32.xlu0 %v859, 16
      %v864 = vpop.permute.xlu0 %863
      %vm866 = vcmask 195712
      %867 = vst.msk [vmem:[#allocation3] sm:$0xff] %vm866, %v864
      %868 = vrot.lane.b32.xlu0 %v725, 104
      %v869 = vpop.permute.xlu0 %868
      %v871 = vsel %vm690, %v869, 0
      %v874 = vsel %vm694, %v686, 0
      %876 = vmatpush.bf16.msra.mxu0 0
      %877 = vmatpush.bf16.msra.mxu0 0
      %878 = vmatpush.bf16.msra.mxu0 0
      %879 = vmatpush.bf16.msra.mxu0 0
      %880 = vmatpush.bf16.msra.mxu0 0
      %881 = vmatpush.bf16.msra.mxu0 0
      %882 = vmatpush.bf16.msra.mxu0 0
      %883 = vmatpush.bf16.msra.mxu0 %v874
      %884 = vmatmul.bf16.gmra.mxu0 %v871
      %v885 = vpop.f32.mrf.mxu0
      %v886 = vadd.f32 %v688, %v885
      %v887 = vpop.f32.mrf.mxu0
      %888 = vdwg.mxu0
      %v889 = vsel %vm690, %v886, -inf
      %890 = vmax.xlane.f32.xlu0 %v889
      %v891 = vpop.xlane.xlu0 %890
      %v892 = vsub.f32 %v886, %v891
      %v893 = vmul.f32 %v892, 1.442695
      %v894 = vpow.pop %v893
      %v895 = vsel %vm690, %v894, 0.0
      %896 = vadd.xlane.f32.xlu0 %v895
      %v897 = vpop.xlane.xlu0 %896
      %v898 = vrcp.pop %v897
      %v899 = vmul.f32 %v894, %v898
      %v900 = vpack.c.bf16 %v899, %v899
      %901 = vrot.lane.b32.xlu0 %v725, 40
      %v902 = vpop.permute.xlu0 %901
      %v904 = vsel %vm690, %v900, 0
      %v907 = vsel %vm694, %v902, 0
      %909 = vmatpush.bf16.msra.mxu0 0
      %910 = vmatpush.bf16.msra.mxu0 0
      %911 = vmatpush.bf16.msra.mxu0 0
      %912 = vmatpush.bf16.msra.mxu0 0
      %913 = vmatpush.bf16.msra.mxu0 0
      %914 = vmatpush.bf16.msra.mxu0 0
      %915 = vmatpush.bf16.msra.mxu0 0
      %916 = vmatpush.bf16.msra.mxu0 %v907
      %917 = vmatmul.bf16.gmra.mxu0 %v904
      %v918 = vpop.f32.mrf.mxu0
      %v919 = vadd.f32 0.0, %v918
      %v920 = vpop.f32.mrf.mxu0
      %921 = vdwg.mxu0
      %923 = vrot.lane.b32.xlu0 %v919, 24
      %v924 = vpop.permute.xlu0 %923
      %vm926 = vcmask 261312
      %927 = vst.msk [vmem:[#allocation3] sm:$0xff] %vm926, %v924
      %v928 = vld [vmem:[#allocation3] sm:$0xff]
      %v929 = vpack.c.bf16 %v928, %v928
      %v931 = vperm.slane %v612, 0
      %v937 = vunpack.c.l.b16 %v608
      %v938 = vunpack.c.l.b16 %v609
      %v939 = vunpack.c.l.b16 %v610
      %v940 = vunpack.c.l.b16 %v611
      %v941 = vpack.c.b16 %v938, %v937
      %v942 = vpack.c.b16 %v940, %v939
      %v946 = vsel %vm629, %v929, 0
      %948 = vmatpush.bf16.msra.mxu0 0
      %949 = vmatpush.bf16.msra.mxu0 0
      %950 = vmatpush.bf16.msra.mxu0 0
      %951 = vmatpush.bf16.msra.mxu0 0
      %952 = vmatpush.bf16.msra.mxu0 0
      %953 = vmatpush.bf16.msra.mxu0 0
      %954 = vmatpush.bf16.msra.mxu0 %v942
      %955 = vmatpush.bf16.msra.mxu0 %v941
      %956 = vmatmul.bf16.gmra.mxu0 %v946
      %v957 = vpop.f32.mrf.mxu0
      %v958 = vadd.f32 %v931, %v957
      %v959 = vpop.f32.mrf.mxu0
      %960 = vdwg.mxu0
      %v961 = vld [vmem:[%s571] sm:$0x1]
      %v962 = vld [vmem:[%s574] sm:$0x1]
      %v963 = vadd.f32 %v601, %v958
      %v964 = vsel %vm629, %v963, 0.0
      %965 = vadd.xlane.f32.xlu0 %v964
      %v966 = vpop.xlane.xlu0 %965
      %v967 = vrcp.pop 32.0
      %v968 = vmul.f32 32.0, %v967
      %v969 = vsub.f32 1.0, %v968
      %v970 = vmul.f32 %v967, %v969
      %v971 = vadd.f32 %v967, %v970
      %vm972 = vweird.f32 %v967
      %v973 = vsel %vm972, %v967, %v971
      %v974 = vmul.f32 %v966, %v973
      %v975 = vsub.f32 %v963, %v974
      %v976 = vmul.f32 %v975, %v975
      %v977 = vsel %vm629, %v976, 0.0
      %978 = vadd.xlane.f32.xlu0 %v977
      %v979 = vpop.xlane.xlu0 %978
      %v980 = vmul.f32 %v979, %v973
      %v981 = vadd.f32 %v980, 1e-05
      %v982 = vrsqrt.pop %v981
      %v983 = vmul.f32 %v982, %v981
      %v984 = vmul.f32 %v983, %v982
      %v985 = vmul.f32 0.5, %v984
      %v986 = vsub.f32 1.5, %v985
      %v987 = vmul.f32 %v982, %v986
      %vm988 = vweird.f32 %v981
      %vm989 = vweird.f32 %v982
      %vm990 = vmor %vm988, %vm989
      %v991 = vsel %vm990, %v982, %v987
      %v992 = vmul.f32 %v975, %v991
      %v994 = vperm.slane %v961, 0
      %v996 = vmul.f32 %v992, %v994
      %v998 = vperm.slane %v962, 0
      %v1000 = vadd.f32 %v996, %v998
      %v1001 = vld [vmem:[%s579] sm:$0xf]
      %v1002 = vld [vmem:[%s579 + $0x4] sm:$0xf]
      %v1003 = vld [vmem:[%s579 + $0x8] sm:$0xf]
      %v1004 = vld [vmem:[%s579 + $0xc] sm:$0xf]
      %v1005 = vpack.c.bf16 %v1000, %v1000
      %v1006 = vld [vmem:[%s582] sm:$0x1]
      %v1008 = vperm.slane %v1006, 0
      %v1014 = vunpack.c.l.b16 %v1001
      %v1015 = vunpack.c.l.b16 %v1002
      %v1016 = vunpack.c.l.b16 %v1003
      %v1017 = vunpack.c.l.b16 %v1004
      %v1018 = vpack.c.b16 %v1015, %v1014
      %v1019 = vpack.c.b16 %v1017, %v1016
      %v1023 = vsel %vm629, %v1005, 0
      %1025 = vmatpush.bf16.msra.mxu0 0
      %1026 = vmatpush.bf16.msra.mxu0 0
      %1027 = vmatpush.bf16.msra.mxu0 0
      %1028 = vmatpush.bf16.msra.mxu0 0
      %1029 = vmatpush.bf16.msra.mxu0 0
      %1030 = vmatpush.bf16.msra.mxu0 0
      %1031 = vmatpush.bf16.msra.mxu0 %v1019
      %1032 = vmatpush.bf16.msra.mxu0 %v1018
      %1033 = vmatmul.bf16.gmra.mxu0 %v1023
      %v1034 = vpop.f32.mrf.mxu0
      %v1035 = vadd.f32 %v1008, %v1034
      %v1036 = vpop.f32.mrf.mxu0
      %1037 = vdwg.mxu0
      %v1038 = vld [vmem:[%s585] sm:$0x1]
      %v1039 = vld [vmem:[%s588] sm:$0x1]
      %v1040 = vadd.f32 %v1000, %v1035
      %v1041 = vsel %vm629, %v1040, 0.0
      %1042 = vadd.xlane.f32.xlu0 %v1041
      %v1043 = vpop.xlane.xlu0 %1042
      %v1044 = vmul.f32 %v1043, %v973
      %v1045 = vsub.f32 %v1040, %v1044
      %v1046 = vmul.f32 %v1045, %v1045
      %v1047 = vsel %vm629, %v1046, 0.0
      %1048 = vadd.xlane.f32.xlu0 %v1047
      %v1049 = vpop.xlane.xlu0 %1048
      %v1050 = vmul.f32 %v1049, %v973
      %v1051 = vadd.f32 %v1050, 1e-05
      %v1052 = vrsqrt.pop %v1051
      %v1053 = vmul.f32 %v1052, %v1051
      %v1054 = vmul.f32 %v1053, %v1052
      %v1055 = vmul.f32 0.5, %v1054
      %v1056 = vsub.f32 1.5, %v1055
      %v1057 = vmul.f32 %v1052, %v1056
      %vm1058 = vweird.f32 %v1051
      %vm1059 = vweird.f32 %v1052
      %vm1060 = vmor %vm1058, %vm1059
      %v1061 = vsel %vm1060, %v1052, %v1057
      %v1062 = vmul.f32 %v1045, %v1061
      %v1064 = vperm.slane %v1038, 0
      %v1066 = vmul.f32 %v1062, %v1064
      %v1068 = vperm.slane %v1039, 0
      %v1070 = vadd.f32 %v1066, %v1068
      %1071 = vst.msk [vmem:[#allocation2] sm:$0xff] %vm629, %v1070
      %p1072 = scmp.eq.s32.totalorder %s28, 1
      // Predicated region
      $region73: #{transformer_forward.3} parent=67 // pred_check
        %p1073 = pneg %p1072
      $region74: #{transformer_forward.3} parent=67 // pred_check_branch
        %1075 = sbr.rel (%p1073) target = $region76
      $region75: #{transformer_forward.3} parent=67 // pred_region
        %1076 = vst.msk [vmem:[%s592] sm:$0xff] %vm629, %v1070
      $region76: #{transformer_forward.3} parent=67 // pred_fallthru
        _
      %p1077 = scmp.lt.s32.totalorder %s27, 1
      %s1078 = scalar_select %p1077, %s27, 1
      %s1079 = smul.addr %s1078, 8
      %s1080 = scalar_lea.vmem %s12, %s1079
      // Predicated region
      $region77: #{transformer_forward.3} parent=67 // pred_check
        %p1081 = pneg %p365
      $region78: #{transformer_forward.3} parent=67 // pred_check_branch
        %1083 = sbr.rel (%p1081) target = $region80
      $region79: #{transformer_forward.3} parent=67 // pred_region
        _
      $region80: #{transformer_forward.3} parent=67 // pred_fallthru
        _
    $region68: #{transformer_forward.3} parent=5 // pred_fallthru
      _
    %p1084 = scmp.le.s32.totalorder 2, %s18
    // Predicated region
    $region81: #{transformer_forward.3} parent=5 // pred_check
      %p1085 = pneg %p1084
    $region82: #{transformer_forward.3} parent=5 // pred_check_branch
      %1087 = sbr.rel (%p1085) target = $region84
    $region83: #{transformer_forward.3} parent=5 // pred_region
      %s1088 = ssub.s32 %s18, 2
      // Predicated region
      $region85: #{transformer_forward.3} parent=83 // pred_check
        %p1089 = pneg %p371
      $region86: #{transformer_forward.3} parent=83 // pred_check_branch
        %1091 = sbr.rel (%p1089) target = $region88
      $region87: #{transformer_forward.3} parent=83 // pred_region
        %p1092 = scmp.lt.s32.totalorder %s29, 1
        %s1093 = scalar_select %p1092, %s29, 1
        %s1094 = smul.addr %s1093, 8
        %s1095 = scalar_lea.vmem %s12, %s1094
      $region88: #{transformer_forward.3} parent=83 // pred_fallthru
        _
    $region84: #{transformer_forward.3} parent=5 // pred_fallthru
      _
  $region6: #{transformer_forward.3} parent=0 // loop_footer
    %s22 = sadd.s32 1, %s18
  $region7: #{transformer_forward.3} parent=0 // loop_footer_branch
    %17 = sbr.rel target = $region3
  $region8: #{transformer_forward.3} parent=0 // loop_exit
    _

// kernel: transformer_forward.4
$region0: #{transformer_forward.4}
  #allocation0 [shape = 'u32[]', space=smem, size = 0x4, offset = 0x4, fixed_abs, tag = 'smem constant byte address 0x4 - core index']
  #allocation1 [shape = 'u32[72,128]{1,0:T(1,128)}', space=vmem, size = 0x9000, scoped, tag = 'internal scratch']
  #allocation2 [shape = 'f32[8,32]{1,0:T(8,128)}', space=vmem, size = 0x1000, scoped, tag = 'scratch operand']
  #allocation3 [shape = 'f32[8,32]{1,0:T(8,128)}', space=vmem, size = 0x1000, scoped, tag = 'scratch operand']
  %s0 = inlined_call_operand.vmem [shape: f32[2,8,32], index: 0, kind: input, shape index: {}]
  %s1 = inlined_call_operand.vmem [shape: f32[2,8,32], index: 1, kind: input, shape index: {}]
  %s2 = inlined_call_operand.vmem [shape: f32[8,8], index: 2, kind: input, shape index: {}]
  %s3 = inlined_call_operand.vmem [shape: f32[2,1,8], index: 3, kind: input, shape index: {}]
  %s4 = inlined_call_operand.vmem [shape: bf16[2,32,96], index: 4, kind: input, shape index: {}]
  %s5 = inlined_call_operand.vmem [shape: f32[2,1,96], index: 5, kind: input, shape index: {}]
  %s6 = inlined_call_operand.vmem [shape: bf16[2,32,32], index: 6, kind: input, shape index: {}]
  %s7 = inlined_call_operand.vmem [shape: f32[2,1,32], index: 7, kind: input, shape index: {}]
  %s8 = inlined_call_operand.vmem [shape: f32[2,1,32], index: 8, kind: input, shape index: {}]
  %s9 = inlined_call_operand.vmem [shape: f32[2,1,32], index: 9, kind: input, shape index: {}]
  %s10 = inlined_call_operand.vmem [shape: bf16[2,32,96], index: 10, kind: input, shape index: {}]
  %s11 = inlined_call_operand.vmem [shape: f32[2,1,96], index: 11, kind: input, shape index: {}]
  %s12 = inlined_call_operand.vmem [shape: bf16[2,32,32], index: 12, kind: input, shape index: {}]
  %s13 = inlined_call_operand.vmem [shape: f32[2,1,32], index: 13, kind: input, shape index: {}]
  %s14 = inlined_call_operand.vmem [shape: f32[2,1,32], index: 14, kind: input, shape index: {}]
  %s15 = inlined_call_operand.vmem [shape: f32[2,1,32], index: 15, kind: input, shape index: {}]
  %s16 = inlined_call_operand.vmem [shape: bf16[2,32,32], index: 16, kind: input, shape index: {}]
  %s17 = inlined_call_operand.vmem [shape: f32[2,1,32], index: 17, kind: input, shape index: {}]
  %s18 = inlined_call_operand.vmem [shape: f32[2,1,32], index: 18, kind: input, shape index: {}]
  %s19 = inlined_call_operand.vmem [shape: f32[2,1,32], index: 19, kind: input, shape index: {}]
  %s20 = inlined_call_operand.vmem [shape: f32[2,8,32], index: 20, kind: output, shape index: {}]
  %s21 = sld [smem:[#allocation0]]
  $region121: #{transformer_forward.4} parent=0
    _
  %s23 = ssub.s32 1, %s21
  %s24 = scalar_select 0, %s23, %s21
  loop: start=0, step=1, limit=6
  $region2: #{transformer_forward.4} parent=0 // loop_pre_header
    _
  $region3: #{transformer_forward.4} parent=0 // loop_header
    %s26 = sphi 0, %s30
    %p27 = scmp.ge.s32.totalorder %s26, 6
    %s33 = sphi 0, %s45
    %s34 = sphi 0, %s41
    %s35 = sphi 0, %s33
    %s36 = sphi 0, %s34
    %s37 = sphi 0, %s35
    %s38 = sphi 0, %s36
    %s48 = sphi 0, %s50
    %s51 = sphi 0, %s48
    %s52 = sphi 0, %s51
    %s68 = sphi 0, %s52
    %s74 = sphi 0, %s76
    %s77 = sphi 0, %s74
    %s78 = sphi 0, %s77
    %s94 = sphi 0, %s78
    %s98 = sphi 0, %s98
    %s100 = sphi 0, %s98
    %s101 = sphi 0, %s100
    %s115 = sphi 0, %s101
    %s121 = sphi 0, %s123
    %s124 = sphi 0, %s121
    %s125 = sphi 0, %s124
    %s141 = sphi 0, %s125
    %s147 = sphi 0, %s149
    %s150 = sphi 0, %s147
    %s151 = sphi 0, %s150
    %s167 = sphi 0, %s151
    %s173 = sphi 0, %s175
    %s176 = sphi 0, %s173
    %s177 = sphi 0, %s176
    %s193 = sphi 0, %s177
    %s199 = sphi 0, %s201
    %s202 = sphi 0, %s199
    %s203 = sphi 0, %s202
    %s219 = sphi 0, %s203
    %s225 = sphi 0, %s227
    %s228 = sphi 0, %s225
    %s229 = sphi 0, %s228
    %s245 = sphi 0, %s229
    %s251 = sphi 0, %s253
    %s254 = sphi 0, %s251
    %s255 = sphi 0, %s254
    %s271 = sphi 0, %s255
    %s277 = sphi 0, %s279
    %s280 = sphi 0, %s277
    %s281 = sphi 0, %s280
    %s297 = sphi 0, %s281
    %s303 = sphi 0, %s305
    %s306 = sphi 0, %s303
    %s307 = sphi 0, %s306
    %s323 = sphi 0, %s307
    %s329 = sphi 0, %s331
    %s332 = sphi 0, %s329
    %s333 = sphi 0, %s332
    %s349 = sphi 0, %s333
    %s355 = sphi 0, %s357
    %s358 = sphi 0, %s355
    %s359 = sphi 0, %s358
    %s375 = sphi 0, %s359
    %s381 = sphi 0, %s383
    %s384 = sphi 0, %s381
    %s385 = sphi 0, %s384
    %s401 = sphi 0, %s385
    %s407 = sphi 0, %s409
    %s410 = sphi 0, %s407
    %s411 = sphi 0, %s410
    %s427 = sphi 0, %s411
    %s433 = sphi 0, %s435
    %s436 = sphi 0, %s433
    %s437 = sphi 0, %s436
    %s453 = sphi 0, %s437
    %s459 = sphi 0, %s461
    %s462 = sphi 0, %s459
    %s463 = sphi 0, %s462
    %s479 = sphi 0, %s463
    %s485 = sphi 0, %s487
    %s488 = sphi 0, %s485
    %s489 = sphi 0, %s488
    %s505 = sphi 0, %s489
    %s511 = sphi 0, %s513
    %s514 = sphi 0, %s511
    %s515 = sphi 0, %s514
    %s531 = sphi 0, %s515
    %s537 = sphi 0, %s539
    %s540 = sphi 0, %s537
    %s541 = sphi 0, %s540
    %s557 = sphi 0, %s541
    %s563 = sphi 0, %s565
    %s566 = sphi 0, %s563
    %s567 = sphi 0, %s566
    %s583 = sphi 0, %s567
  $region4: #{transformer_forward.4} parent=0 // loop_header_branch
    %29 = sbr.rel (%p27) target = $region8
  $region5: #{transformer_forward.4} parent=0 // loop_body
    %s31 = ssub.s32 %s26, 1
    %s32 = ssub.s32 %s26, 2
    %s39 = sadd.s32 1, %s34
    %p40 = scmp.ge.s32.totalorder %s39, 2
    %s41 = scalar_select %p40, 0, %s39
    %s42 = sadd.s32 1, %s33
    %s43 = scalar_select %p40, %s42, %s33
    %p44 = scmp.ge.s32.totalorder %s43, 2
    %s45 = scalar_select %p44, 0, %s43
    %s46 = ssub.s32 %s33, %s45
    %p47 = scmp.eq.s32.totalorder %s46, 0
    %s49 = sadd.s32 %s48, 1
    %s50 = scalar_select %p47, %s48, %s49
    %p53 = pneg %p47
    %p54 = scmp.eq.s32.totalorder %s26, 3
    %p55 = por %p53, %p54
    %p56 = scmp.ne.s32.totalorder %s48, %s51
    %p57 = scmp.eq.s32.totalorder %s26, 0
    %p58 = por %p56, %p57
    %p59 = scmp.ne.s32.totalorder %s48, %s51
    %p60 = scmp.eq.s32.totalorder %s31, 3
    %p61 = por %p59, %p60
    %p62 = scmp.ne.s32.totalorder %s51, %s52
    %p63 = scmp.eq.s32.totalorder %s31, 0
    %p64 = por %p62, %p63
    %p65 = scmp.ne.s32.totalorder %s51, %s52
    %p66 = scmp.eq.s32.totalorder %s32, 3
    %p67 = por %p65, %p66
    %p69 = scmp.ne.s32.totalorder %s52, %s68
    %p70 = scmp.eq.s32.totalorder %s32, 0
    %p71 = por %p69, %p70
    %s72 = ssub.s32 %s33, %s45
    %p73 = scmp.eq.s32.totalorder %s72, 0
    %s75 = sadd.s32 %s74, 1
    %s76 = scalar_select %p73, %s74, %s75
    %p79 = pneg %p73
    %p80 = scmp.eq.s32.totalorder %s26, 3
    %p81 = por %p79, %p80
    %p82 = scmp.ne.s32.totalorder %s74, %s77
    %p83 = scmp.eq.s32.totalorder %s26, 0
    %p84 = por %p82, %p83
    %p85 = scmp.ne.s32.totalorder %s74, %s77
    %p86 = scmp.eq.s32.totalorder %s31, 3
    %p87 = por %p85, %p86
    %p88 = scmp.ne.s32.totalorder %s77, %s78
    %p89 = scmp.eq.s32.totalorder %s31, 0
    %p90 = por %p88, %p89
    %p91 = scmp.ne.s32.totalorder %s77, %s78
    %p92 = scmp.eq.s32.totalorder %s32, 3
    %p93 = por %p91, %p92
    %p95 = scmp.ne.s32.totalorder %s78, %s94
    %p96 = scmp.eq.s32.totalorder %s32, 0
    %p97 = por %p95, %p96
    %s99 = sadd.s32 %s98, 1
    %p102 = scmp.eq.s32.totalorder %s26, 3
    %p103 = scmp.ne.s32.totalorder %s98, %s100
    %p104 = scmp.eq.s32.totalorder %s26, 0
    %p105 = por %p103, %p104
    %p106 = scmp.ne.s32.totalorder %s98, %s100
    %p107 = scmp.eq.s32.totalorder %s31, 3
    %p108 = por %p106, %p107
    %p109 = scmp.ne.s32.totalorder %s100, %s101
    %p110 = scmp.eq.s32.totalorder %s31, 0
    %p111 = por %p109, %p110
    %p112 = scmp.ne.s32.totalorder %s100, %s101
    %p113 = scmp.eq.s32.totalorder %s32, 3
    %p114 = por %p112, %p113
    %p116 = scmp.ne.s32.totalorder %s101, %s115
    %p117 = scmp.eq.s32.totalorder %s32, 0
    %p118 = por %p116, %p117
    %s119 = ssub.s32 %s33, %s45
    %p120 = scmp.eq.s32.totalorder %s119, 0
    %s122 = sadd.s32 %s121, 1
    %s123 = scalar_select %p120, %s121, %s122
    %p126 = pneg %p120
    %p127 = scmp.eq.s32.totalorder %s26, 3
    %p128 = por %p126, %p127
    %p129 = scmp.ne.s32.totalorder %s121, %s124
    %p130 = scmp.eq.s32.totalorder %s26, 0
    %p131 = por %p129, %p130
    %p132 = scmp.ne.s32.totalorder %s121, %s124
    %p133 = scmp.eq.s32.totalorder %s31, 3
    %p134 = por %p132, %p133
    %p135 = scmp.ne.s32.totalorder %s124, %s125
    %p136 = scmp.eq.s32.totalorder %s31, 0
    %p137 = por %p135, %p136
    %p138 = scmp.ne.s32.totalorder %s124, %s125
    %p139 = scmp.eq.s32.totalorder %s32, 3
    %p140 = por %p138, %p139
    %p142 = scmp.ne.s32.totalorder %s125, %s141
    %p143 = scmp.eq.s32.totalorder %s32, 0
    %p144 = por %p142, %p143
    %s145 = ssub.s32 %s34, %s41
    %p146 = scmp.eq.s32.totalorder %s145, 0
    %s148 = sadd.s32 %s147, 1
    %s149 = scalar_select %p146, %s147, %s148
    %p152 = pneg %p146
    %p153 = scmp.eq.s32.totalorder %s26, 3
    %p154 = por %p152, %p153
    %p155 = scmp.ne.s32.totalorder %s147, %s150
    %p156 = scmp.eq.s32.totalorder %s26, 0
    %p157 = por %p155, %p156
    %p158 = scmp.ne.s32.totalorder %s147, %s150
    %p159 = scmp.eq.s32.totalorder %s31, 3
    %p160 = por %p158, %p159
    %p161 = scmp.ne.s32.totalorder %s150, %s151
    %p162 = scmp.eq.s32.totalorder %s31, 0
    %p163 = por %p161, %p162
    %p164 = scmp.ne.s32.totalorder %s150, %s151
    %p165 = scmp.eq.s32.totalorder %s32, 3
    %p166 = por %p164, %p165
    %p168 = scmp.ne.s32.totalorder %s151, %s167
    %p169 = scmp.eq.s32.totalorder %s32, 0
    %p170 = por %p168, %p169
    %s171 = ssub.s32 %s34, %s41
    %p172 = scmp.eq.s32.totalorder %s171, 0
    %s174 = sadd.s32 %s173, 1
    %s175 = scalar_select %p172, %s173, %s174
    %p178 = pneg %p172
    %p179 = scmp.eq.s32.totalorder %s26, 3
    %p180 = por %p178, %p179
    %p181 = scmp.ne.s32.totalorder %s173, %s176
    %p182 = scmp.eq.s32.totalorder %s26, 0
    %p183 = por %p181, %p182
    %p184 = scmp.ne.s32.totalorder %s173, %s176
    %p185 = scmp.eq.s32.totalorder %s31, 3
    %p186 = por %p184, %p185
    %p187 = scmp.ne.s32.totalorder %s176, %s177
    %p188 = scmp.eq.s32.totalorder %s31, 0
    %p189 = por %p187, %p188
    %p190 = scmp.ne.s32.totalorder %s176, %s177
    %p191 = scmp.eq.s32.totalorder %s32, 3
    %p192 = por %p190, %p191
    %p194 = scmp.ne.s32.totalorder %s177, %s193
    %p195 = scmp.eq.s32.totalorder %s32, 0
    %p196 = por %p194, %p195
    %s197 = ssub.s32 %s34, %s41
    %p198 = scmp.eq.s32.totalorder %s197, 0
    %s200 = sadd.s32 %s199, 1
    %s201 = scalar_select %p198, %s199, %s200
    %p204 = pneg %p198
    %p205 = scmp.eq.s32.totalorder %s26, 3
    %p206 = por %p204, %p205
    %p207 = scmp.ne.s32.totalorder %s199, %s202
    %p208 = scmp.eq.s32.totalorder %s26, 0
    %p209 = por %p207, %p208
    %p210 = scmp.ne.s32.totalorder %s199, %s202
    %p211 = scmp.eq.s32.totalorder %s31, 3
    %p212 = por %p210, %p211
    %p213 = scmp.ne.s32.totalorder %s202, %s203
    %p214 = scmp.eq.s32.totalorder %s31, 0
    %p215 = por %p213, %p214
    %p216 = scmp.ne.s32.totalorder %s202, %s203
    %p217 = scmp.eq.s32.totalorder %s32, 3
    %p218 = por %p216, %p217
    %p220 = scmp.ne.s32.totalorder %s203, %s219
    %p221 = scmp.eq.s32.totalorder %s32, 0
    %p222 = por %p220, %p221
    %s223 = ssub.s32 %s34, %s41
    %p224 = scmp.eq.s32.totalorder %s223, 0
    %s226 = sadd.s32 %s225, 1
    %s227 = scalar_select %p224, %s225, %s226
    %p230 = pneg %p224
    %p231 = scmp.eq.s32.totalorder %s26, 3
    %p232 = por %p230, %p231
    %p233 = scmp.ne.s32.totalorder %s225, %s228
    %p234 = scmp.eq.s32.totalorder %s26, 0
    %p235 = por %p233, %p234
    %p236 = scmp.ne.s32.totalorder %s225, %s228
    %p237 = scmp.eq.s32.totalorder %s31, 3
    %p238 = por %p236, %p237
    %p239 = scmp.ne.s32.totalorder %s228, %s229
    %p240 = scmp.eq.s32.totalorder %s31, 0
    %p241 = por %p239, %p240
    %p242 = scmp.ne.s32.totalorder %s228, %s229
    %p243 = scmp.eq.s32.totalorder %s32, 3
    %p244 = por %p242, %p243
    %p246 = scmp.ne.s32.totalorder %s229, %s245
    %p247 = scmp.eq.s32.totalorder %s32, 0
    %p248 = por %p246, %p247
    %s249 = ssub.s32 %s34, %s41
    %p250 = scmp.eq.s32.totalorder %s249, 0
    %s252 = sadd.s32 %s251, 1
    %s253 = scalar_select %p250, %s251, %s252
    %p256 = pneg %p250
    %p257 = scmp.eq.s32.totalorder %s26, 3
    %p258 = por %p256, %p257
    %p259 = scmp.ne.s32.totalorder %s251, %s254
    %p260 = scmp.eq.s32.totalorder %s26, 0
    %p261 = por %p259, %p260
    %p262 = scmp.ne.s32.totalorder %s251, %s254
    %p263 = scmp.eq.s32.totalorder %s31, 3
    %p264 = por %p262, %p263
    %p265 = scmp.ne.s32.totalorder %s254, %s255
    %p266 = scmp.eq.s32.totalorder %s31, 0
    %p267 = por %p265, %p266
    %p268 = scmp.ne.s32.totalorder %s254, %s255
    %p269 = scmp.eq.s32.totalorder %s32, 3
    %p270 = por %p268, %p269
    %p272 = scmp.ne.s32.totalorder %s255, %s271
    %p273 = scmp.eq.s32.totalorder %s32, 0
    %p274 = por %p272, %p273
    %s275 = ssub.s32 %s34, %s41
    %p276 = scmp.eq.s32.totalorder %s275, 0
    %s278 = sadd.s32 %s277, 1
    %s279 = scalar_select %p276, %s277, %s278
    %p282 = pneg %p276
    %p283 = scmp.eq.s32.totalorder %s26, 3
    %p284 = por %p282, %p283
    %p285 = scmp.ne.s32.totalorder %s277, %s280
    %p286 = scmp.eq.s32.totalorder %s26, 0
    %p287 = por %p285, %p286
    %p288 = scmp.ne.s32.totalorder %s277, %s280
    %p289 = scmp.eq.s32.totalorder %s31, 3
    %p290 = por %p288, %p289
    %p291 = scmp.ne.s32.totalorder %s280, %s281
    %p292 = scmp.eq.s32.totalorder %s31, 0
    %p293 = por %p291, %p292
    %p294 = scmp.ne.s32.totalorder %s280, %s281
    %p295 = scmp.eq.s32.totalorder %s32, 3
    %p296 = por %p294, %p295
    %p298 = scmp.ne.s32.totalorder %s281, %s297
    %p299 = scmp.eq.s32.totalorder %s32, 0
    %p300 = por %p298, %p299
    %s301 = ssub.s32 %s34, %s41
    %p302 = scmp.eq.s32.totalorder %s301, 0
    %s304 = sadd.s32 %s303, 1
    %s305 = scalar_select %p302, %s303, %s304
    %p308 = pneg %p302
    %p309 = scmp.eq.s32.totalorder %s26, 3
    %p310 = por %p308, %p309
    %p311 = scmp.ne.s32.totalorder %s303, %s306
    %p312 = scmp.eq.s32.totalorder %s26, 0
    %p313 = por %p311, %p312
    %p314 = scmp.ne.s32.totalorder %s303, %s306
    %p315 = scmp.eq.s32.totalorder %s31, 3
    %p316 = por %p314, %p315
    %p317 = scmp.ne.s32.totalorder %s306, %s307
    %p318 = scmp.eq.s32.totalorder %s31, 0
    %p319 = por %p317, %p318
    %p320 = scmp.ne.s32.totalorder %s306, %s307
    %p321 = scmp.eq.s32.totalorder %s32, 3
    %p322 = por %p320, %p321
    %p324 = scmp.ne.s32.totalorder %s307, %s323
    %p325 = scmp.eq.s32.totalorder %s32, 0
    %p326 = por %p324, %p325
    %s327 = ssub.s32 %s34, %s41
    %p328 = scmp.eq.s32.totalorder %s327, 0
    %s330 = sadd.s32 %s329, 1
    %s331 = scalar_select %p328, %s329, %s330
    %p334 = pneg %p328
    %p335 = scmp.eq.s32.totalorder %s26, 3
    %p336 = por %p334, %p335
    %p337 = scmp.ne.s32.totalorder %s329, %s332
    %p338 = scmp.eq.s32.totalorder %s26, 0
    %p339 = por %p337, %p338
    %p340 = scmp.ne.s32.totalorder %s329, %s332
    %p341 = scmp.eq.s32.totalorder %s31, 3
    %p342 = por %p340, %p341
    %p343 = scmp.ne.s32.totalorder %s332, %s333
    %p344 = scmp.eq.s32.totalorder %s31, 0
    %p345 = por %p343, %p344
    %p346 = scmp.ne.s32.totalorder %s332, %s333
    %p347 = scmp.eq.s32.totalorder %s32, 3
    %p348 = por %p346, %p347
    %p350 = scmp.ne.s32.totalorder %s333, %s349
    %p351 = scmp.eq.s32.totalorder %s32, 0
    %p352 = por %p350, %p351
    %s353 = ssub.s32 %s34, %s41
    %p354 = scmp.eq.s32.totalorder %s353, 0
    %s356 = sadd.s32 %s355, 1
    %s357 = scalar_select %p354, %s355, %s356
    %p360 = pneg %p354
    %p361 = scmp.eq.s32.totalorder %s26, 3
    %p362 = por %p360, %p361
    %p363 = scmp.ne.s32.totalorder %s355, %s358
    %p364 = scmp.eq.s32.totalorder %s26, 0
    %p365 = por %p363, %p364
    %p366 = scmp.ne.s32.totalorder %s355, %s358
    %p367 = scmp.eq.s32.totalorder %s31, 3
    %p368 = por %p366, %p367
    %p369 = scmp.ne.s32.totalorder %s358, %s359
    %p370 = scmp.eq.s32.totalorder %s31, 0
    %p371 = por %p369, %p370
    %p372 = scmp.ne.s32.totalorder %s358, %s359
    %p373 = scmp.eq.s32.totalorder %s32, 3
    %p374 = por %p372, %p373
    %p376 = scmp.ne.s32.totalorder %s359, %s375
    %p377 = scmp.eq.s32.totalorder %s32, 0
    %p378 = por %p376, %p377
    %s379 = ssub.s32 %s34, %s41
    %p380 = scmp.eq.s32.totalorder %s379, 0
    %s382 = sadd.s32 %s381, 1
    %s383 = scalar_select %p380, %s381, %s382
    %p386 = pneg %p380
    %p387 = scmp.eq.s32.totalorder %s26, 3
    %p388 = por %p386, %p387
    %p389 = scmp.ne.s32.totalorder %s381, %s384
    %p390 = scmp.eq.s32.totalorder %s26, 0
    %p391 = por %p389, %p390
    %p392 = scmp.ne.s32.totalorder %s381, %s384
    %p393 = scmp.eq.s32.totalorder %s31, 3
    %p394 = por %p392, %p393
    %p395 = scmp.ne.s32.totalorder %s384, %s385
    %p396 = scmp.eq.s32.totalorder %s31, 0
    %p397 = por %p395, %p396
    %p398 = scmp.ne.s32.totalorder %s384, %s385
    %p399 = scmp.eq.s32.totalorder %s32, 3
    %p400 = por %p398, %p399
    %p402 = scmp.ne.s32.totalorder %s385, %s401
    %p403 = scmp.eq.s32.totalorder %s32, 0
    %p404 = por %p402, %p403
    %s405 = ssub.s32 %s34, %s41
    %p406 = scmp.eq.s32.totalorder %s405, 0
    %s408 = sadd.s32 %s407, 1
    %s409 = scalar_select %p406, %s407, %s408
    %p412 = pneg %p406
    %p413 = scmp.eq.s32.totalorder %s26, 3
    %p414 = por %p412, %p413
    %p415 = scmp.ne.s32.totalorder %s407, %s410
    %p416 = scmp.eq.s32.totalorder %s26, 0
    %p417 = por %p415, %p416
    %p418 = scmp.ne.s32.totalorder %s407, %s410
    %p419 = scmp.eq.s32.totalorder %s31, 3
    %p420 = por %p418, %p419
    %p421 = scmp.ne.s32.totalorder %s410, %s411
    %p422 = scmp.eq.s32.totalorder %s31, 0
    %p423 = por %p421, %p422
    %p424 = scmp.ne.s32.totalorder %s410, %s411
    %p425 = scmp.eq.s32.totalorder %s32, 3
    %p426 = por %p424, %p425
    %p428 = scmp.ne.s32.totalorder %s411, %s427
    %p429 = scmp.eq.s32.totalorder %s32, 0
    %p430 = por %p428, %p429
    %s431 = ssub.s32 %s34, %s41
    %p432 = scmp.eq.s32.totalorder %s431, 0
    %s434 = sadd.s32 %s433, 1
    %s435 = scalar_select %p432, %s433, %s434
    %p438 = pneg %p432
    %p439 = scmp.eq.s32.totalorder %s26, 3
    %p440 = por %p438, %p439
    %p441 = scmp.ne.s32.totalorder %s433, %s436
    %p442 = scmp.eq.s32.totalorder %s26, 0
    %p443 = por %p441, %p442
    %p444 = scmp.ne.s32.totalorder %s433, %s436
    %p445 = scmp.eq.s32.totalorder %s31, 3
    %p446 = por %p444, %p445
    %p447 = scmp.ne.s32.totalorder %s436, %s437
    %p448 = scmp.eq.s32.totalorder %s31, 0
    %p449 = por %p447, %p448
    %p450 = scmp.ne.s32.totalorder %s436, %s437
    %p451 = scmp.eq.s32.totalorder %s32, 3
    %p452 = por %p450, %p451
    %p454 = scmp.ne.s32.totalorder %s437, %s453
    %p455 = scmp.eq.s32.totalorder %s32, 0
    %p456 = por %p454, %p455
    %s457 = ssub.s32 %s34, %s41
    %p458 = scmp.eq.s32.totalorder %s457, 0
    %s460 = sadd.s32 %s459, 1
    %s461 = scalar_select %p458, %s459, %s460
    %p464 = pneg %p458
    %p465 = scmp.eq.s32.totalorder %s26, 3
    %p466 = por %p464, %p465
    %p467 = scmp.ne.s32.totalorder %s459, %s462
    %p468 = scmp.eq.s32.totalorder %s26, 0
    %p469 = por %p467, %p468
    %p470 = scmp.ne.s32.totalorder %s459, %s462
    %p471 = scmp.eq.s32.totalorder %s31, 3
    %p472 = por %p470, %p471
    %p473 = scmp.ne.s32.totalorder %s462, %s463
    %p474 = scmp.eq.s32.totalorder %s31, 0
    %p475 = por %p473, %p474
    %p476 = scmp.ne.s32.totalorder %s462, %s463
    %p477 = scmp.eq.s32.totalorder %s32, 3
    %p478 = por %p476, %p477
    %p480 = scmp.ne.s32.totalorder %s463, %s479
    %p481 = scmp.eq.s32.totalorder %s32, 0
    %p482 = por %p480, %p481
    %s483 = ssub.s32 %s34, %s41
    %p484 = scmp.eq.s32.totalorder %s483, 0
    %s486 = sadd.s32 %s485, 1
    %s487 = scalar_select %p484, %s485, %s486
    %p490 = pneg %p484
    %p491 = scmp.eq.s32.totalorder %s26, 3
    %p492 = por %p490, %p491
    %p493 = scmp.ne.s32.totalorder %s485, %s488
    %p494 = scmp.eq.s32.totalorder %s26, 0
    %p495 = por %p493, %p494
    %p496 = scmp.ne.s32.totalorder %s485, %s488
    %p497 = scmp.eq.s32.totalorder %s31, 3
    %p498 = por %p496, %p497
    %p499 = scmp.ne.s32.totalorder %s488, %s489
    %p500 = scmp.eq.s32.totalorder %s31, 0
    %p501 = por %p499, %p500
    %p502 = scmp.ne.s32.totalorder %s488, %s489
    %p503 = scmp.eq.s32.totalorder %s32, 3
    %p504 = por %p502, %p503
    %p506 = scmp.ne.s32.totalorder %s489, %s505
    %p507 = scmp.eq.s32.totalorder %s32, 0
    %p508 = por %p506, %p507
    %s509 = ssub.s32 %s34, %s41
    %p510 = scmp.eq.s32.totalorder %s509, 0
    %s512 = sadd.s32 %s511, 1
    %s513 = scalar_select %p510, %s511, %s512
    %p516 = pneg %p510
    %p517 = scmp.eq.s32.totalorder %s26, 3
    %p518 = por %p516, %p517
    %p519 = scmp.ne.s32.totalorder %s511, %s514
    %p520 = scmp.eq.s32.totalorder %s26, 0
    %p521 = por %p519, %p520
    %p522 = scmp.ne.s32.totalorder %s511, %s514
    %p523 = scmp.eq.s32.totalorder %s31, 3
    %p524 = por %p522, %p523
    %p525 = scmp.ne.s32.totalorder %s514, %s515
    %p526 = scmp.eq.s32.totalorder %s31, 0
    %p527 = por %p525, %p526
    %p528 = scmp.ne.s32.totalorder %s514, %s515
    %p529 = scmp.eq.s32.totalorder %s32, 3
    %p530 = por %p528, %p529
    %p532 = scmp.ne.s32.totalorder %s515, %s531
    %p533 = scmp.eq.s32.totalorder %s32, 0
    %p534 = por %p532, %p533
    %s535 = ssub.s32 %s34, %s41
    %p536 = scmp.eq.s32.totalorder %s535, 0
    %s538 = sadd.s32 %s537, 1
    %s539 = scalar_select %p536, %s537, %s538
    %p542 = pneg %p536
    %p543 = scmp.eq.s32.totalorder %s26, 3
    %p544 = por %p542, %p543
    %p545 = scmp.ne.s32.totalorder %s537, %s540
    %p546 = scmp.eq.s32.totalorder %s26, 0
    %p547 = por %p545, %p546
    %p548 = scmp.ne.s32.totalorder %s537, %s540
    %p549 = scmp.eq.s32.totalorder %s31, 3
    %p550 = por %p548, %p549
    %p551 = scmp.ne.s32.totalorder %s540, %s541
    %p552 = scmp.eq.s32.totalorder %s31, 0
    %p553 = por %p551, %p552
    %p554 = scmp.ne.s32.totalorder %s540, %s541
    %p555 = scmp.eq.s32.totalorder %s32, 3
    %p556 = por %p554, %p555
    %p558 = scmp.ne.s32.totalorder %s541, %s557
    %p559 = scmp.eq.s32.totalorder %s32, 0
    %p560 = por %p558, %p559
    %s561 = ssub.s32 %s33, %s45
    %p562 = scmp.eq.s32.totalorder %s561, 0
    %s564 = sadd.s32 %s563, 1
    %s565 = scalar_select %p562, %s563, %s564
    %p568 = pneg %p562
    %p569 = scmp.eq.s32.totalorder %s26, 3
    %p570 = por %p568, %p569
    %p571 = scmp.ne.s32.totalorder %s563, %s566
    %p572 = scmp.eq.s32.totalorder %s26, 0
    %p573 = por %p571, %p572
    %p574 = scmp.ne.s32.totalorder %s563, %s566
    %p575 = scmp.eq.s32.totalorder %s31, 3
    %p576 = por %p574, %p575
    %p577 = scmp.ne.s32.totalorder %s566, %s567
    %p578 = scmp.eq.s32.totalorder %s31, 0
    %p579 = por %p577, %p578
    %p580 = scmp.ne.s32.totalorder %s566, %s567
    %p581 = scmp.eq.s32.totalorder %s32, 3
    %p582 = por %p580, %p581
    %p584 = scmp.ne.s32.totalorder %s567, %s583
    %p585 = scmp.eq.s32.totalorder %s32, 0
    %p586 = por %p584, %p585
    %p587 = scmp.le.s32.totalorder 1, %s26
    %p588 = scmp.lt.s32.totalorder %s26, 5
    %p589 = pnand %p587, %p588
    %p590 = pneg %p589
    // Predicated region
    $region9: #{transformer_forward.4} parent=5 // pred_check
      _
    $region10: #{transformer_forward.4} parent=5 // pred_check_branch
      %592 = sbr.rel (%p589) target = $region12
    $region11: #{transformer_forward.4} parent=5 // pred_region
      %s593 = ssub.s32 %s26, 1
      // Predicated region
      $region13: #{transformer_forward.4} parent=11 // pred_check
        %p594 = pneg %p111
      $region14: #{transformer_forward.4} parent=11 // pred_check_branch
        %596 = sbr.rel (%p594) target = $region16
      $region15: #{transformer_forward.4} parent=11 // pred_region
        _
      $region16: #{transformer_forward.4} parent=11 // pred_fallthru
        _
    $region12: #{transformer_forward.4} parent=5 // pred_fallthru
      _
    %p597 = scmp.lt.s32.totalorder %s26, 4
    // Predicated region
    $region17: #{transformer_forward.4} parent=5 // pred_check
      %p598 = pneg %p597
    $region18: #{transformer_forward.4} parent=5 // pred_check_branch
      %600 = sbr.rel (%p598) target = $region20
    $region19: #{transformer_forward.4} parent=5 // pred_region
      // Predicated region
      $region21: #{transformer_forward.4} parent=19 // pred_check
        %p601 = pneg %p58
      $region22: #{transformer_forward.4} parent=19 // pred_check_branch
        %603 = sbr.rel (%p601) target = $region24
      $region23: #{transformer_forward.4} parent=19 // pred_region
        %p604 = scmp.lt.s32.totalorder %s33, 1
        %s605 = scalar_select %p604, %s33, 1
        %s606 = smul.addr %s605, 8
        %s607 = scalar_lea.vmem %s0, %s606
      $region24: #{transformer_forward.4} parent=19 // pred_fallthru
        _
      // Predicated region
      $region25: #{transformer_forward.4} parent=19 // pred_check
        %p608 = pneg %p84
      $region26: #{transformer_forward.4} parent=19 // pred_check_branch
        %610 = sbr.rel (%p608) target = $region28
      $region27: #{transformer_forward.4} parent=19 // pred_region
        %p611 = scmp.lt.s32.totalorder %s33, 1
        %s612 = scalar_select %p611, %s33, 1
        %s613 = smul.addr %s612, 8
        %s614 = scalar_lea.vmem %s1, %s613
      $region28: #{transformer_forward.4} parent=19 // pred_fallthru
        _
      // Predicated region
      $region29: #{transformer_forward.4} parent=19 // pred_check
        %p615 = pneg %p131
      $region30: #{transformer_forward.4} parent=19 // pred_check_branch
        %617 = sbr.rel (%p615) target = $region32
      $region31: #{transformer_forward.4} parent=19 // pred_region
        %p618 = scmp.lt.s32.totalorder %s33, 1
        %s619 = scalar_select %p618, %s33, 1
        %s620 = scalar_lea.vmem %s3, %s619
      $region32: #{transformer_forward.4} parent=19 // pred_fallthru
        _
      // Predicated region
      $region33: #{transformer_forward.4} parent=19 // pred_check
        %p621 = pneg %p157
      $region34: #{transformer_forward.4} parent=19 // pred_check_branch
        %623 = sbr.rel (%p621) target = $region36
      $region35: #{transformer_forward.4} parent=19 // pred_region
        %p624 = scmp.lt.s32.totalorder %s34, 1
        %s625 = scalar_select %p624, %s34, 1
        %s626 = smul.addr %s625, 4
        %s627 = smul.addr %s626, 4
        %s628 = scalar_lea.vmem %s4, %s627
      $region36: #{transformer_forward.4} parent=19 // pred_fallthru
        _
      // Predicated region
      $region37: #{transformer_forward.4} parent=19 // pred_check
        %p629 = pneg %p183
      $region38: #{transformer_forward.4} parent=19 // pred_check_branch
        %631 = sbr.rel (%p629) target = $region40
      $region39: #{transformer_forward.4} parent=19 // pred_region
        %p632 = scmp.lt.s32.totalorder %s34, 1
        %s633 = scalar_select %p632, %s34, 1
        %s634 = scalar_lea.vmem %s5, %s633
      $region40: #{transformer_forward.4} parent=19 // pred_fallthru
        _
      // Predicated region
      $region41: #{transformer_forward.4} parent=19 // pred_check
        %p635 = pneg %p209
      $region42: #{transformer_forward.4} parent=19 // pred_check_branch
        %637 = sbr.rel (%p635) target = $region44
      $region43: #{transformer_forward.4} parent=19 // pred_region
        %p638 = scmp.lt.s32.totalorder %s34, 1
        %s639 = scalar_select %p638, %s34, 1
        %s640 = smul.addr %s639, 4
        %s641 = smul.addr %s640, 4
        %s642 = scalar_lea.vmem %s6, %s641
      $region44: #{transformer_forward.4} parent=19 // pred_fallthru
        _
      // Predicated region
      $region45: #{transformer_forward.4} parent=19 // pred_check
        %p643 = pneg %p235
      $region46: #{transformer_forward.4} parent=19 // pred_check_branch
        %645 = sbr.rel (%p643) target = $region48
      $region47: #{transformer_forward.4} parent=19 // pred_region
        %p646 = scmp.lt.s32.totalorder %s34, 1
        %s647 = scalar_select %p646, %s34, 1
        %s648 = scalar_lea.vmem %s7, %s647
      $region48: #{transformer_forward.4} parent=19 // pred_fallthru
        _
      // Predicated region
      $region49: #{transformer_forward.4} parent=19 // pred_check
        %p649 = pneg %p261
      $region50: #{transformer_forward.4} parent=19 // pred_check_branch
        %651 = sbr.rel (%p649) target = $region52
      $region51: #{transformer_forward.4} parent=19 // pred_region
        %p652 = scmp.lt.s32.totalorder %s34, 1
        %s653 = scalar_select %p652, %s34, 1
        %s654 = scalar_lea.vmem %s8, %s653
      $region52: #{transformer_forward.4} parent=19 // pred_fallthru
        _
      // Predicated region
      $region53: #{transformer_forward.4} parent=19 // pred_check
        %p655 = pneg %p287
      $region54: #{transformer_forward.4} parent=19 // pred_check_branch
        %657 = sbr.rel (%p655) target = $region56
      $region55: #{transformer_forward.4} parent=19 // pred_region
        %p658 = scmp.lt.s32.totalorder %s34, 1
        %s659 = scalar_select %p658, %s34, 1
        %s660 = scalar_lea.vmem %s9, %s659
      $region56: #{transformer_forward.4} parent=19 // pred_fallthru
        _
      // Predicated region
      $region57: #{transformer_forward.4} parent=19 // pred_check
        %p661 = pneg %p313
      $region58: #{transformer_forward.4} parent=19 // pred_check_branch
        %663 = sbr.rel (%p661) target = $region60
      $region59: #{transformer_forward.4} parent=19 // pred_region
        %p664 = scmp.lt.s32.totalorder %s34, 1
        %s665 = scalar_select %p664, %s34, 1
        %s666 = smul.addr %s665, 4
        %s667 = smul.addr %s666, 4
        %s668 = scalar_lea.vmem %s10, %s667
      $region60: #{transformer_forward.4} parent=19 // pred_fallthru
        _
      // Predicated region
      $region61: #{transformer_forward.4} parent=19 // pred_check
        %p669 = pneg %p339
      $region62: #{transformer_forward.4} parent=19 // pred_check_branch
        %671 = sbr.rel (%p669) target = $region64
      $region63: #{transformer_forward.4} parent=19 // pred_region
        %p672 = scmp.lt.s32.totalorder %s34, 1
        %s673 = scalar_select %p672, %s34, 1
        %s674 = scalar_lea.vmem %s11, %s673
      $region64: #{transformer_forward.4} parent=19 // pred_fallthru
        _
      // Predicated region
      $region65: #{transformer_forward.4} parent=19 // pred_check
        %p675 = pneg %p365
      $region66: #{transformer_forward.4} parent=19 // pred_check_branch
        %677 = sbr.rel (%p675) target = $region68
      $region67: #{transformer_forward.4} parent=19 // pred_region
        %p678 = scmp.lt.s32.totalorder %s34, 1
        %s679 = scalar_select %p678, %s34, 1
        %s680 = smul.addr %s679, 4
        %s681 = smul.addr %s680, 4
        %s682 = scalar_lea.vmem %s12, %s681
      $region68: #{transformer_forward.4} parent=19 // pred_fallthru
        _
      // Predicated region
      $region69: #{transformer_forward.4} parent=19 // pred_check
        %p683 = pneg %p391
      $region70: #{transformer_forward.4} parent=19 // pred_check_branch
        %685 = sbr.rel (%p683) target = $region72
      $region71: #{transformer_forward.4} parent=19 // pred_region
        %p686 = scmp.lt.s32.totalorder %s34, 1
        %s687 = scalar_select %p686, %s34, 1
        %s688 = scalar_lea.vmem %s13, %s687
      $region72: #{transformer_forward.4} parent=19 // pred_fallthru
        _
      // Predicated region
      $region73: #{transformer_forward.4} parent=19 // pred_check
        %p689 = pneg %p417
      $region74: #{transformer_forward.4} parent=19 // pred_check_branch
        %691 = sbr.rel (%p689) target = $region76
      $region75: #{transformer_forward.4} parent=19 // pred_region
        %p692 = scmp.lt.s32.totalorder %s34, 1
        %s693 = scalar_select %p692, %s34, 1
        %s694 = scalar_lea.vmem %s14, %s693
      $region76: #{transformer_forward.4} parent=19 // pred_fallthru
        _
      // Predicated region
      $region77: #{transformer_forward.4} parent=19 // pred_check
        %p695 = pneg %p443
      $region78: #{transformer_forward.4} parent=19 // pred_check_branch
        %697 = sbr.rel (%p695) target = $region80
      $region79: #{transformer_forward.4} parent=19 // pred_region
        %p698 = scmp.lt.s32.totalorder %s34, 1
        %s699 = scalar_select %p698, %s34, 1
        %s700 = scalar_lea.vmem %s15, %s699
      $region80: #{transformer_forward.4} parent=19 // pred_fallthru
        _
      // Predicated region
      $region81: #{transformer_forward.4} parent=19 // pred_check
        %p701 = pneg %p469
      $region82: #{transformer_forward.4} parent=19 // pred_check_branch
        %703 = sbr.rel (%p701) target = $region84
      $region83: #{transformer_forward.4} parent=19 // pred_region
        %p704 = scmp.lt.s32.totalorder %s34, 1
        %s705 = scalar_select %p704, %s34, 1
        %s706 = smul.addr %s705, 4
        %s707 = smul.addr %s706, 4
        %s708 = scalar_lea.vmem %s16, %s707
      $region84: #{transformer_forward.4} parent=19 // pred_fallthru
        _
      // Predicated region
      $region85: #{transformer_forward.4} parent=19 // pred_check
        %p709 = pneg %p495
      $region86: #{transformer_forward.4} parent=19 // pred_check_branch
        %711 = sbr.rel (%p709) target = $region88
      $region87: #{transformer_forward.4} parent=19 // pred_region
        %p712 = scmp.lt.s32.totalorder %s34, 1
        %s713 = scalar_select %p712, %s34, 1
        %s714 = scalar_lea.vmem %s17, %s713
      $region88: #{transformer_forward.4} parent=19 // pred_fallthru
        _
      // Predicated region
      $region89: #{transformer_forward.4} parent=19 // pred_check
        %p715 = pneg %p521
      $region90: #{transformer_forward.4} parent=19 // pred_check_branch
        %717 = sbr.rel (%p715) target = $region92
      $region91: #{transformer_forward.4} parent=19 // pred_region
        %p718 = scmp.lt.s32.totalorder %s34, 1
        %s719 = scalar_select %p718, %s34, 1
        %s720 = scalar_lea.vmem %s18, %s719
      $region92: #{transformer_forward.4} parent=19 // pred_fallthru
        _
      // Predicated region
      $region93: #{transformer_forward.4} parent=19 // pred_check
        %p721 = pneg %p547
      $region94: #{transformer_forward.4} parent=19 // pred_check_branch
        %723 = sbr.rel (%p721) target = $region96
      $region95: #{transformer_forward.4} parent=19 // pred_region
        %p724 = scmp.lt.s32.totalorder %s34, 1
        %s725 = scalar_select %p724, %s34, 1
        %s726 = scalar_lea.vmem %s19, %s725
      $region96: #{transformer_forward.4} parent=19 // pred_fallthru
        _
    $region20: #{transformer_forward.4} parent=5 // pred_fallthru
      _
    %p727 = scmp.le.s32.totalorder 1, %s26
    %p728 = scmp.lt.s32.totalorder %s26, 5
    %p729 = pnand %p727, %p728
    %p730 = pneg %p729
    // Predicated region
    $region97: #{transformer_forward.4} parent=5 // pred_check
      _
    $region98: #{transformer_forward.4} parent=5 // pred_check_branch
      %732 = sbr.rel (%p729) target = $region100
    $region99: #{transformer_forward.4} parent=5 // pred_region
      %s733 = ssub.s32 %s26, 1
      %p734 = scmp.lt.s32.totalorder %s35, 1
      %s735 = scalar_select %p734, %s35, 1
      %s736 = smul.addr %s735, 8
      %s737 = scalar_lea.vmem %s0, %s736
      %p738 = pneg %p64
      %p739 = pneg %p61
      %p740 = scmp.lt.s32.totalorder %s35, 1
      %s741 = scalar_select %p740, %s35, 1
      %s742 = smul.addr %s741, 8
      %s743 = scalar_lea.vmem %s1, %s742
      %p744 = pneg %p90
      %p745 = pneg %p87
      %p746 = pneg %p111
      %p747 = pneg %p108
      %p748 = scmp.lt.s32.totalorder %s35, 1
      %s749 = scalar_select %p748, %s35, 1
      %s750 = scalar_lea.vmem %s3, %s749
      %p751 = pneg %p137
      %p752 = pneg %p134
      %p753 = scmp.lt.s32.totalorder %s36, 1
      %s754 = scalar_select %p753, %s36, 1
      %s755 = smul.addr %s754, 4
      %s756 = smul.addr %s755, 4
      %s757 = scalar_lea.vmem %s4, %s756
      %p758 = pneg %p163
      %p759 = pneg %p160
      %p760 = scmp.lt.s32.totalorder %s36, 1
      %s761 = scalar_select %p760, %s36, 1
      %s762 = scalar_lea.vmem %s5, %s761
      %p763 = pneg %p189
      %p764 = pneg %p186
      %p765 = scmp.lt.s32.totalorder %s36, 1
      %s766 = scalar_select %p765, %s36, 1
      %s767 = smul.addr %s766, 4
      %s768 = smul.addr %s767, 4
      %s769 = scalar_lea.vmem %s6, %s768
      %p770 = pneg %p215
      %p771 = pneg %p212
      %p772 = scmp.lt.s32.totalorder %s36, 1
      %s773 = scalar_select %p772, %s36, 1
      %s774 = scalar_lea.vmem %s7, %s773
      %p775 = pneg %p241
      %p776 = pneg %p238
      %p777 = scmp.lt.s32.totalorder %s36, 1
      %s778 = scalar_select %p777, %s36, 1
      %s779 = scalar_lea.vmem %s8, %s778
      %p780 = pneg %p267
      %p781 = pneg %p264
      %p782 = scmp.lt.s32.totalorder %s36, 1
      %s783 = scalar_select %p782, %s36, 1
      %s784 = scalar_lea.vmem %s9, %s783
      %p785 = pneg %p293
      %p786 = pneg %p290
      %p787 = scmp.lt.s32.totalorder %s36, 1
      %s788 = scalar_select %p787, %s36, 1
      %s789 = smul.addr %s788, 4
      %s790 = smul.addr %s789, 4
      %s791 = scalar_lea.vmem %s10, %s790
      %p792 = pneg %p319
      %p793 = pneg %p316
      %p794 = scmp.lt.s32.totalorder %s36, 1
      %s795 = scalar_select %p794, %s36, 1
      %s796 = scalar_lea.vmem %s11, %s795
      %p797 = pneg %p345
      %p798 = pneg %p342
      %p799 = scmp.lt.s32.totalorder %s36, 1
      %s800 = scalar_select %p799, %s36, 1
      %s801 = smul.addr %s800, 4
      %s802 = smul.addr %s801, 4
      %s803 = scalar_lea.vmem %s12, %s802
      %p804 = pneg %p371
      %p805 = pneg %p368
      %p806 = scmp.lt.s32.totalorder %s36, 1
      %s807 = scalar_select %p806, %s36, 1
      %s808 = scalar_lea.vmem %s13, %s807
      %p809 = pneg %p397
      %p810 = pneg %p394
      %p811 = scmp.lt.s32.totalorder %s36, 1
      %s812 = scalar_select %p811, %s36, 1
      %s813 = scalar_lea.vmem %s14, %s812
      %p814 = pneg %p423
      %p815 = pneg %p420
      %p816 = scmp.lt.s32.totalorder %s36, 1
      %s817 = scalar_select %p816, %s36, 1
      %s818 = scalar_lea.vmem %s15, %s817
      %p819 = pneg %p449
      %p820 = pneg %p446
      %p821 = scmp.lt.s32.totalorder %s36, 1
      %s822 = scalar_select %p821, %s36, 1
      %s823 = smul.addr %s822, 4
      %s824 = smul.addr %s823, 4
      %s825 = scalar_lea.vmem %s16, %s824
      %p826 = pneg %p475
      %p827 = pneg %p472
      %p828 = scmp.lt.s32.totalorder %s36, 1
      %s829 = scalar_select %p828, %s36, 1
      %s830 = scalar_lea.vmem %s17, %s829
      %p831 = pneg %p501
      %p832 = pneg %p498
      %p833 = scmp.lt.s32.totalorder %s36, 1
      %s834 = scalar_select %p833, %s36, 1
      %s835 = scalar_lea.vmem %s18, %s834
      %p836 = pneg %p527
      %p837 = pneg %p524
      %p838 = scmp.lt.s32.totalorder %s36, 1
      %s839 = scalar_select %p838, %s36, 1
      %s840 = scalar_lea.vmem %s19, %s839
      %p841 = pneg %p553
      %p842 = pneg %p550
      %p843 = pneg %p579
      %p844 = pneg %p576
      %p845 = scmp.lt.s32.totalorder %s35, 1
      %s846 = scalar_select %p845, %s35, 1
      %s847 = smul.addr %s846, 8
      %s848 = scalar_lea.vmem %s20, %s847
      %p849 = scmp.lt.s32.totalorder %s35, 1
      %s850 = scalar_select %p849, %s35, 1
      %s851 = smul.addr %s850, 8
      %s852 = scalar_lea.vmem %s0, %s851
      %p853 = scmp.lt.s32.totalorder %s35, 1
      %s854 = scalar_select %p853, %s35, 1
      %s855 = smul.addr %s854, 8
      %s856 = scalar_lea.vmem %s1, %s855
      %p857 = scmp.lt.s32.totalorder %s35, 1
      %s858 = scalar_select %p857, %s35, 1
      %s859 = scalar_lea.vmem %s3, %s858
      %p860 = scmp.lt.s32.totalorder %s36, 1
      %s861 = scalar_select %p860, %s36, 1
      %s862 = smul.addr %s861, 4
      %s863 = smul.addr %s862, 4
      %s864 = scalar_lea.vmem %s4, %s863
      %p865 = scmp.lt.s32.totalorder %s36, 1
      %s866 = scalar_select %p865, %s36, 1
      %s867 = scalar_lea.vmem %s5, %s866
      %p868 = scmp.lt.s32.totalorder %s36, 1
      %s869 = scalar_select %p868, %s36, 1
      %s870 = smul.addr %s869, 4
      %s871 = smul.addr %s870, 4
      %s872 = scalar_lea.vmem %s6, %s871
      %p873 = scmp.lt.s32.totalorder %s36, 1
      %s874 = scalar_select %p873, %s36, 1
      %s875 = scalar_lea.vmem %s7, %s874
      %p876 = scmp.lt.s32.totalorder %s36, 1
      %s877 = scalar_select %p876, %s36, 1
      %s878 = scalar_lea.vmem %s8, %s877
      %p879 = scmp.lt.s32.totalorder %s36, 1
      %s880 = scalar_select %p879, %s36, 1
      %s881 = scalar_lea.vmem %s9, %s880
      %p882 = scmp.lt.s32.totalorder %s36, 1
      %s883 = scalar_select %p882, %s36, 1
      %s884 = smul.addr %s883, 4
      %s885 = smul.addr %s884, 4
      %s886 = scalar_lea.vmem %s10, %s885
      %p887 = scmp.lt.s32.totalorder %s36, 1
      %s888 = scalar_select %p887, %s36, 1
      %s889 = scalar_lea.vmem %s11, %s888
      %p890 = scmp.lt.s32.totalorder %s36, 1
      %s891 = scalar_select %p890, %s36, 1
      %s892 = smul.addr %s891, 4
      %s893 = smul.addr %s892, 4
      %s894 = scalar_lea.vmem %s12, %s893
      %p895 = scmp.lt.s32.totalorder %s36, 1
      %s896 = scalar_select %p895, %s36, 1
      %s897 = scalar_lea.vmem %s13, %s896
      %p898 = scmp.lt.s32.totalorder %s36, 1
      %s899 = scalar_select %p898, %s36, 1
      %s900 = scalar_lea.vmem %s14, %s899
      %p901 = scmp.lt.s32.totalorder %s36, 1
      %s902 = scalar_select %p901, %s36, 1
      %s903 = scalar_lea.vmem %s15, %s902
      %p904 = scmp.lt.s32.totalorder %s36, 1
      %s905 = scalar_select %p904, %s36, 1
      %s906 = smul.addr %s905, 4
      %s907 = smul.addr %s906, 4
      %s908 = scalar_lea.vmem %s16, %s907
      %p909 = scmp.lt.s32.totalorder %s36, 1
      %s910 = scalar_select %p909, %s36, 1
      %s911 = scalar_lea.vmem %s17, %s910
      %p912 = scmp.lt.s32.totalorder %s36, 1
      %s913 = scalar_select %p912, %s36, 1
      %s914 = scalar_lea.vmem %s18, %s913
      %p915 = scmp.lt.s32.totalorder %s36, 1
      %s916 = scalar_select %p915, %s36, 1
      %s917 = scalar_lea.vmem %s19, %s916
      %p918 = scmp.lt.s32.totalorder %s35, 1
      %s919 = scalar_select %p918, %s35, 1
      %s920 = smul.addr %s919, 8
      %s921 = scalar_lea.vmem %s20, %s920
      %p923 = scmp.eq.s32.totalorder %s36, 0
      // Predicated region
      $region101: #{transformer_forward.4} parent=99 // pred_check
        %p924 = pneg %p923
      $region102: #{transformer_forward.4} parent=99 // pred_check_branch
        %926 = sbr.rel (%p924) target = $region104
      $region103: #{transformer_forward.4} parent=99 // pred_region
        %v927 = vld [vmem:[%s852] sm:$0xff]
        %vm928 = vcmask 261120
        %929 = vst.msk [vmem:[#allocation2] sm:$0xff] %vm928, %v927
      $region104: #{transformer_forward.4} parent=99 // pred_fallthru
        _
      %v930 = vld [vmem:[#allocation2] sm:$0xff]
      %v931 = vld [vmem:[%s856] sm:$0xff]
      %v932 = vld [vmem:[%s2] sm:$0xff]
      %v933 = vld [vmem:[%s859] sm:$0x1]
      %v935 = vperm.slane %v933, 0
      %v937 = vadd.f32 %v932, %v935
      %v938 = vld [vmem:[%s864] sm:$0xf]
      %v939 = vld [vmem:[%s864 + $0x4] sm:$0xf]
      %v940 = vld [vmem:[%s864 + $0x8] sm:$0xf]
      %v941 = vld [vmem:[%s864 + $0xc] sm:$0xf]
      %v942 = vld [vmem:[%s867] sm:$0x1]
      %v943 = vld [vmem:[%s872] sm:$0xf]
      %v944 = vld [vmem:[%s872 + $0x4] sm:$0xf]
      %v945 = vld [vmem:[%s872 + $0x8] sm:$0xf]
      %v946 = vld [vmem:[%s872 + $0xc] sm:$0xf]
      %v947 = vld [vmem:[%s875] sm:$0x1]
      %v948 = vpack.c.bf16 %v930, %v930
      %v950 = vperm.slane %v942, 0
      %v956 = vunpack.c.l.b16 %v938
      %v957 = vunpack.c.l.b16 %v939
      %v958 = vunpack.c.l.b16 %v940
      %v959 = vunpack.c.l.b16 %v941
      %v960 = vpack.c.b16 %v957, %v956
      %v961 = vpack.c.b16 %v959, %v958
      %vm964 = vcmask 261120
      %v966 = vsel %vm964, %v948, 0
      %968 = vmatpush.bf16.msra.mxu0 0
      %969 = vmatpush.bf16.msra.mxu0 0
      %970 = vmatpush.bf16.msra.mxu0 0
      %971 = vmatpush.bf16.msra.mxu0 0
      %972 = vmatpush.bf16.msra.mxu0 0
      %973 = vmatpush.bf16.msra.mxu0 0
      %974 = vmatpush.bf16.msra.mxu0 %v961
      %975 = vmatpush.bf16.msra.mxu0 %v960
      %976 = vmatmul.bf16.gmra.mxu0 %v966
      %v977 = vpop.f32.mrf.mxu0
      %v978 = vadd.f32 %v950, %v977
      %v979 = vpop.f32.mrf.mxu0
      %980 = vdwg.mxu0
      %v981 = vpack.c.bf16 %v978, %v978
      %983 = vrot.lane.b32.xlu0 %v978, 96
      %v984 = vpop.permute.xlu0 %983
      %986 = vxpose.xlu0.b32.start [1/16] %v984, 128
      %987 = vxpose.xlu0.b32.cont [2/16] 0.0, 128
      %988 = vxpose.xlu0.b32.cont [3/16] 0.0, 128
      %989 = vxpose.xlu0.b32.cont [4/16] 0.0, 128
      %990 = vxpose.xlu0.b32.cont [5/16] 0.0, 128
      %991 = vxpose.xlu0.b32.cont [6/16] 0.0, 128
      %992 = vxpose.xlu0.b32.cont [7/16] 0.0, 128
      %993 = vxpose.xlu0.b32.cont [8/16] 0.0, 128
      %994 = vxpose.xlu0.b32.cont [9/16] 0.0, 128
      %995 = vxpose.xlu0.b32.cont [10/16] 0.0, 128
      %996 = vxpose.xlu0.b32.cont [11/16] 0.0, 128
      %997 = vxpose.xlu0.b32.cont [12/16] 0.0, 128
      %998 = vxpose.xlu0.b32.cont [13/16] 0.0, 128
      %999 = vxpose.xlu0.b32.cont [14/16] 0.0, 128
      %1000 = vxpose.xlu0.b32.cont [15/16] 0.0, 128
      %1001 = vxpose.xlu0.b32.end [16/16] 0.0, 128
      %v1002 = vpop.trf.xlu0
      %v1003 = vpop.trf.xlu0
      %v1004 = vpop.trf.xlu0
      %v1005 = vpop.trf.xlu0
      %v1006 = vpop.trf.xlu0
      %v1007 = vpop.trf.xlu0
      %v1008 = vpop.trf.xlu0
      %v1009 = vpop.trf.xlu0
      %v1010 = vpop.trf.xlu0
      %v1011 = vpop.trf.xlu0
      %v1012 = vpop.trf.xlu0
      %v1013 = vpop.trf.xlu0
      %v1014 = vpop.trf.xlu0
      %v1015 = vpop.trf.xlu0
      %v1016 = vpop.trf.xlu0
      %v1017 = vpop.trf.xlu0
      %v1018 = vpack.c.bf16 %v1002, %v1002
      %v1019 = vpack.c.bf16 %v1003, %v1003
      %v1020 = vpack.c.bf16 %v1004, %v1004
      %v1021 = vpack.c.bf16 %v1005, %v1005
      %vm1022 = vcmask 64512
      %v1024 = vsel %vm1022, %v981, 0
      %vm1026 = vcmask 1043456
      %v1028 = vsel %vm1026, %v1018, 0
      %1030 = vmatpush.bf16.msra.mxu0 0
      %1031 = vmatpush.bf16.msra.mxu0 0
      %1032 = vmatpush.bf16.msra.mxu0 0
      %1033 = vmatpush.bf16.msra.mxu0 0
      %1034 = vmatpush.bf16.msra.mxu0 0
      %1035 = vmatpush.bf16.msra.mxu0 0
      %1036 = vmatpush.bf16.msra.mxu0 0
      %1037 = vmatpush.bf16.msra.mxu0 %v1028
      %1038 = vmatmul.bf16.gmra.mxu0 %v1024
      %v1039 = vpop.f32.mrf.mxu0
      %v1040 = vadd.f32 %v937, %v1039
      %v1041 = vpop.f32.mrf.mxu0
      %1042 = vdwg.mxu0
      %v1043 = vsel %vm1022, %v1040, -inf
      %1044 = vmax.xlane.f32.xlu0 %v1043
      %v1045 = vpop.xlane.xlu0 %1044
      %v1046 = vsub.f32 %v1040, %v1045
      %v1047 = vmul.f32 %v1046, 1.442695
      %v1048 = vpow.pop %v1047
      %v1049 = vsel %vm1022, %v1048, 0.0
      %1050 = vadd.xlane.f32.xlu0 %v1049
      %v1051 = vpop.xlane.xlu0 %1050
      %v1052 = vrcp.pop %v1051
      %v1053 = vmul.f32 %v1048, %v1052
      %v1054 = vpack.c.bf16 %v1053, %v1053
      %v1056 = vunpack.c.l.b16 %v981
      %v1057 = vpack.c.b16 %v1056, %v1056
      %1058 = vrot.lane.b32.xlu0 %v1057, 64
      %v1059 = vpop.permute.xlu0 %1058
      %v1061 = vsel %vm1022, %v1054, 0
      %v1064 = vsel %vm1026, %v1059, 0
      %1066 = vmatpush.bf16.msra.mxu0 0
      %1067 = vmatpush.bf16.msra.mxu0 0
      %1068 = vmatpush.bf16.msra.mxu0 0
      %1069 = vmatpush.bf16.msra.mxu0 0
      %1070 = vmatpush.bf16.msra.mxu0 0
      %1071 = vmatpush.bf16.msra.mxu0 0
      %1072 = vmatpush.bf16.msra.mxu0 0
      %1073 = vmatpush.bf16.msra.mxu0 %v1064
      %1074 = vmatmul.bf16.gmra.mxu0 %v1061
      %v1075 = vpop.f32.mrf.mxu0
      %v1076 = vadd.f32 0.0, %v1075
      %v1077 = vpop.f32.mrf.mxu0
      %1078 = vdwg.mxu0
      %1079 = vst.msk [vmem:[#allocation3] sm:$0xff] %vm1022, %v1076
      %1080 = vrot.lane.b32.xlu0 %v1057, 120
      %v1081 = vpop.permute.xlu0 %1080
      %v1083 = vsel %vm1022, %v1081, 0
      %v1086 = vsel %vm1026, %v1019, 0
      %1088 = vmatpush.bf16.msra.mxu0 0
      %1089 = vmatpush.bf16.msra.mxu0 0
      %1090 = vmatpush.bf16.msra.mxu0 0
      %1091 = vmatpush.bf16.msra.mxu0 0
      %1092 = vmatpush.bf16.msra.mxu0 0
      %1093 = vmatpush.bf16.msra.mxu0 0
      %1094 = vmatpush.bf16.msra.mxu0 0
      %1095 = vmatpush.bf16.msra.mxu0 %v1086
      %1096 = vmatmul.bf16.gmra.mxu0 %v1083
      %v1097 = vpop.f32.mrf.mxu0
      %v1098 = vadd.f32 %v937, %v1097
      %v1099 = vpop.f32.mrf.mxu0
      %1100 = vdwg.mxu0
      %v1101 = vsel %vm1022, %v1098, -inf
      %1102 = vmax.xlane.f32.xlu0 %v1101
      %v1103 = vpop.xlane.xlu0 %1102
      %v1104 = vsub.f32 %v1098, %v1103
      %v1105 = vmul.f32 %v1104, 1.442695
      %v1106 = vpow.pop %v1105
      %v1107 = vsel %vm1022, %v1106, 0.0
      %1108 = vadd.xlane.f32.xlu0 %v1107
      %v1109 = vpop.xlane.xlu0 %1108
      %v1110 = vrcp.pop %v1109
      %v1111 = vmul.f32 %v1106, %v1110
      %v1112 = vpack.c.bf16 %v1111, %v1111
      %1113 = vrot.lane.b32.xlu0 %v1057, 56
      %v1114 = vpop.permute.xlu0 %1113
      %v1116 = vsel %vm1022, %v1112, 0
      %v1119 = vsel %vm1026, %v1114, 0
      %1121 = vmatpush.bf16.msra.mxu0 0
      %1122 = vmatpush.bf16.msra.mxu0 0
      %1123 = vmatpush.bf16.msra.mxu0 0
      %1124 = vmatpush.bf16.msra.mxu0 0
      %1125 = vmatpush.bf16.msra.mxu0 0
      %1126 = vmatpush.bf16.msra.mxu0 0
      %1127 = vmatpush.bf16.msra.mxu0 0
      %1128 = vmatpush.bf16.msra.mxu0 %v1119
      %1129 = vmatmul.bf16.gmra.mxu0 %v1116
      %v1130 = vpop.f32.mrf.mxu0
      %v1131 = vadd.f32 0.0, %v1130
      %v1132 = vpop.f32.mrf.mxu0
      %1133 = vdwg.mxu0
      %1135 = vrot.lane.b32.xlu0 %v1131, 8
      %v1136 = vpop.permute.xlu0 %1135
      %vm1138 = vcmask 130112
      %1139 = vst.msk [vmem:[#allocation3] sm:$0xff] %vm1138, %v1136
      %1140 = vrot.lane.b32.xlu0 %v1057, 112
      %v1141 = vpop.permute.xlu0 %1140
      %v1143 = vsel %vm1022, %v1141, 0
      %v1146 = vsel %vm1026, %v1020, 0
      %1148 = vmatpush.bf16.msra.mxu0 0
      %1149 = vmatpush.bf16.msra.mxu0 0
      %1150 = vmatpush.bf16.msra.mxu0 0
      %1151 = vmatpush.bf16.msra.mxu0 0
      %1152 = vmatpush.bf16.msra.mxu0 0
      %1153 = vmatpush.bf16.msra.mxu0 0
      %1154 = vmatpush.bf16.msra.mxu0 0
      %1155 = vmatpush.bf16.msra.mxu0 %v1146
      %1156 = vmatmul.bf16.gmra.mxu0 %v1143
      %v1157 = vpop.f32.mrf.mxu0
      %v1158 = vadd.f32 %v937, %v1157
      %v1159 = vpop.f32.mrf.mxu0
      %1160 = vdwg.mxu0
      %v1161 = vsel %vm1022, %v1158, -inf
      %1162 = vmax.xlane.f32.xlu0 %v1161
      %v1163 = vpop.xlane.xlu0 %1162
      %v1164 = vsub.f32 %v1158, %v1163
      %v1165 = vmul.f32 %v1164, 1.442695
      %v1166 = vpow.pop %v1165
      %v1167 = vsel %vm1022, %v1166, 0.0
      %1168 = vadd.xlane.f32.xlu0 %v1167
      %v1169 = vpop.xlane.xlu0 %1168
      %v1170 = vrcp.pop %v1169
      %v1171 = vmul.f32 %v1166, %v1170
      %v1172 = vpack.c.bf16 %v1171, %v1171
      %1173 = vrot.lane.b32.xlu0 %v1057, 48
      %v1174 = vpop.permute.xlu0 %1173
      %v1176 = vsel %vm1022, %v1172, 0
      %v1179 = vsel %vm1026, %v1174, 0
      %1181 = vmatpush.bf16.msra.mxu0 0
      %1182 = vmatpush.bf16.msra.mxu0 0
      %1183 = vmatpush.bf16.msra.mxu0 0
      %1184 = vmatpush.bf16.msra.mxu0 0
      %1185 = vmatpush.bf16.msra.mxu0 0
      %1186 = vmatpush.bf16.msra.mxu0 0
      %1187 = vmatpush.bf16.msra.mxu0 0
      %1188 = vmatpush.bf16.msra.mxu0 %v1179
      %1189 = vmatmul.bf16.gmra.mxu0 %v1176
      %v1190 = vpop.f32.mrf.mxu0
      %v1191 = vadd.f32 0.0, %v1190
      %v1192 = vpop.f32.mrf.mxu0
      %1193 = vdwg.mxu0
      %1195 = vrot.lane.b32.xlu0 %v1191, 16
      %v1196 = vpop.permute.xlu0 %1195
      %vm1198 = vcmask 195712
      %1199 = vst.msk [vmem:[#allocation3] sm:$0xff] %vm1198, %v1196
      %1200 = vrot.lane.b32.xlu0 %v1057, 104
      %v1201 = vpop.permute.xlu0 %1200
      %v1203 = vsel %vm1022, %v1201, 0
      %v1206 = vsel %vm1026, %v1021, 0
      %1208 = vmatpush.bf16.msra.mxu0 0
      %1209 = vmatpush.bf16.msra.mxu0 0
      %1210 = vmatpush.bf16.msra.mxu0 0
      %1211 = vmatpush.bf16.msra.mxu0 0
      %1212 = vmatpush.bf16.msra.mxu0 0
      %1213 = vmatpush.bf16.msra.mxu0 0
      %1214 = vmatpush.bf16.msra.mxu0 0
      %1215 = vmatpush.bf16.msra.mxu0 %v1206
      %1216 = vmatmul.bf16.gmra.mxu0 %v1203
      %v1217 = vpop.f32.mrf.mxu0
      %v1218 = vadd.f32 %v937, %v1217
      %v1219 = vpop.f32.mrf.mxu0
      %1220 = vdwg.mxu0
      %v1221 = vsel %vm1022, %v1218, -inf
      %1222 = vmax.xlane.f32.xlu0 %v1221
      %v1223 = vpop.xlane.xlu0 %1222
      %v1224 = vsub.f32 %v1218, %v1223
      %v1225 = vmul.f32 %v1224, 1.442695
      %v1226 = vpow.pop %v1225
      %v1227 = vsel %vm1022, %v1226, 0.0
      %1228 = vadd.xlane.f32.xlu0 %v1227
      %v1229 = vpop.xlane.xlu0 %1228
      %v1230 = vrcp.pop %v1229
      %v1231 = vmul.f32 %v1226, %v1230
      %v1232 = vpack.c.bf16 %v1231, %v1231
      %1233 = vrot.lane.b32.xlu0 %v1057, 40
      %v1234 = vpop.permute.xlu0 %1233
      %v1236 = vsel %vm1022, %v1232, 0
      %v1239 = vsel %vm1026, %v1234, 0
      %1241 = vmatpush.bf16.msra.mxu0 0
      %1242 = vmatpush.bf16.msra.mxu0 0
      %1243 = vmatpush.bf16.msra.mxu0 0
      %1244 = vmatpush.bf16.msra.mxu0 0
      %1245 = vmatpush.bf16.msra.mxu0 0
      %1246 = vmatpush.bf16.msra.mxu0 0
      %1247 = vmatpush.bf16.msra.mxu0 0
      %1248 = vmatpush.bf16.msra.mxu0 %v1239
      %1249 = vmatmul.bf16.gmra.mxu0 %v1236
      %v1250 = vpop.f32.mrf.mxu0
      %v1251 = vadd.f32 0.0, %v1250
      %v1252 = vpop.f32.mrf.mxu0
      %1253 = vdwg.mxu0
      %1255 = vrot.lane.b32.xlu0 %v1251, 24
      %v1256 = vpop.permute.xlu0 %1255
      %vm1258 = vcmask 261312
      %1259 = vst.msk [vmem:[#allocation3] sm:$0xff] %vm1258, %v1256
      %v1260 = vld [vmem:[#allocation3] sm:$0xff]
      %v1261 = vpack.c.bf16 %v1260, %v1260
      %v1263 = vperm.slane %v947, 0
      %v1269 = vunpack.c.l.b16 %v943
      %v1270 = vunpack.c.l.b16 %v944
      %v1271 = vunpack.c.l.b16 %v945
      %v1272 = vunpack.c.l.b16 %v946
      %v1273 = vpack.c.b16 %v1270, %v1269
      %v1274 = vpack.c.b16 %v1272, %v1271
      %v1278 = vsel %vm964, %v1261, 0
      %1280 = vmatpush.bf16.msra.mxu0 0
      %1281 = vmatpush.bf16.msra.mxu0 0
      %1282 = vmatpush.bf16.msra.mxu0 0
      %1283 = vmatpush.bf16.msra.mxu0 0
      %1284 = vmatpush.bf16.msra.mxu0 0
      %1285 = vmatpush.bf16.msra.mxu0 0
      %1286 = vmatpush.bf16.msra.mxu0 %v1274
      %1287 = vmatpush.bf16.msra.mxu0 %v1273
      %1288 = vmatmul.bf16.gmra.mxu0 %v1278
      %v1289 = vpop.f32.mrf.mxu0
      %v1290 = vadd.f32 %v1263, %v1289
      %v1291 = vpop.f32.mrf.mxu0
      %1292 = vdwg.mxu0
      %v1293 = vld [vmem:[%s878] sm:$0x1]
      %v1294 = vld [vmem:[%s881] sm:$0x1]
      %v1295 = vadd.f32 %v930, %v1290
      %v1296 = vsel %vm964, %v1295, 0.0
      %1297 = vadd.xlane.f32.xlu0 %v1296
      %v1298 = vpop.xlane.xlu0 %1297
      %v1299 = vrcp.pop 32.0
      %v1300 = vmul.f32 32.0, %v1299
      %v1301 = vsub.f32 1.0, %v1300
      %v1302 = vmul.f32 %v1299, %v1301
      %v1303 = vadd.f32 %v1299, %v1302
      %vm1304 = vweird.f32 %v1299
      %v1305 = vsel %vm1304, %v1299, %v1303
      %v1306 = vmul.f32 %v1298, %v1305
      %v1307 = vsub.f32 %v1295, %v1306
      %v1308 = vmul.f32 %v1307, %v1307
      %v1309 = vsel %vm964, %v1308, 0.0
      %1310 = vadd.xlane.f32.xlu0 %v1309
      %v1311 = vpop.xlane.xlu0 %1310
      %v1312 = vmul.f32 %v1311, %v1305
      %v1313 = vadd.f32 %v1312, 1e-05
      %v1314 = vrsqrt.pop %v1313
      %v1315 = vmul.f32 %v1314, %v1313
      %v1316 = vmul.f32 %v1315, %v1314
      %v1317 = vmul.f32 0.5, %v1316
      %v1318 = vsub.f32 1.5, %v1317
      %v1319 = vmul.f32 %v1314, %v1318
      %vm1320 = vweird.f32 %v1313
      %vm1321 = vweird.f32 %v1314
      %vm1322 = vmor %vm1320, %vm1321
      %v1323 = vsel %vm1322, %v1314, %v1319
      %v1324 = vmul.f32 %v1307, %v1323
      %v1326 = vperm.slane %v1293, 0
      %v1328 = vmul.f32 %v1324, %v1326
      %v1330 = vperm.slane %v1294, 0
      %v1332 = vadd.f32 %v1328, %v1330
      %v1333 = vld [vmem:[%s886] sm:$0xf]
      %v1334 = vld [vmem:[%s886 + $0x4] sm:$0xf]
      %v1335 = vld [vmem:[%s886 + $0x8] sm:$0xf]
      %v1336 = vld [vmem:[%s886 + $0xc] sm:$0xf]
      %v1337 = vld [vmem:[%s889] sm:$0x1]
      %v1338 = vld [vmem:[%s894] sm:$0xf]
      %v1339 = vld [vmem:[%s894 + $0x4] sm:$0xf]
      %v1340 = vld [vmem:[%s894 + $0x8] sm:$0xf]
      %v1341 = vld [vmem:[%s894 + $0xc] sm:$0xf]
      %v1342 = vld [vmem:[%s897] sm:$0x1]
      %v1343 = vpack.c.bf16 %v1332, %v1332
      %v1345 = vperm.slane %v1337, 0
      %v1351 = vunpack.c.l.b16 %v1333
      %v1352 = vunpack.c.l.b16 %v1334
      %v1353 = vunpack.c.l.b16 %v1335
      %v1354 = vunpack.c.l.b16 %v1336
      %v1355 = vpack.c.b16 %v1352, %v1351
      %v1356 = vpack.c.b16 %v1354, %v1353
      %v1360 = vsel %vm964, %v1343, 0
      %1362 = vmatpush.bf16.msra.mxu0 0
      %1363 = vmatpush.bf16.msra.mxu0 0
      %1364 = vmatpush.bf16.msra.mxu0 0
      %1365 = vmatpush.bf16.msra.mxu0 0
      %1366 = vmatpush.bf16.msra.mxu0 0
      %1367 = vmatpush.bf16.msra.mxu0 0
      %1368 = vmatpush.bf16.msra.mxu0 %v1356
      %1369 = vmatpush.bf16.msra.mxu0 %v1355
      %1370 = vmatmul.bf16.gmra.mxu0 %v1360
      %v1371 = vpop.f32.mrf.mxu0
      %v1372 = vadd.f32 %v1345, %v1371
      %v1373 = vpop.f32.mrf.mxu0
      %1374 = vdwg.mxu0
      %v1375 = vpack.c.bf16 %v931, %v931
      %1376 = vrot.lane.b32.xlu0 %v1355, 96
      %v1377 = vpop.permute.xlu0 %1376
      %1378 = vrot.lane.b32.xlu0 %v1356, 96
      %v1379 = vpop.permute.xlu0 %1378
      %1382 = vrot.lane.b32.xlu0 %v1345, 96
      %v1383 = vpop.permute.xlu0 %1382
      %v1386 = vsel %vm964, %v1375, 0
      %1388 = vmatpush.bf16.msra.mxu0 0
      %1389 = vmatpush.bf16.msra.mxu0 0
      %1390 = vmatpush.bf16.msra.mxu0 0
      %1391 = vmatpush.bf16.msra.mxu0 0
      %1392 = vmatpush.bf16.msra.mxu0 0
      %1393 = vmatpush.bf16.msra.mxu0 0
      %1394 = vmatpush.bf16.msra.mxu0 %v1379
      %1395 = vmatpush.bf16.msra.mxu0 %v1377
      %1396 = vmatmul.bf16.gmra.mxu0 %v1386
      %v1397 = vpop.f32.mrf.mxu0
      %v1398 = vadd.f32 %v1383, %v1397
      %v1399 = vpop.f32.mrf.mxu0
      %1400 = vdwg.mxu0
      %v1401 = vpack.c.bf16 %v1372, %v1372
      %1402 = vxpose.xlu0.b32.start [1/16] %v1398, 128
      %1403 = vxpose.xlu0.b32.cont [2/16] 0.0, 128
      %1404 = vxpose.xlu0.b32.cont [3/16] 0.0, 128
      %1405 = vxpose.xlu0.b32.cont [4/16] 0.0, 128
      %1406 = vxpose.xlu0.b32.cont [5/16] 0.0, 128
      %1407 = vxpose.xlu0.b32.cont [6/16] 0.0, 128
      %1408 = vxpose.xlu0.b32.cont [7/16] 0.0, 128
      %1409 = vxpose.xlu0.b32.cont [8/16] 0.0, 128
      %1410 = vxpose.xlu0.b32.cont [9/16] 0.0, 128
      %1411 = vxpose.xlu0.b32.cont [10/16] 0.0, 128
      %1412 = vxpose.xlu0.b32.cont [11/16] 0.0, 128
      %1413 = vxpose.xlu0.b32.cont [12/16] 0.0, 128
      %1414 = vxpose.xlu0.b32.cont [13/16] 0.0, 128
      %1415 = vxpose.xlu0.b32.cont [14/16] 0.0, 128
      %1416 = vxpose.xlu0.b32.cont [15/16] 0.0, 128
      %1417 = vxpose.xlu0.b32.end [16/16] 0.0, 128
      %v1418 = vpop.trf.xlu0
      %v1419 = vpop.trf.xlu0
      %v1420 = vpop.trf.xlu0
      %v1421 = vpop.trf.xlu0
      %v1422 = vpop.trf.xlu0
      %v1423 = vpop.trf.xlu0
      %v1424 = vpop.trf.xlu0
      %v1425 = vpop.trf.xlu0
      %v1426 = vpop.trf.xlu0
      %v1427 = vpop.trf.xlu0
      %v1428 = vpop.trf.xlu0
      %v1429 = vpop.trf.xlu0
      %v1430 = vpop.trf.xlu0
      %v1431 = vpop.trf.xlu0
      %v1432 = vpop.trf.xlu0
      %v1433 = vpop.trf.xlu0
      %v1434 = vpack.c.bf16 %v1418, %v1418
      %v1435 = vpack.c.bf16 %v1419, %v1419
      %v1436 = vpack.c.bf16 %v1420, %v1420
      %v1437 = vpack.c.bf16 %v1421, %v1421
      %v1438 = vpack.c.bf16 %v1398, %v1398
      %v1440 = vsel %vm1022, %v1401, 0
      %v1443 = vsel %vm1026, %v1434, 0
      %1445 = vmatpush.bf16.msra.mxu0 0
      %1446 = vmatpush.bf16.msra.mxu0 0
      %1447 = vmatpush.bf16.msra.mxu0 0
      %1448 = vmatpush.bf16.msra.mxu0 0
      %1449 = vmatpush.bf16.msra.mxu0 0
      %1450 = vmatpush.bf16.msra.mxu0 0
      %1451 = vmatpush.bf16.msra.mxu0 0
      %1452 = vmatpush.bf16.msra.mxu0 %v1443
      %1453 = vmatmul.bf16.gmra.mxu0 %v1440
      %v1454 = vpop.f32.mrf.mxu0
      %v1455 = vadd.f32 0.0, %v1454
      %v1456 = vpop.f32.mrf.mxu0
      %1457 = vdwg.mxu0
      %v1458 = vsel %vm1022, %v1455, -inf
      %1459 = vmax.xlane.f32.xlu0 %v1458
      %v1460 = vpop.xlane.xlu0 %1459
      %v1461 = vsub.f32 %v1455, %v1460
      %v1462 = vmul.f32 %v1461, 1.442695
      %v1463 = vpow.pop %v1462
      %v1464 = vsel %vm1022, %v1463, 0.0
      %1465 = vadd.xlane.f32.xlu0 %v1464
      %v1466 = vpop.xlane.xlu0 %1465
      %v1467 = vrcp.pop %v1466
      %v1468 = vmul.f32 %v1463, %v1467
      %v1469 = vpack.c.bf16 %v1468, %v1468
      %v1471 = vunpack.c.l.b16 %v1438
      %v1472 = vpack.c.b16 %v1471, %v1471
      %1473 = vrot.lane.b32.xlu0 %v1472, 96
      %v1474 = vpop.permute.xlu0 %1473
      %v1476 = vsel %vm1022, %v1469, 0
      %v1479 = vsel %vm1026, %v1474, 0
      %1481 = vmatpush.bf16.msra.mxu0 0
      %1482 = vmatpush.bf16.msra.mxu0 0
      %1483 = vmatpush.bf16.msra.mxu0 0
      %1484 = vmatpush.bf16.msra.mxu0 0
      %1485 = vmatpush.bf16.msra.mxu0 0
      %1486 = vmatpush.bf16.msra.mxu0 0
      %1487 = vmatpush.bf16.msra.mxu0 0
      %1488 = vmatpush.bf16.msra.mxu0 %v1479
      %1489 = vmatmul.bf16.gmra.mxu0 %v1476
      %v1490 = vpop.f32.mrf.mxu0
      %v1491 = vadd.f32 0.0, %v1490
      %v1492 = vpop.f32.mrf.mxu0
      %1493 = vdwg.mxu0
      %1494 = vst.msk [vmem:[#allocation3] sm:$0xff] %vm1022, %v1491
      %v1496 = vunpack.c.l.b16 %v1401
      %v1497 = vpack.c.b16 %v1496, %v1496
      %1498 = vrot.lane.b32.xlu0 %v1497, 120
      %v1499 = vpop.permute.xlu0 %1498
      %v1501 = vsel %vm1022, %v1499, 0
      %v1504 = vsel %vm1026, %v1435, 0
      %1506 = vmatpush.bf16.msra.mxu0 0
      %1507 = vmatpush.bf16.msra.mxu0 0
      %1508 = vmatpush.bf16.msra.mxu0 0
      %1509 = vmatpush.bf16.msra.mxu0 0
      %1510 = vmatpush.bf16.msra.mxu0 0
      %1511 = vmatpush.bf16.msra.mxu0 0
      %1512 = vmatpush.bf16.msra.mxu0 0
      %1513 = vmatpush.bf16.msra.mxu0 %v1504
      %1514 = vmatmul.bf16.gmra.mxu0 %v1501
      %v1515 = vpop.f32.mrf.mxu0
      %v1516 = vadd.f32 0.0, %v1515
      %v1517 = vpop.f32.mrf.mxu0
      %1518 = vdwg.mxu0
      %v1519 = vsel %vm1022, %v1516, -inf
      %1520 = vmax.xlane.f32.xlu0 %v1519
      %v1521 = vpop.xlane.xlu0 %1520
      %v1522 = vsub.f32 %v1516, %v1521
      %v1523 = vmul.f32 %v1522, 1.442695
      %v1524 = vpow.pop %v1523
      %v1525 = vsel %vm1022, %v1524, 0.0
      %1526 = vadd.xlane.f32.xlu0 %v1525
      %v1527 = vpop.xlane.xlu0 %1526
      %v1528 = vrcp.pop %v1527
      %v1529 = vmul.f32 %v1524, %v1528
      %v1530 = vpack.c.bf16 %v1529, %v1529
      %1531 = vrot.lane.b32.xlu0 %v1472, 88
      %v1532 = vpop.permute.xlu0 %1531
      %v1534 = vsel %vm1022, %v1530, 0
      %v1537 = vsel %vm1026, %v1532, 0
      %1539 = vmatpush.bf16.msra.mxu0 0
      %1540 = vmatpush.bf16.msra.mxu0 0
      %1541 = vmatpush.bf16.msra.mxu0 0
      %1542 = vmatpush.bf16.msra.mxu0 0
      %1543 = vmatpush.bf16.msra.mxu0 0
      %1544 = vmatpush.bf16.msra.mxu0 0
      %1545 = vmatpush.bf16.msra.mxu0 0
      %1546 = vmatpush.bf16.msra.mxu0 %v1537
      %1547 = vmatmul.bf16.gmra.mxu0 %v1534
      %v1548 = vpop.f32.mrf.mxu0
      %v1549 = vadd.f32 0.0, %v1548
      %v1550 = vpop.f32.mrf.mxu0
      %1551 = vdwg.mxu0
      %1553 = vrot.lane.b32.xlu0 %v1549, 8
      %v1554 = vpop.permute.xlu0 %1553
      %1556 = vst.msk [vmem:[#allocation3] sm:$0xff] %vm1138, %v1554
      %1557 = vrot.lane.b32.xlu0 %v1497, 112
      %v1558 = vpop.permute.xlu0 %1557
      %v1560 = vsel %vm1022, %v1558, 0
      %v1563 = vsel %vm1026, %v1436, 0
      %1565 = vmatpush.bf16.msra.mxu0 0
      %1566 = vmatpush.bf16.msra.mxu0 0
      %1567 = vmatpush.bf16.msra.mxu0 0
      %1568 = vmatpush.bf16.msra.mxu0 0
      %1569 = vmatpush.bf16.msra.mxu0 0
      %1570 = vmatpush.bf16.msra.mxu0 0
      %1571 = vmatpush.bf16.msra.mxu0 0
      %1572 = vmatpush.bf16.msra.mxu0 %v1563
      %1573 = vmatmul.bf16.gmra.mxu0 %v1560
      %v1574 = vpop.f32.mrf.mxu0
      %v1575 = vadd.f32 0.0, %v1574
      %v1576 = vpop.f32.mrf.mxu0
      %1577 = vdwg.mxu0
      %v1578 = vsel %vm1022, %v1575, -inf
      %1579 = vmax.xlane.f32.xlu0 %v1578
      %v1580 = vpop.xlane.xlu0 %1579
      %v1581 = vsub.f32 %v1575, %v1580
      %v1582 = vmul.f32 %v1581, 1.442695
      %v1583 = vpow.pop %v1582
      %v1584 = vsel %vm1022, %v1583, 0.0
      %1585 = vadd.xlane.f32.xlu0 %v1584
      %v1586 = vpop.xlane.xlu0 %1585
      %v1587 = vrcp.pop %v1586
      %v1588 = vmul.f32 %v1583, %v1587
      %v1589 = vpack.c.bf16 %v1588, %v1588
      %1590 = vrot.lane.b32.xlu0 %v1472, 80
      %v1591 = vpop.permute.xlu0 %1590
      %v1593 = vsel %vm1022, %v1589, 0
      %v1596 = vsel %vm1026, %v1591, 0
      %1598 = vmatpush.bf16.msra.mxu0 0
      %1599 = vmatpush.bf16.msra.mxu0 0
      %1600 = vmatpush.bf16.msra.mxu0 0
      %1601 = vmatpush.bf16.msra.mxu0 0
      %1602 = vmatpush.bf16.msra.mxu0 0
      %1603 = vmatpush.bf16.msra.mxu0 0
      %1604 = vmatpush.bf16.msra.mxu0 0
      %1605 = vmatpush.bf16.msra.mxu0 %v1596
      %1606 = vmatmul.bf16.gmra.mxu0 %v1593
      %v1607 = vpop.f32.mrf.mxu0
      %v1608 = vadd.f32 0.0, %v1607
      %v1609 = vpop.f32.mrf.mxu0
      %1610 = vdwg.mxu0
      %1612 = vrot.lane.b32.xlu0 %v1608, 16
      %v1613 = vpop.permute.xlu0 %1612
      %1615 = vst.msk [vmem:[#allocation3] sm:$0xff] %vm1198, %v1613
      %1616 = vrot.lane.b32.xlu0 %v1497, 104
      %v1617 = vpop.permute.xlu0 %1616
      %v1619 = vsel %vm1022, %v1617, 0
      %v1622 = vsel %vm1026, %v1437, 0
      %1624 = vmatpush.bf16.msra.mxu0 0
      %1625 = vmatpush.bf16.msra.mxu0 0
      %1626 = vmatpush.bf16.msra.mxu0 0
      %1627 = vmatpush.bf16.msra.mxu0 0
      %1628 = vmatpush.bf16.msra.mxu0 0
      %1629 = vmatpush.bf16.msra.mxu0 0
      %1630 = vmatpush.bf16.msra.mxu0 0
      %1631 = vmatpush.bf16.msra.mxu0 %v1622
      %1632 = vmatmul.bf16.gmra.mxu0 %v1619
      %v1633 = vpop.f32.mrf.mxu0
      %v1634 = vadd.f32 0.0, %v1633
      %v1635 = vpop.f32.mrf.mxu0
      %1636 = vdwg.mxu0
      %v1637 = vsel %vm1022, %v1634, -inf
      %1638 = vmax.xlane.f32.xlu0 %v1637
      %v1639 = vpop.xlane.xlu0 %1638
      %v1640 = vsub.f32 %v1634, %v1639
      %v1641 = vmul.f32 %v1640, 1.442695
      %v1642 = vpow.pop %v1641
      %v1643 = vsel %vm1022, %v1642, 0.0
      %1644 = vadd.xlane.f32.xlu0 %v1643
      %v1645 = vpop.xlane.xlu0 %1644
      %v1646 = vrcp.pop %v1645
      %v1647 = vmul.f32 %v1642, %v1646
      %v1648 = vpack.c.bf16 %v1647, %v1647
      %1649 = vrot.lane.b32.xlu0 %v1472, 72
      %v1650 = vpop.permute.xlu0 %1649
      %v1652 = vsel %vm1022, %v1648, 0
      %v1655 = vsel %vm1026, %v1650, 0
      %1657 = vmatpush.bf16.msra.mxu0 0
      %1658 = vmatpush.bf16.msra.mxu0 0
      %1659 = vmatpush.bf16.msra.mxu0 0
      %1660 = vmatpush.bf16.msra.mxu0 0
      %1661 = vmatpush.bf16.msra.mxu0 0
      %1662 = vmatpush.bf16.msra.mxu0 0
      %1663 = vmatpush.bf16.msra.mxu0 0
      %1664 = vmatpush.bf16.msra.mxu0 %v1655
      %1665 = vmatmul.bf16.gmra.mxu0 %v1652
      %v1666 = vpop.f32.mrf.mxu0
      %v1667 = vadd.f32 0.0, %v1666
      %v1668 = vpop.f32.mrf.mxu0
      %1669 = vdwg.mxu0
      %1671 = vrot.lane.b32.xlu0 %v1667, 24
      %v1672 = vpop.permute.xlu0 %1671
      %1674 = vst.msk [vmem:[#allocation3] sm:$0xff] %vm1258, %v1672
      %v1675 = vld [vmem:[#allocation3] sm:$0xff]
      %v1676 = vpack.c.bf16 %v1675, %v1675
      %v1678 = vperm.slane %v1342, 0
      %v1684 = vunpack.c.l.b16 %v1338
      %v1685 = vunpack.c.l.b16 %v1339
      %v1686 = vunpack.c.l.b16 %v1340
      %v1687 = vunpack.c.l.b16 %v1341
      %v1688 = vpack.c.b16 %v1685, %v1684
      %v1689 = vpack.c.b16 %v1687, %v1686
      %v1693 = vsel %vm964, %v1676, 0
      %1695 = vmatpush.bf16.msra.mxu0 0
      %1696 = vmatpush.bf16.msra.mxu0 0
      %1697 = vmatpush.bf16.msra.mxu0 0
      %1698 = vmatpush.bf16.msra.mxu0 0
      %1699 = vmatpush.bf16.msra.mxu0 0
      %1700 = vmatpush.bf16.msra.mxu0 0
      %1701 = vmatpush.bf16.msra.mxu0 %v1689
      %1702 = vmatpush.bf16.msra.mxu0 %v1688
      %1703 = vmatmul.bf16.gmra.mxu0 %v1693
      %v1704 = vpop.f32.mrf.mxu0
      %v1705 = vadd.f32 %v1678, %v1704
      %v1706 = vpop.f32.mrf.mxu0
      %1707 = vdwg.mxu0
      %v1708 = vld [vmem:[%s900] sm:$0x1]
      %v1709 = vld [vmem:[%s903] sm:$0x1]
      %v1710 = vadd.f32 %v1332, %v1705
      %v1711 = vsel %vm964, %v1710, 0.0
      %1712 = vadd.xlane.f32.xlu0 %v1711
      %v1713 = vpop.xlane.xlu0 %1712
      %v1714 = vmul.f32 %v1713, %v1305
      %v1715 = vsub.f32 %v1710, %v1714
      %v1716 = vmul.f32 %v1715, %v1715
      %v1717 = vsel %vm964, %v1716, 0.0
      %1718 = vadd.xlane.f32.xlu0 %v1717
      %v1719 = vpop.xlane.xlu0 %1718
      %v1720 = vmul.f32 %v1719, %v1305
      %v1721 = vadd.f32 %v1720, 1e-05
      %v1722 = vrsqrt.pop %v1721
      %v1723 = vmul.f32 %v1722, %v1721
      %v1724 = vmul.f32 %v1723, %v1722
      %v1725 = vmul.f32 0.5, %v1724
      %v1726 = vsub.f32 1.5, %v1725
      %v1727 = vmul.f32 %v1722, %v1726
      %vm1728 = vweird.f32 %v1721
      %vm1729 = vweird.f32 %v1722
      %vm1730 = vmor %vm1728, %vm1729
      %v1731 = vsel %vm1730, %v1722, %v1727
      %v1732 = vmul.f32 %v1715, %v1731
      %v1734 = vperm.slane %v1708, 0
      %v1736 = vmul.f32 %v1732, %v1734
      %v1738 = vperm.slane %v1709, 0
      %v1740 = vadd.f32 %v1736, %v1738
      %v1741 = vld [vmem:[%s908] sm:$0xf]
      %v1742 = vld [vmem:[%s908 + $0x4] sm:$0xf]
      %v1743 = vld [vmem:[%s908 + $0x8] sm:$0xf]
      %v1744 = vld [vmem:[%s908 + $0xc] sm:$0xf]
      %v1745 = vpack.c.bf16 %v1740, %v1740
      %v1746 = vld [vmem:[%s911] sm:$0x1]
      %v1748 = vperm.slane %v1746, 0
      %v1754 = vunpack.c.l.b16 %v1741
      %v1755 = vunpack.c.l.b16 %v1742
      %v1756 = vunpack.c.l.b16 %v1743
      %v1757 = vunpack.c.l.b16 %v1744
      %v1758 = vpack.c.b16 %v1755, %v1754
      %v1759 = vpack.c.b16 %v1757, %v1756
      %v1763 = vsel %vm964, %v1745, 0
      %1765 = vmatpush.bf16.msra.mxu0 0
      %1766 = vmatpush.bf16.msra.mxu0 0
      %1767 = vmatpush.bf16.msra.mxu0 0
      %1768 = vmatpush.bf16.msra.mxu0 0
      %1769 = vmatpush.bf16.msra.mxu0 0
      %1770 = vmatpush.bf16.msra.mxu0 0
      %1771 = vmatpush.bf16.msra.mxu0 %v1759
      %1772 = vmatpush.bf16.msra.mxu0 %v1758
      %1773 = vmatmul.bf16.gmra.mxu0 %v1763
      %v1774 = vpop.f32.mrf.mxu0
      %v1775 = vadd.f32 %v1748, %v1774
      %v1776 = vpop.f32.mrf.mxu0
      %1777 = vdwg.mxu0
      %v1778 = vld [vmem:[%s914] sm:$0x1]
      %v1779 = vld [vmem:[%s917] sm:$0x1]
      %v1780 = vadd.f32 %v1740, %v1775
      %v1781 = vsel %vm964, %v1780, 0.0
      %1782 = vadd.xlane.f32.xlu0 %v1781
      %v1783 = vpop.xlane.xlu0 %1782
      %v1784 = vmul.f32 %v1783, %v1305
      %v1785 = vsub.f32 %v1780, %v1784
      %v1786 = vmul.f32 %v1785, %v1785
      %v1787 = vsel %vm964, %v1786, 0.0
      %1788 = vadd.xlane.f32.xlu0 %v1787
      %v1789 = vpop.xlane.xlu0 %1788
      %v1790 = vmul.f32 %v1789, %v1305
      %v1791 = vadd.f32 %v1790, 1e-05
      %v1792 = vrsqrt.pop %v1791
      %v1793 = vmul.f32 %v1792, %v1791
      %v1794 = vmul.f32 %v1793, %v1792
      %v1795 = vmul.f32 0.5, %v1794
      %v1796 = vsub.f32 1.5, %v1795
      %v1797 = vmul.f32 %v1792, %v1796
      %vm1798 = vweird.f32 %v1791
      %vm1799 = vweird.f32 %v1792
      %vm1800 = vmor %vm1798, %vm1799
      %v1801 = vsel %vm1800, %v1792, %v1797
      %v1802 = vmul.f32 %v1785, %v1801
      %v1804 = vperm.slane %v1778, 0
      %v1806 = vmul.f32 %v1802, %v1804
      %v1808 = vperm.slane %v1779, 0
      %v1810 = vadd.f32 %v1806, %v1808
      %1811 = vst.msk [vmem:[#allocation2] sm:$0xff] %vm964, %v1810
      %p1812 = scmp.eq.s32.totalorder %s36, 1
      // Predicated region
      $region105: #{transformer_forward.4} parent=99 // pred_check
        %p1813 = pneg %p1812
      $region106: #{transformer_forward.4} parent=99 // pred_check_branch
        %1815 = sbr.rel (%p1813) target = $region108
      $region107: #{transformer_forward.4} parent=99 // pred_region
        %1816 = vst.msk [vmem:[%s921] sm:$0xff] %vm964, %v1810
      $region108: #{transformer_forward.4} parent=99 // pred_fallthru
        _
      %p1817 = scmp.lt.s32.totalorder %s35, 1
      %s1818 = scalar_select %p1817, %s35, 1
      %s1819 = smul.addr %s1818, 8
      %s1820 = scalar_lea.vmem %s20, %s1819
      // Predicated region
      $region109: #{transformer_forward.4} parent=99 // pred_check
        %p1821 = pneg %p576
      $region110: #{transformer_forward.4} parent=99 // pred_check_branch
        %1823 = sbr.rel (%p1821) target = $region112
      $region111: #{transformer_forward.4} parent=99 // pred_region
        _
      $region112: #{transformer_forward.4} parent=99 // pred_fallthru
        _
    $region100: #{transformer_forward.4} parent=5 // pred_fallthru
      _
    %p1824 = scmp.le.s32.totalorder 2, %s26
    // Predicated region
    $region113: #{transformer_forward.4} parent=5 // pred_check
      %p1825 = pneg %p1824
    $region114: #{transformer_forward.4} parent=5 // pred_check_branch
      %1827 = sbr.rel (%p1825) target = $region116
    $region115: #{transformer_forward.4} parent=5 // pred_region
      %s1828 = ssub.s32 %s26, 2
      // Predicated region
      $region117: #{transformer_forward.4} parent=115 // pred_check
        %p1829 = pneg %p582
      $region118: #{transformer_forward.4} parent=115 // pred_check_branch
        %1831 = sbr.rel (%p1829) target = $region120
      $region119: #{transformer_forward.4} parent=115 // pred_region
        %p1832 = scmp.lt.s32.totalorder %s37, 1
        %s1833 = scalar_select %p1832, %s37, 1
        %s1834 = smul.addr %s1833, 8
        %s1835 = scalar_lea.vmem %s20, %s1834
      $region120: #{transformer_forward.4} parent=115 // pred_fallthru
        _
    $region116: #{transformer_forward.4} parent=5 // pred_fallthru
      _
  $region6: #{transformer_forward.4} parent=0 // loop_footer
    %s30 = sadd.s32 1, %s26
  $region7: #{transformer_forward.4} parent=0 // loop_footer_branch
    %25 = sbr.rel target = $region3
  $region8: #{transformer_forward.4} parent=0 // loop_exit
    _

</llo_original>
